<compile_context>
chip_gen: v6e
topology: v6e:2x2x1
jax: 0.10.0
libtpu: 0.0.40
codegen_flags: <defaults>
</compile_context>

<pallas_src>
import functools

import jax
import jax.numpy as jnp
from jax.experimental import pallas as pl
from jax.experimental.pallas import tpu as pltpu

H = W = 16          # spatial size handled by the kernel
HW = H * W


# ----------------------------- kernel helpers -------------------------------

def _conv3x3(feat, w9_ref, b_ref, masks, dot_dtype):
    """3x3 'same' conv, channels-major: feat (cin, M) -> (cout, M).

    w9_ref: (9, cout, cin), taps ordered (ky, kx) row-major.
    masks:  (9, M) f32 boundary masks (nonzero = valid tap position).
    Each tap is a pltpu.roll (XLU) of feat, masked with jnp.where, and
    contributes one small dot (K = cin) accumulated into an f32 accumulator --
    no materialized (9*cin, M) im2col buffer.
    """
    M = feat.shape[1]
    acc = None
    for ky in range(3):
        for kx in range(3):
            d = (ky - 1) * W + (kx - 1)
            k = ky * 3 + kx
            if d == 0:
                tap = feat                                    # center tap, no mask
            else:
                rolled = pltpu.roll(feat, shift=(-d) % M, axis=1)
                tap = jnp.where(masks[k:k + 1, :] != 0.0, rolled, 0.0)
            part = jnp.dot(w9_ref[k].astype(dot_dtype), tap.astype(dot_dtype),
                           preferred_element_type=jnp.float32)
            acc = part if acc is None else acc + part
    return acc + b_ref[...]                                   # (cout, M)


def _bn_lrelu(h, scale_ref, shift_ref, slope=0.3):
    h = h * scale_ref[...] + shift_ref[...]
    return jnp.where(h >= 0, h, slope * h)


def _channel_attention(feat, fc1t_ref, fc2t_ref, nb):
    """CBAM channel attention (r=1) for nb images packed along the lane dim.

    Pools over static lane-aligned 256-lane slices per image, runs the shared
    MLP once on the stacked [avg | max] (C, 2*nb) matrix, then applies the
    per-image sigmoid gate with a lane-broadcast multiply (no MXU splat).
    """
    avgs, maxes = [], []
    for b in range(nb):                                       # static, nb <= 8
        seg = feat[:, b * HW:(b + 1) * HW]
        avgs.append(jnp.sum(seg, axis=1, keepdims=True) * (1.0 / HW))
        maxes.append(jnp.max(seg, axis=1, keepdims=True))
    pooled = jnp.concatenate(avgs + maxes, axis=1)            # (C, 2*nb)
    hid = jnp.maximum(
        jnp.dot(fc1t_ref[...], pooled, preferred_element_type=jnp.float32), 0.0)
    y2 = jnp.dot(fc2t_ref[...], hid, preferred_element_type=jnp.float32)
    y = jax.nn.sigmoid(y2[:, :nb] + y2[:, nb:])               # (C, nb)
    gated = [feat[:, b * HW:(b + 1) * HW] * y[:, b:b + 1] for b in range(nb)]
    return gated[0] if nb == 1 else jnp.concatenate(gated, axis=1)


# --------------------------------- kernel -----------------------------------

def attention_refine_kernel(x_ref, masks_ref,
                            w1, b1, s1, t1, a1, a1b,
                            w2, b2, s2, t2, a2, a2b,
                            w3, b3, s3, t3,
                            out_ref, *, nb, dot_dtype):
    masks = masks_ref[...]                               # (9, M) f32, precomputed
    x = x_ref[...].astype(jnp.float32)                   # (C, M)

    # stage 1: conv3x3(C -> 8C) -> BN -> LeakyReLU(0.3) -> Channel_Attention
    h = _conv3x3(x, w1, b1, masks, dot_dtype)
    h = _bn_lrelu(h, s1, t1)
    h = _channel_attention(h, a1, a1b, nb)

    # stage 2: conv3x3(8C -> 4C) -> BN -> LeakyReLU(0.3) -> Channel_Attention
    h = _conv3x3(h, w2, b2, masks, dot_dtype)
    h = _bn_lrelu(h, s2, t2)
    h = _channel_attention(h, a2, a2b, nb)

    # stage 3: conv3x3(4C -> C) -> BN, then residual add
    h = _conv3x3(h, w3, b3, masks, dot_dtype)
    h = h * s3[...] + t3[...]

    out_ref[...] = (x + h).astype(out_ref.dtype)


# --------------------------------- wrapper ----------------------------------

def _build_masks(nb):
    """(9, nb*HW) f32 boundary-validity masks, tap order (ky, kx) row-major."""
    M = nb * HW
    lane = jnp.arange(M, dtype=jnp.int32)
    pix = lane % HW
    hh = pix // W
    ww = pix % W
    rows = []
    for ky in range(3):
        for kx in range(3):
            ok_h = jnp.logical_and(hh + (ky - 1) >= 0, hh + (ky - 1) < H)
            ok_w = jnp.logical_and(ww + (kx - 1) >= 0, ww + (kx - 1) < W)
            rows.append(jnp.logical_and(ok_h, ok_w))
    return jnp.stack(rows, axis=0).astype(jnp.float32)


def _prep_params(params, matmul_dtype):
    """Reshape PyTorch-style params into the kernel's channels-major layout."""
    (w1, b1, s1, t1, ca1a, ca1b,
     w2, b2, s2, t2, ca2a, ca2b,
     w3, b3, s3, t3) = params

    def conv9(w):                   # HWIO (3,3,cin,cout) -> (9, cout, cin)
        kh, kw, cin, cout = w.shape
        return jnp.transpose(w.reshape(kh * kw, cin, cout),
                             (0, 2, 1)).astype(matmul_dtype)

    def col(v):                     # (1, c) -> (c, 1)
        return jnp.reshape(v, (-1, 1)).astype(jnp.float32)

    def fc_t(v):                    # attention MLP stays f32 (tiny dots)
        return jnp.transpose(v).astype(jnp.float32)

    return (conv9(w1), col(b1), col(s1), col(t1), fc_t(ca1a), fc_t(ca1b),
            conv9(w2), col(b2), col(s2), col(t2), fc_t(ca2a), fc_t(ca2b),
            conv9(w3), col(b3), col(s3), col(t3))


def _pick_images_per_step(n):
    """Largest nb with lane width nb*HW <= 2048 (<= 8 images), n % nb == 0 and
    a grid of >= 2 steps whenever the batch allows it (keeps the software
    pipeline alive and gives v7x megacore something to shard)."""
    best = 1
    for nb in range(1, n + 1):
        if nb * HW > 2048:
            break
        if n % nb:
            continue
        if n >= 2 and n // nb < 2:
            continue
        best = nb
    return best


def attention_refine_net_cmajor(x2d, params, *, images_per_step=None,
                                matmul_dtype=jnp.float32):
    """Channels-major entry point: x2d is (C, N*HW).  Prefer this inside a
    pipeline so the NCHW <-> channels-major transposes (full HBM round trips)
    are not paid around every call."""
    C, NM = x2d.shape
    assert NM % HW == 0
    N = NM // HW
    nb = _pick_images_per_step(N) if images_per_step is None else images_per_step
    assert N % nb == 0, "batch must be divisible by the per-step image tile"
    M = nb * HW

    masks = _build_masks(nb)                               # (9, M) constants
    kparams = _prep_params(params, matmul_dtype)

    def full_spec(a):
        nd = a.ndim
        return pl.BlockSpec(a.shape, lambda n, _nd=nd: (0,) * _nd)

    # Explicit VMEM budget: per-step live set is dominated by f32 activations
    # (x: C, h1: 8C, one tap: 8C, conv2 acc: 4C words per lane), the
    # double-buffered (C, M) I/O blocks and the (9, M) masks.  2x safety,
    # clamped to stay inside v7x's 64 MiB physical VMEM per TensorCore.
    live_bytes = 4 * M * (24 * C) + 2 * 2 * 2 * C * M * 4 + 2 * 9 * M * 4
    vmem_limit = int(min(max(2 * live_bytes, 8 << 20), 64 << 20))

    out2d = pl.pallas_call(
        functools.partial(attention_refine_kernel, nb=nb, dot_dtype=matmul_dtype),
        out_shape=jax.ShapeDtypeStruct((C, N * HW), x2d.dtype),
        grid=(N // nb,),
        in_specs=[pl.BlockSpec((C, M), lambda n: (0, n)),   # lane-dense activations
                  full_spec(masks)]
                 + [full_spec(a) for a in kparams],
        out_specs=pl.BlockSpec((C, M), lambda n: (0, n)),
        compiler_params=pltpu.CompilerParams(
            dimension_semantics=("parallel",),
            vmem_limit_bytes=vmem_limit),
    )(x2d, masks, *kparams)
    return out2d


def attention_refine_net(x_nchw, params, *, images_per_step=None,
                         matmul_dtype=jnp.float32):
    N, C, Hh, Ww = x_nchw.shape
    assert (Hh, Ww) == (H, W)
    # TODO(synk): in a real pipeline keep activations channels-major between ops
    # and call attention_refine_net_cmajor directly; these two transposes are
    # full HBM round trips wrapped around a small kernel.
    x2d = jnp.transpose(x_nchw.reshape(N, C, HW), (1, 0, 2)).reshape(C, N * HW)
    out2d = attention_refine_net_cmajor(x2d, params,
                                        images_per_step=images_per_step,
                                        matmul_dtype=matmul_dtype)
    out = jnp.transpose(out2d.reshape(C, N, HW), (1, 0, 2))
    return out.reshape(N, C, H, W)


# ----------------------------- parameter setup -------------------------------

def init_params(key, channel):
    C, C8, C4 = channel, channel * 8, channel * 4
    ks = list(jax.random.split(key, 24))

    def conv_w(k, cin, cout):                        # HWIO
        return jax.random.normal(k, (3, 3, cin, cout), jnp.float32) / jnp.sqrt(9.0 * cin)

    def bias(k, c):
        return 0.1 * jax.random.normal(k, (1, c), jnp.float32)

    def fc_w(k, cin, cout):                          # 1x1 conv, no bias
        return jax.random.normal(k, (cin, cout), jnp.float32) / jnp.sqrt(1.0 * cin)

    def bn(k, c):
        kg, kb, km, kv = jax.random.split(k, 4)
        gamma = 1.0 + 0.1 * jax.random.normal(kg, (c,), jnp.float32)
        beta = 0.1 * jax.random.normal(kb, (c,), jnp.float32)
        mean = 0.1 * jax.random.normal(km, (c,), jnp.float32)
        var = jnp.abs(jax.random.normal(kv, (c,), jnp.float32)) + 0.5
        scale = gamma / jnp.sqrt(var + 1e-5)
        shift = beta - mean * scale
        return scale.reshape(1, c), shift.reshape(1, c)

    w1, b1 = conv_w(ks[0], C, C8), bias(ks[1], C8)
    s1, t1 = bn(ks[2], C8)
    ca1a, ca1b = fc_w(ks[3], C8, C8), fc_w(ks[4], C8, C8)     # r = 1
    w2, b2 = conv_w(ks[5], C8, C4), bias(ks[6], C4)
    s2, t2 = bn(ks[7], C4)
    ca2a, ca2b = fc_w(ks[8], C4, C4), fc_w(ks[9], C4, C4)
    w3, b3 = conv_w(ks[10], C4, C), bias(ks[11], C)
    s3, t3 = bn(ks[12], C)
    return (w1, b1, s1, t1, ca1a, ca1b,
            w2, b2, s2, t2, ca2a, ca2b,
            w3, b3, s3, t3)


# ---------------------------- pure-JAX reference -----------------------------

def reference(x_nchw, params, matmul_dtype=jnp.float32):
    (w1, b1, s1, t1, ca1a, ca1b,
     w2, b2, s2, t2, ca2a, ca2b,
     w3, b3, s3, t3) = params
    x = jnp.transpose(x_nchw, (0, 2, 3, 1)).astype(jnp.float32)

    def conv(h, w, b):
        y = jax.lax.conv_general_dilated(
            h.astype(matmul_dtype), w.astype(matmul_dtype), (1, 1), 'SAME',
            dimension_numbers=('NHWC', 'HWIO', 'NHWC'),
            preferred_element_type=jnp.float32)
        return y + b.reshape(1, 1, 1, -1)

    def bn_lrelu(h, s, t):
        h = h * s.reshape(1, 1, 1, -1) + t.reshape(1, 1, 1, -1)
        return jnp.where(h >= 0, h, 0.3 * h)

    def ca(h, f1, f2):
        avg = jnp.mean(h, axis=(1, 2))
        mx = jnp.max(h, axis=(1, 2))
        fc = lambda v: jnp.maximum(v @ f1, 0.0) @ f2
        y = jax.nn.sigmoid(fc(avg) + fc(mx))
        return h * y[:, None, None, :]

    h = ca(bn_lrelu(conv(x, w1, b1), s1, t1), ca1a, ca1b)
    h = ca(bn_lrelu(conv(h, w2, b2), s2, t2), ca2a, ca2b)
    h = conv(h, w3, b3) * s3.reshape(1, 1, 1, -1) + t3.reshape(1, 1, 1, -1)
    return jnp.transpose(x + h, (0, 3, 1, 2))


# ----------------------------------- main ------------------------------------

if __name__ == "__main__":
    key = jax.random.PRNGKey(0)
    k_x, k_p = jax.random.split(key)

    channel = 4
    x = jax.random.normal(k_x, (2, channel, H, W), jnp.float32)   # NCHW like PyTorch
    params = init_params(k_p, channel)

    # default path: f32 matmul operands (matches the PyTorch f32 semantics)
    out = jax.block_until_ready(attention_refine_net(x, params))
    ref = jax.block_until_ready(reference(x, params))
    assert out.shape == x.shape and out.dtype == x.dtype
    max_err = float(jnp.max(jnp.abs(out - ref)))
    assert max_err < 1e-2, f"f32 path mismatch vs reference: max_err={max_err}"

    # reduced-precision path (bf16 MXU operands, f32 accumulate), compared
    # against a matching bf16-operand reference
    out_bf = jax.block_until_ready(
        attention_refine_net(x, params, matmul_dtype=jnp.bfloat16))
    ref_bf = jax.block_until_ready(reference(x, params, jnp.bfloat16))
    assert bool(jnp.all(jnp.isfinite(out_bf))), "bf16 path produced non-finite values"
    max_err_bf = float(jnp.max(jnp.abs(out_bf - ref_bf)))
    assert max_err_bf < 2e-2, f"bf16 path mismatch vs bf16 reference: max_err={max_err_bf}"

    print("KERNEL_OK")
</pallas_src>

<mosaic_0001>
module attributes {stable_mosaic.version = 11 : i64} {
  func.func @attention_refine_kernel(%arg0: i32, %arg1: memref<4x256xf32, #tpu.memory_space<vmem>>, %arg2: memref<9x256xf32, #tpu.memory_space<vmem>>, %arg3: memref<9x32x4xf32, #tpu.memory_space<vmem>>, %arg4: memref<32x1xf32, #tpu.memory_space<vmem>>, %arg5: memref<32x1xf32, #tpu.memory_space<vmem>>, %arg6: memref<32x1xf32, #tpu.memory_space<vmem>>, %arg7: memref<32x32xf32, #tpu.memory_space<vmem>>, %arg8: memref<32x32xf32, #tpu.memory_space<vmem>>, %arg9: memref<9x16x32xf32, #tpu.memory_space<vmem>>, %arg10: memref<16x1xf32, #tpu.memory_space<vmem>>, %arg11: memref<16x1xf32, #tpu.memory_space<vmem>>, %arg12: memref<16x1xf32, #tpu.memory_space<vmem>>, %arg13: memref<16x16xf32, #tpu.memory_space<vmem>>, %arg14: memref<16x16xf32, #tpu.memory_space<vmem>>, %arg15: memref<9x4x16xf32, #tpu.memory_space<vmem>>, %arg16: memref<4x1xf32, #tpu.memory_space<vmem>>, %arg17: memref<4x1xf32, #tpu.memory_space<vmem>>, %arg18: memref<4x1xf32, #tpu.memory_space<vmem>>, %arg19: memref<4x256xf32, #tpu.memory_space<vmem>>) attributes {dimension_semantics = [#tpu.dimension_semantics<parallel>], iteration_bounds = array<i64: 2>, scalar_prefetch = 0 : i64, scratch_operands = 0 : i64, tpu.core_type = #tpu.core_type<tc>, window_params = [{transform_indices = @transform_0, window_bounds = array<i64: 4, 256>}, {pipeline_mode = #tpu.pipeline_mode<synchronous>, transform_indices = @transform_1, window_bounds = array<i64: 9, 256>}, {pipeline_mode = #tpu.pipeline_mode<synchronous>, transform_indices = @transform_2, window_bounds = array<i64: 9, 32, 4>}, {pipeline_mode = #tpu.pipeline_mode<synchronous>, transform_indices = @transform_3, window_bounds = array<i64: 32, 1>}, {pipeline_mode = #tpu.pipeline_mode<synchronous>, transform_indices = @transform_4, window_bounds = array<i64: 32, 1>}, {pipeline_mode = #tpu.pipeline_mode<synchronous>, transform_indices = @transform_5, window_bounds = array<i64: 32, 1>}, {pipeline_mode = #tpu.pipeline_mode<synchronous>, transform_indices = @transform_6, window_bounds = array<i64: 32, 32>}, {pipeline_mode = #tpu.pipeline_mode<synchronous>, transform_indices = @transform_7, window_bounds = array<i64: 32, 32>}, {pipeline_mode = #tpu.pipeline_mode<synchronous>, transform_indices = @transform_8, window_bounds = array<i64: 9, 16, 32>}, {pipeline_mode = #tpu.pipeline_mode<synchronous>, transform_indices = @transform_9, window_bounds = array<i64: 16, 1>}, {pipeline_mode = #tpu.pipeline_mode<synchronous>, transform_indices = @transform_10, window_bounds = array<i64: 16, 1>}, {pipeline_mode = #tpu.pipeline_mode<synchronous>, transform_indices = @transform_11, window_bounds = array<i64: 16, 1>}, {pipeline_mode = #tpu.pipeline_mode<synchronous>, transform_indices = @transform_12, window_bounds = array<i64: 16, 16>}, {pipeline_mode = #tpu.pipeline_mode<synchronous>, transform_indices = @transform_13, window_bounds = array<i64: 16, 16>}, {pipeline_mode = #tpu.pipeline_mode<synchronous>, transform_indices = @transform_14, window_bounds = array<i64: 9, 4, 16>}, {pipeline_mode = #tpu.pipeline_mode<synchronous>, transform_indices = @transform_15, window_bounds = array<i64: 4, 1>}, {pipeline_mode = #tpu.pipeline_mode<synchronous>, transform_indices = @transform_16, window_bounds = array<i64: 4, 1>}, {pipeline_mode = #tpu.pipeline_mode<synchronous>, transform_indices = @transform_17, window_bounds = array<i64: 4, 1>}, {transform_indices = @transform_18, window_bounds = array<i64: 4, 256>}]} {
    %c0 = arith.constant 0 : index
    %c0_0 = arith.constant 0 : index
    %0 = vector.load %arg2[%c0, %c0_0] : memref<9x256xf32, #tpu.memory_space<vmem>>, vector<9x256xf32>
    %c0_1 = arith.constant 0 : index
    %c0_2 = arith.constant 0 : index
    %1 = vector.load %arg1[%c0_1, %c0_2] : memref<4x256xf32, #tpu.memory_space<vmem>>, vector<4x256xf32>
    %c17_i32 = arith.constant 17 : i32
    %2 = tpu.dynamic_rotate %1 by %c17_i32 dim 1 : vector<4x256xf32>, i32 -> vector<4x256xf32>
    %3 = vector.extract_strided_slice %0 {offsets = [0, 0], sizes = [1, 256], strides = [1, 1]} : vector<9x256xf32> to vector<1x256xf32>
    %cst = arith.constant 0.000000e+00 : f32
    %4 = vector.broadcast %cst : f32 to vector<1x256xf32>
    %5 = arith.cmpf one, %3, %4 : vector<1x256xf32>
    %cst_3 = arith.constant 0.000000e+00 : f32
    %6 = vector.shape_cast %5 : vector<1x256xi1> to vector<1x256xi1>
    %7 = vector.broadcast %6 : vector<1x256xi1> to vector<4x256xi1>
    %8 = vector.broadcast %cst_3 : f32 to vector<4x256xf32>
    %9 = arith.select %7, %2, %8 : vector<4x256xi1>, vector<4x256xf32>
    %c0_4 = arith.constant 0 : index
    %c0_5 = arith.constant 0 : index
    %c0_6 = arith.constant 0 : index
    %10 = vector.load %arg3[%c0_4, %c0_5, %c0_6] : memref<9x32x4xf32, #tpu.memory_space<vmem>>, vector<1x32x4xf32>
    %11 = vector.shape_cast %10 : vector<1x32x4xf32> to vector<32x4xf32>
    %cst_7 = arith.constant dense<0.000000e+00> : vector<32x256xf32>
    %12 = tpu.matmul %11, %9, %cst_7 {dimension_numbers = #tpu.dot_dimension_numbers<[1], [0], [0], [1], [0, 0, 1, 1], [], []>} : vector<32x4xf32>, vector<4x256xf32>, vector<32x256xf32> -> vector<32x256xf32>
    %c16_i32 = arith.constant 16 : i32
    %13 = tpu.dynamic_rotate %1 by %c16_i32 dim 1 : vector<4x256xf32>, i32 -> vector<4x256xf32>
    %14 = vector.extract_strided_slice %0 {offsets = [1, 0], sizes = [1, 256], strides = [1, 1]} : vector<9x256xf32> to vector<1x256xf32>
    %cst_8 = arith.constant 0.000000e+00 : f32
    %15 = vector.broadcast %cst_8 : f32 to vector<1x256xf32>
    %16 = arith.cmpf one, %14, %15 : vector<1x256xf32>
    %cst_9 = arith.constant 0.000000e+00 : f32
    %17 = vector.shape_cast %16 : vector<1x256xi1> to vector<1x256xi1>
    %18 = vector.broadcast %17 : vector<1x256xi1> to vector<4x256xi1>
    %19 = vector.broadcast %cst_9 : f32 to vector<4x256xf32>
    %20 = arith.select %18, %13, %19 : vector<4x256xi1>, vector<4x256xf32>
    %c1 = arith.constant 1 : index
    %c0_10 = arith.constant 0 : index
    %c0_11 = arith.constant 0 : index
    %21 = vector.load %arg3[%c1, %c0_10, %c0_11] : memref<9x32x4xf32, #tpu.memory_space<vmem>>, vector<1x32x4xf32>
    %22 = vector.shape_cast %21 : vector<1x32x4xf32> to vector<32x4xf32>
    %cst_12 = arith.constant dense<0.000000e+00> : vector<32x256xf32>
    %23 = tpu.matmul %22, %20, %cst_12 {dimension_numbers = #tpu.dot_dimension_numbers<[1], [0], [0], [1], [0, 0, 1, 1], [], []>} : vector<32x4xf32>, vector<4x256xf32>, vector<32x256xf32> -> vector<32x256xf32>
    %24 = arith.addf %12, %23 : vector<32x256xf32>
    %c15_i32 = arith.constant 15 : i32
    %25 = tpu.dynamic_rotate %1 by %c15_i32 dim 1 : vector<4x256xf32>, i32 -> vector<4x256xf32>
    %26 = vector.extract_strided_slice %0 {offsets = [2, 0], sizes = [1, 256], strides = [1, 1]} : vector<9x256xf32> to vector<1x256xf32>
    %cst_13 = arith.constant 0.000000e+00 : f32
    %27 = vector.broadcast %cst_13 : f32 to vector<1x256xf32>
    %28 = arith.cmpf one, %26, %27 : vector<1x256xf32>
    %cst_14 = arith.constant 0.000000e+00 : f32
    %29 = vector.shape_cast %28 : vector<1x256xi1> to vector<1x256xi1>
    %30 = vector.broadcast %29 : vector<1x256xi1> to vector<4x256xi1>
    %31 = vector.broadcast %cst_14 : f32 to vector<4x256xf32>
    %32 = arith.select %30, %25, %31 : vector<4x256xi1>, vector<4x256xf32>
    %c2 = arith.constant 2 : index
    %c0_15 = arith.constant 0 : index
    %c0_16 = arith.constant 0 : index
    %33 = vector.load %arg3[%c2, %c0_15, %c0_16] : memref<9x32x4xf32, #tpu.memory_space<vmem>>, vector<1x32x4xf32>
    %34 = vector.shape_cast %33 : vector<1x32x4xf32> to vector<32x4xf32>
    %cst_17 = arith.constant dense<0.000000e+00> : vector<32x256xf32>
    %35 = tpu.matmul %34, %32, %cst_17 {dimension_numbers = #tpu.dot_dimension_numbers<[1], [0], [0], [1], [0, 0, 1, 1], [], []>} : vector<32x4xf32>, vector<4x256xf32>, vector<32x256xf32> -> vector<32x256xf32>
    %36 = arith.addf %24, %35 : vector<32x256xf32>
    %c1_i32 = arith.constant 1 : i32
    %37 = tpu.dynamic_rotate %1 by %c1_i32 dim 1 : vector<4x256xf32>, i32 -> vector<4x256xf32>
    %38 = vector.extract_strided_slice %0 {offsets = [3, 0], sizes = [1, 256], strides = [1, 1]} : vector<9x256xf32> to vector<1x256xf32>
    %cst_18 = arith.constant 0.000000e+00 : f32
    %39 = vector.broadcast %cst_18 : f32 to vector<1x256xf32>
    %40 = arith.cmpf one, %38, %39 : vector<1x256xf32>
    %cst_19 = arith.constant 0.000000e+00 : f32
    %41 = vector.shape_cast %40 : vector<1x256xi1> to vector<1x256xi1>
    %42 = vector.broadcast %41 : vector<1x256xi1> to vector<4x256xi1>
    %43 = vector.broadcast %cst_19 : f32 to vector<4x256xf32>
    %44 = arith.select %42, %37, %43 : vector<4x256xi1>, vector<4x256xf32>
    %c3 = arith.constant 3 : index
    %c0_20 = arith.constant 0 : index
    %c0_21 = arith.constant 0 : index
    %45 = vector.load %arg3[%c3, %c0_20, %c0_21] : memref<9x32x4xf32, #tpu.memory_space<vmem>>, vector<1x32x4xf32>
    %46 = vector.shape_cast %45 : vector<1x32x4xf32> to vector<32x4xf32>
    %cst_22 = arith.constant dense<0.000000e+00> : vector<32x256xf32>
    %47 = tpu.matmul %46, %44, %cst_22 {dimension_numbers = #tpu.dot_dimension_numbers<[1], [0], [0], [1], [0, 0, 1, 1], [], []>} : vector<32x4xf32>, vector<4x256xf32>, vector<32x256xf32> -> vector<32x256xf32>
    %48 = arith.addf %36, %47 : vector<32x256xf32>
    %c4 = arith.constant 4 : index
    %c0_23 = arith.constant 0 : index
    %c0_24 = arith.constant 0 : index
    %49 = vector.load %arg3[%c4, %c0_23, %c0_24] : memref<9x32x4xf32, #tpu.memory_space<vmem>>, vector<1x32x4xf32>
    %50 = vector.shape_cast %49 : vector<1x32x4xf32> to vector<32x4xf32>
    %cst_25 = arith.constant dense<0.000000e+00> : vector<32x256xf32>
    %51 = tpu.matmul %50, %1, %cst_25 {dimension_numbers = #tpu.dot_dimension_numbers<[1], [0], [0], [1], [0, 0, 1, 1], [], []>} : vector<32x4xf32>, vector<4x256xf32>, vector<32x256xf32> -> vector<32x256xf32>
    %52 = arith.addf %48, %51 : vector<32x256xf32>
    %c255_i32 = arith.constant 255 : i32
    %53 = tpu.dynamic_rotate %1 by %c255_i32 dim 1 : vector<4x256xf32>, i32 -> vector<4x256xf32>
    %54 = vector.extract_strided_slice %0 {offsets = [5, 0], sizes = [1, 256], strides = [1, 1]} : vector<9x256xf32> to vector<1x256xf32>
    %cst_26 = arith.constant 0.000000e+00 : f32
    %55 = vector.broadcast %cst_26 : f32 to vector<1x256xf32>
    %56 = arith.cmpf one, %54, %55 : vector<1x256xf32>
    %cst_27 = arith.constant 0.000000e+00 : f32
    %57 = vector.shape_cast %56 : vector<1x256xi1> to vector<1x256xi1>
    %58 = vector.broadcast %57 : vector<1x256xi1> to vector<4x256xi1>
    %59 = vector.broadcast %cst_27 : f32 to vector<4x256xf32>
    %60 = arith.select %58, %53, %59 : vector<4x256xi1>, vector<4x256xf32>
    %c5 = arith.constant 5 : index
    %c0_28 = arith.constant 0 : index
    %c0_29 = arith.constant 0 : index
    %61 = vector.load %arg3[%c5, %c0_28, %c0_29] : memref<9x32x4xf32, #tpu.memory_space<vmem>>, vector<1x32x4xf32>
    %62 = vector.shape_cast %61 : vector<1x32x4xf32> to vector<32x4xf32>
    %cst_30 = arith.constant dense<0.000000e+00> : vector<32x256xf32>
    %63 = tpu.matmul %62, %60, %cst_30 {dimension_numbers = #tpu.dot_dimension_numbers<[1], [0], [0], [1], [0, 0, 1, 1], [], []>} : vector<32x4xf32>, vector<4x256xf32>, vector<32x256xf32> -> vector<32x256xf32>
    %64 = arith.addf %52, %63 : vector<32x256xf32>
    %c241_i32 = arith.constant 241 : i32
    %65 = tpu.dynamic_rotate %1 by %c241_i32 dim 1 : vector<4x256xf32>, i32 -> vector<4x256xf32>
    %66 = vector.extract_strided_slice %0 {offsets = [6, 0], sizes = [1, 256], strides = [1, 1]} : vector<9x256xf32> to vector<1x256xf32>
    %cst_31 = arith.constant 0.000000e+00 : f32
    %67 = vector.broadcast %cst_31 : f32 to vector<1x256xf32>
    %68 = arith.cmpf one, %66, %67 : vector<1x256xf32>
    %cst_32 = arith.constant 0.000000e+00 : f32
    %69 = vector.shape_cast %68 : vector<1x256xi1> to vector<1x256xi1>
    %70 = vector.broadcast %69 : vector<1x256xi1> to vector<4x256xi1>
    %71 = vector.broadcast %cst_32 : f32 to vector<4x256xf32>
    %72 = arith.select %70, %65, %71 : vector<4x256xi1>, vector<4x256xf32>
    %c6 = arith.constant 6 : index
    %c0_33 = arith.constant 0 : index
    %c0_34 = arith.constant 0 : index
    %73 = vector.load %arg3[%c6, %c0_33, %c0_34] : memref<9x32x4xf32, #tpu.memory_space<vmem>>, vector<1x32x4xf32>
    %74 = vector.shape_cast %73 : vector<1x32x4xf32> to vector<32x4xf32>
    %cst_35 = arith.constant dense<0.000000e+00> : vector<32x256xf32>
    %75 = tpu.matmul %74, %72, %cst_35 {dimension_numbers = #tpu.dot_dimension_numbers<[1], [0], [0], [1], [0, 0, 1, 1], [], []>} : vector<32x4xf32>, vector<4x256xf32>, vector<32x256xf32> -> vector<32x256xf32>
    %76 = arith.addf %64, %75 : vector<32x256xf32>
    %c240_i32 = arith.constant 240 : i32
    %77 = tpu.dynamic_rotate %1 by %c240_i32 dim 1 : vector<4x256xf32>, i32 -> vector<4x256xf32>
    %78 = vector.extract_strided_slice %0 {offsets = [7, 0], sizes = [1, 256], strides = [1, 1]} : vector<9x256xf32> to vector<1x256xf32>
    %cst_36 = arith.constant 0.000000e+00 : f32
    %79 = vector.broadcast %cst_36 : f32 to vector<1x256xf32>
    %80 = arith.cmpf one, %78, %79 : vector<1x256xf32>
    %cst_37 = arith.constant 0.000000e+00 : f32
    %81 = vector.shape_cast %80 : vector<1x256xi1> to vector<1x256xi1>
    %82 = vector.broadcast %81 : vector<1x256xi1> to vector<4x256xi1>
    %83 = vector.broadcast %cst_37 : f32 to vector<4x256xf32>
    %84 = arith.select %82, %77, %83 : vector<4x256xi1>, vector<4x256xf32>
    %c7 = arith.constant 7 : index
    %c0_38 = arith.constant 0 : index
    %c0_39 = arith.constant 0 : index
    %85 = vector.load %arg3[%c7, %c0_38, %c0_39] : memref<9x32x4xf32, #tpu.memory_space<vmem>>, vector<1x32x4xf32>
    %86 = vector.shape_cast %85 : vector<1x32x4xf32> to vector<32x4xf32>
    %cst_40 = arith.constant dense<0.000000e+00> : vector<32x256xf32>
    %87 = tpu.matmul %86, %84, %cst_40 {dimension_numbers = #tpu.dot_dimension_numbers<[1], [0], [0], [1], [0, 0, 1, 1], [], []>} : vector<32x4xf32>, vector<4x256xf32>, vector<32x256xf32> -> vector<32x256xf32>
    %88 = arith.addf %76, %87 : vector<32x256xf32>
    %c239_i32 = arith.constant 239 : i32
    %89 = tpu.dynamic_rotate %1 by %c239_i32 dim 1 : vector<4x256xf32>, i32 -> vector<4x256xf32>
    %90 = vector.extract_strided_slice %0 {offsets = [8, 0], sizes = [1, 256], strides = [1, 1]} : vector<9x256xf32> to vector<1x256xf32>
    %cst_41 = arith.constant 0.000000e+00 : f32
    %91 = vector.broadcast %cst_41 : f32 to vector<1x256xf32>
    %92 = arith.cmpf one, %90, %91 : vector<1x256xf32>
    %cst_42 = arith.constant 0.000000e+00 : f32
    %93 = vector.shape_cast %92 : vector<1x256xi1> to vector<1x256xi1>
    %94 = vector.broadcast %93 : vector<1x256xi1> to vector<4x256xi1>
    %95 = vector.broadcast %cst_42 : f32 to vector<4x256xf32>
    %96 = arith.select %94, %89, %95 : vector<4x256xi1>, vector<4x256xf32>
    %c8 = arith.constant 8 : index
    %c0_43 = arith.constant 0 : index
    %c0_44 = arith.constant 0 : index
    %97 = vector.load %arg3[%c8, %c0_43, %c0_44] : memref<9x32x4xf32, #tpu.memory_space<vmem>>, vector<1x32x4xf32>
    %98 = vector.shape_cast %97 : vector<1x32x4xf32> to vector<32x4xf32>
    %cst_45 = arith.constant dense<0.000000e+00> : vector<32x256xf32>
    %99 = tpu.matmul %98, %96, %cst_45 {dimension_numbers = #tpu.dot_dimension_numbers<[1], [0], [0], [1], [0, 0, 1, 1], [], []>} : vector<32x4xf32>, vector<4x256xf32>, vector<32x256xf32> -> vector<32x256xf32>
    %100 = arith.addf %88, %99 : vector<32x256xf32>
    %c0_46 = arith.constant 0 : index
    %c0_47 = arith.constant 0 : index
    %101 = vector.load %arg4[%c0_46, %c0_47] : memref<32x1xf32, #tpu.memory_space<vmem>>, vector<32x1xf32>
    %102 = vector.broadcast %101 : vector<32x1xf32> to vector<32x256xf32>
    %103 = arith.addf %100, %102 : vector<32x256xf32>
    %c0_48 = arith.constant 0 : index
    %c0_49 = arith.constant 0 : index
    %104 = vector.load %arg5[%c0_48, %c0_49] : memref<32x1xf32, #tpu.memory_space<vmem>>, vector<32x1xf32>
    %105 = vector.broadcast %104 : vector<32x1xf32> to vector<32x256xf32>
    %106 = arith.mulf %103, %105 : vector<32x256xf32>
    %c0_50 = arith.constant 0 : index
    %c0_51 = arith.constant 0 : index
    %107 = vector.load %arg6[%c0_50, %c0_51] : memref<32x1xf32, #tpu.memory_space<vmem>>, vector<32x1xf32>
    %108 = vector.broadcast %107 : vector<32x1xf32> to vector<32x256xf32>
    %109 = arith.addf %106, %108 : vector<32x256xf32>
    %cst_52 = arith.constant 0.000000e+00 : f32
    %110 = vector.broadcast %cst_52 : f32 to vector<32x256xf32>
    %111 = arith.cmpf oge, %109, %110 : vector<32x256xf32>
    %cst_53 = arith.constant 3.000000e-01 : f32
    %112 = vector.broadcast %cst_53 : f32 to vector<32x256xf32>
    %113 = arith.mulf %112, %109 : vector<32x256xf32>
    %114 = arith.select %111, %109, %113 : vector<32x256xi1>, vector<32x256xf32>
    %cst_54 = arith.constant dense<0.000000e+00> : vector<32xf32>
    %115 = vector.multi_reduction <add>, %114, %cst_54 [1] : vector<32x256xf32> to vector<32xf32>
    %116 = vector.shape_cast %115 : vector<32xf32> to vector<32x1xf32>
    %cst_55 = arith.constant 3.906250e-03 : f32
    %117 = vector.broadcast %cst_55 : f32 to vector<32x1xf32>
    %118 = arith.mulf %116, %117 : vector<32x1xf32>
    %cst_56 = arith.constant dense<0xFF800000> : vector<32xf32>
    %119 = vector.multi_reduction <maximumf>, %114, %cst_56 [1] : vector<32x256xf32> to vector<32xf32>
    %120 = vector.shape_cast %119 : vector<32xf32> to vector<32x1xf32>
    %121 = tpu.concatenate %118, %120 in 1 : vector<32x1xf32>, vector<32x1xf32> -> vector<32x2xf32>
    %c0_57 = arith.constant 0 : index
    %c0_58 = arith.constant 0 : index
    %122 = vector.load %arg7[%c0_57, %c0_58] : memref<32x32xf32, #tpu.memory_space<vmem>>, vector<32x32xf32>
    %cst_59 = arith.constant dense<0.000000e+00> : vector<32x2xf32>
    %123 = tpu.matmul %122, %121, %cst_59 {dimension_numbers = #tpu.dot_dimension_numbers<[1], [0], [0], [1], [0, 0, 1, 1], [], []>} : vector<32x32xf32>, vector<32x2xf32>, vector<32x2xf32> -> vector<32x2xf32>
    %cst_60 = arith.constant 0.000000e+00 : f32
    %124 = vector.broadcast %cst_60 : f32 to vector<32x2xf32>
    %125 = arith.maximumf %123, %124 : vector<32x2xf32>
    %c0_61 = arith.constant 0 : index
    %c0_62 = arith.constant 0 : index
    %126 = vector.load %arg8[%c0_61, %c0_62] : memref<32x32xf32, #tpu.memory_space<vmem>>, vector<32x32xf32>
    %cst_63 = arith.constant dense<0.000000e+00> : vector<32x2xf32>
    %127 = tpu.matmul %126, %125, %cst_63 {dimension_numbers = #tpu.dot_dimension_numbers<[1], [0], [0], [1], [0, 0, 1, 1], [], []>} : vector<32x32xf32>, vector<32x2xf32>, vector<32x2xf32> -> vector<32x2xf32>
    %128 = vector.extract_strided_slice %127 {offsets = [0, 0], sizes = [32, 1], strides = [1, 1]} : vector<32x2xf32> to vector<32x1xf32>
    %129 = vector.extract_strided_slice %127 {offsets = [0, 1], sizes = [32, 1], strides = [1, 1]} : vector<32x2xf32> to vector<32x1xf32>
    %130 = arith.addf %128, %129 : vector<32x1xf32>
    %131 = arith.negf %130 : vector<32x1xf32>
    %132 = math.exp %131 : vector<32x1xf32>
    %cst_64 = arith.constant 1.000000e+00 : f32
    %133 = vector.broadcast %cst_64 : f32 to vector<32x1xf32>
    %134 = arith.addf %133, %132 : vector<32x1xf32>
    %135 = arith.divf %133, %134 : vector<32x1xf32>
    %136 = vector.broadcast %135 : vector<32x1xf32> to vector<32x256xf32>
    %137 = arith.mulf %114, %136 : vector<32x256xf32>
    %c17_i32_65 = arith.constant 17 : i32
    %138 = tpu.dynamic_rotate %137 by %c17_i32_65 dim 1 : vector<32x256xf32>, i32 -> vector<32x256xf32>
    %139 = vector.extract_strided_slice %0 {offsets = [0, 0], sizes = [1, 256], strides = [1, 1]} : vector<9x256xf32> to vector<1x256xf32>
    %cst_66 = arith.constant 0.000000e+00 : f32
    %140 = vector.broadcast %cst_66 : f32 to vector<1x256xf32>
    %141 = arith.cmpf one, %139, %140 : vector<1x256xf32>
    %cst_67 = arith.constant 0.000000e+00 : f32
    %142 = vector.shape_cast %141 : vector<1x256xi1> to vector<1x256xi1>
    %143 = vector.broadcast %142 : vector<1x256xi1> to vector<32x256xi1>
    %144 = vector.broadcast %cst_67 : f32 to vector<32x256xf32>
    %145 = arith.select %143, %138, %144 : vector<32x256xi1>, vector<32x256xf32>
    %c0_68 = arith.constant 0 : index
    %c0_69 = arith.constant 0 : index
    %c0_70 = arith.constant 0 : index
    %146 = vector.load %arg9[%c0_68, %c0_69, %c0_70] : memref<9x16x32xf32, #tpu.memory_space<vmem>>, vector<1x16x32xf32>
    %147 = vector.shape_cast %146 : vector<1x16x32xf32> to vector<16x32xf32>
    %cst_71 = arith.constant dense<0.000000e+00> : vector<16x256xf32>
    %148 = tpu.matmul %147, %145, %cst_71 {dimension_numbers = #tpu.dot_dimension_numbers<[1], [0], [0], [1], [0, 0, 1, 1], [], []>} : vector<16x32xf32>, vector<32x256xf32>, vector<16x256xf32> -> vector<16x256xf32>
    %c16_i32_72 = arith.constant 16 : i32
    %149 = tpu.dynamic_rotate %137 by %c16_i32_72 dim 1 : vector<32x256xf32>, i32 -> vector<32x256xf32>
    %150 = vector.extract_strided_slice %0 {offsets = [1, 0], sizes = [1, 256], strides = [1, 1]} : vector<9x256xf32> to vector<1x256xf32>
    %cst_73 = arith.constant 0.000000e+00 : f32
    %151 = vector.broadcast %cst_73 : f32 to vector<1x256xf32>
    %152 = arith.cmpf one, %150, %151 : vector<1x256xf32>
    %cst_74 = arith.constant 0.000000e+00 : f32
    %153 = vector.shape_cast %152 : vector<1x256xi1> to vector<1x256xi1>
    %154 = vector.broadcast %153 : vector<1x256xi1> to vector<32x256xi1>
    %155 = vector.broadcast %cst_74 : f32 to vector<32x256xf32>
    %156 = arith.select %154, %149, %155 : vector<32x256xi1>, vector<32x256xf32>
    %c1_75 = arith.constant 1 : index
    %c0_76 = arith.constant 0 : index
    %c0_77 = arith.constant 0 : index
    %157 = vector.load %arg9[%c1_75, %c0_76, %c0_77] : memref<9x16x32xf32, #tpu.memory_space<vmem>>, vector<1x16x32xf32>
    %158 = vector.shape_cast %157 : vector<1x16x32xf32> to vector<16x32xf32>
    %cst_78 = arith.constant dense<0.000000e+00> : vector<16x256xf32>
    %159 = tpu.matmul %158, %156, %cst_78 {dimension_numbers = #tpu.dot_dimension_numbers<[1], [0], [0], [1], [0, 0, 1, 1], [], []>} : vector<16x32xf32>, vector<32x256xf32>, vector<16x256xf32> -> vector<16x256xf32>
    %160 = arith.addf %148, %159 : vector<16x256xf32>
    %c15_i32_79 = arith.constant 15 : i32
    %161 = tpu.dynamic_rotate %137 by %c15_i32_79 dim 1 : vector<32x256xf32>, i32 -> vector<32x256xf32>
    %162 = vector.extract_strided_slice %0 {offsets = [2, 0], sizes = [1, 256], strides = [1, 1]} : vector<9x256xf32> to vector<1x256xf32>
    %cst_80 = arith.constant 0.000000e+00 : f32
    %163 = vector.broadcast %cst_80 : f32 to vector<1x256xf32>
    %164 = arith.cmpf one, %162, %163 : vector<1x256xf32>
    %cst_81 = arith.constant 0.000000e+00 : f32
    %165 = vector.shape_cast %164 : vector<1x256xi1> to vector<1x256xi1>
    %166 = vector.broadcast %165 : vector<1x256xi1> to vector<32x256xi1>
    %167 = vector.broadcast %cst_81 : f32 to vector<32x256xf32>
    %168 = arith.select %166, %161, %167 : vector<32x256xi1>, vector<32x256xf32>
    %c2_82 = arith.constant 2 : index
    %c0_83 = arith.constant 0 : index
    %c0_84 = arith.constant 0 : index
    %169 = vector.load %arg9[%c2_82, %c0_83, %c0_84] : memref<9x16x32xf32, #tpu.memory_space<vmem>>, vector<1x16x32xf32>
    %170 = vector.shape_cast %169 : vector<1x16x32xf32> to vector<16x32xf32>
    %cst_85 = arith.constant dense<0.000000e+00> : vector<16x256xf32>
    %171 = tpu.matmul %170, %168, %cst_85 {dimension_numbers = #tpu.dot_dimension_numbers<[1], [0], [0], [1], [0, 0, 1, 1], [], []>} : vector<16x32xf32>, vector<32x256xf32>, vector<16x256xf32> -> vector<16x256xf32>
    %172 = arith.addf %160, %171 : vector<16x256xf32>
    %c1_i32_86 = arith.constant 1 : i32
    %173 = tpu.dynamic_rotate %137 by %c1_i32_86 dim 1 : vector<32x256xf32>, i32 -> vector<32x256xf32>
    %174 = vector.extract_strided_slice %0 {offsets = [3, 0], sizes = [1, 256], strides = [1, 1]} : vector<9x256xf32> to vector<1x256xf32>
    %cst_87 = arith.constant 0.000000e+00 : f32
    %175 = vector.broadcast %cst_87 : f32 to vector<1x256xf32>
    %176 = arith.cmpf one, %174, %175 : vector<1x256xf32>
    %cst_88 = arith.constant 0.000000e+00 : f32
    %177 = vector.shape_cast %176 : vector<1x256xi1> to vector<1x256xi1>
    %178 = vector.broadcast %177 : vector<1x256xi1> to vector<32x256xi1>
    %179 = vector.broadcast %cst_88 : f32 to vector<32x256xf32>
    %180 = arith.select %178, %173, %179 : vector<32x256xi1>, vector<32x256xf32>
    %c3_89 = arith.constant 3 : index
    %c0_90 = arith.constant 0 : index
    %c0_91 = arith.constant 0 : index
    %181 = vector.load %arg9[%c3_89, %c0_90, %c0_91] : memref<9x16x32xf32, #tpu.memory_space<vmem>>, vector<1x16x32xf32>
    %182 = vector.shape_cast %181 : vector<1x16x32xf32> to vector<16x32xf32>
    %cst_92 = arith.constant dense<0.000000e+00> : vector<16x256xf32>
    %183 = tpu.matmul %182, %180, %cst_92 {dimension_numbers = #tpu.dot_dimension_numbers<[1], [0], [0], [1], [0, 0, 1, 1], [], []>} : vector<16x32xf32>, vector<32x256xf32>, vector<16x256xf32> -> vector<16x256xf32>
    %184 = arith.addf %172, %183 : vector<16x256xf32>
    %c4_93 = arith.constant 4 : index
    %c0_94 = arith.constant 0 : index
    %c0_95 = arith.constant 0 : index
    %185 = vector.load %arg9[%c4_93, %c0_94, %c0_95] : memref<9x16x32xf32, #tpu.memory_space<vmem>>, vector<1x16x32xf32>
    %186 = vector.shape_cast %185 : vector<1x16x32xf32> to vector<16x32xf32>
    %cst_96 = arith.constant dense<0.000000e+00> : vector<16x256xf32>
    %187 = tpu.matmul %186, %137, %cst_96 {dimension_numbers = #tpu.dot_dimension_numbers<[1], [0], [0], [1], [0, 0, 1, 1], [], []>} : vector<16x32xf32>, vector<32x256xf32>, vector<16x256xf32> -> vector<16x256xf32>
    %188 = arith.addf %184, %187 : vector<16x256xf32>
    %c255_i32_97 = arith.constant 255 : i32
    %189 = tpu.dynamic_rotate %137 by %c255_i32_97 dim 1 : vector<32x256xf32>, i32 -> vector<32x256xf32>
    %190 = vector.extract_strided_slice %0 {offsets = [5, 0], sizes = [1, 256], strides = [1, 1]} : vector<9x256xf32> to vector<1x256xf32>
    %cst_98 = arith.constant 0.000000e+00 : f32
    %191 = vector.broadcast %cst_98 : f32 to vector<1x256xf32>
    %192 = arith.cmpf one, %190, %191 : vector<1x256xf32>
    %cst_99 = arith.constant 0.000000e+00 : f32
    %193 = vector.shape_cast %192 : vector<1x256xi1> to vector<1x256xi1>
    %194 = vector.broadcast %193 : vector<1x256xi1> to vector<32x256xi1>
    %195 = vector.broadcast %cst_99 : f32 to vector<32x256xf32>
    %196 = arith.select %194, %189, %195 : vector<32x256xi1>, vector<32x256xf32>
    %c5_100 = arith.constant 5 : index
    %c0_101 = arith.constant 0 : index
    %c0_102 = arith.constant 0 : index
    %197 = vector.load %arg9[%c5_100, %c0_101, %c0_102] : memref<9x16x32xf32, #tpu.memory_space<vmem>>, vector<1x16x32xf32>
    %198 = vector.shape_cast %197 : vector<1x16x32xf32> to vector<16x32xf32>
    %cst_103 = arith.constant dense<0.000000e+00> : vector<16x256xf32>
    %199 = tpu.matmul %198, %196, %cst_103 {dimension_numbers = #tpu.dot_dimension_numbers<[1], [0], [0], [1], [0, 0, 1, 1], [], []>} : vector<16x32xf32>, vector<32x256xf32>, vector<16x256xf32> -> vector<16x256xf32>
    %200 = arith.addf %188, %199 : vector<16x256xf32>
    %c241_i32_104 = arith.constant 241 : i32
    %201 = tpu.dynamic_rotate %137 by %c241_i32_104 dim 1 : vector<32x256xf32>, i32 -> vector<32x256xf32>
    %202 = vector.extract_strided_slice %0 {offsets = [6, 0], sizes = [1, 256], strides = [1, 1]} : vector<9x256xf32> to vector<1x256xf32>
    %cst_105 = arith.constant 0.000000e+00 : f32
    %203 = vector.broadcast %cst_105 : f32 to vector<1x256xf32>
    %204 = arith.cmpf one, %202, %203 : vector<1x256xf32>
    %cst_106 = arith.constant 0.000000e+00 : f32
    %205 = vector.shape_cast %204 : vector<1x256xi1> to vector<1x256xi1>
    %206 = vector.broadcast %205 : vector<1x256xi1> to vector<32x256xi1>
    %207 = vector.broadcast %cst_106 : f32 to vector<32x256xf32>
    %208 = arith.select %206, %201, %207 : vector<32x256xi1>, vector<32x256xf32>
    %c6_107 = arith.constant 6 : index
    %c0_108 = arith.constant 0 : index
    %c0_109 = arith.constant 0 : index
    %209 = vector.load %arg9[%c6_107, %c0_108, %c0_109] : memref<9x16x32xf32, #tpu.memory_space<vmem>>, vector<1x16x32xf32>
    %210 = vector.shape_cast %209 : vector<1x16x32xf32> to vector<16x32xf32>
    %cst_110 = arith.constant dense<0.000000e+00> : vector<16x256xf32>
    %211 = tpu.matmul %210, %208, %cst_110 {dimension_numbers = #tpu.dot_dimension_numbers<[1], [0], [0], [1], [0, 0, 1, 1], [], []>} : vector<16x32xf32>, vector<32x256xf32>, vector<16x256xf32> -> vector<16x256xf32>
    %212 = arith.addf %200, %211 : vector<16x256xf32>
    %c240_i32_111 = arith.constant 240 : i32
    %213 = tpu.dynamic_rotate %137 by %c240_i32_111 dim 1 : vector<32x256xf32>, i32 -> vector<32x256xf32>
    %214 = vector.extract_strided_slice %0 {offsets = [7, 0], sizes = [1, 256], strides = [1, 1]} : vector<9x256xf32> to vector<1x256xf32>
    %cst_112 = arith.constant 0.000000e+00 : f32
    %215 = vector.broadcast %cst_112 : f32 to vector<1x256xf32>
    %216 = arith.cmpf one, %214, %215 : vector<1x256xf32>
    %cst_113 = arith.constant 0.000000e+00 : f32
    %217 = vector.shape_cast %216 : vector<1x256xi1> to vector<1x256xi1>
    %218 = vector.broadcast %217 : vector<1x256xi1> to vector<32x256xi1>
    %219 = vector.broadcast %cst_113 : f32 to vector<32x256xf32>
    %220 = arith.select %218, %213, %219 : vector<32x256xi1>, vector<32x256xf32>
    %c7_114 = arith.constant 7 : index
    %c0_115 = arith.constant 0 : index
    %c0_116 = arith.constant 0 : index
    %221 = vector.load %arg9[%c7_114, %c0_115, %c0_116] : memref<9x16x32xf32, #tpu.memory_space<vmem>>, vector<1x16x32xf32>
    %222 = vector.shape_cast %221 : vector<1x16x32xf32> to vector<16x32xf32>
    %cst_117 = arith.constant dense<0.000000e+00> : vector<16x256xf32>
    %223 = tpu.matmul %222, %220, %cst_117 {dimension_numbers = #tpu.dot_dimension_numbers<[1], [0], [0], [1], [0, 0, 1, 1], [], []>} : vector<16x32xf32>, vector<32x256xf32>, vector<16x256xf32> -> vector<16x256xf32>
    %224 = arith.addf %212, %223 : vector<16x256xf32>
    %c239_i32_118 = arith.constant 239 : i32
    %225 = tpu.dynamic_rotate %137 by %c239_i32_118 dim 1 : vector<32x256xf32>, i32 -> vector<32x256xf32>
    %226 = vector.extract_strided_slice %0 {offsets = [8, 0], sizes = [1, 256], strides = [1, 1]} : vector<9x256xf32> to vector<1x256xf32>
    %cst_119 = arith.constant 0.000000e+00 : f32
    %227 = vector.broadcast %cst_119 : f32 to vector<1x256xf32>
    %228 = arith.cmpf one, %226, %227 : vector<1x256xf32>
    %cst_120 = arith.constant 0.000000e+00 : f32
    %229 = vector.shape_cast %228 : vector<1x256xi1> to vector<1x256xi1>
    %230 = vector.broadcast %229 : vector<1x256xi1> to vector<32x256xi1>
    %231 = vector.broadcast %cst_120 : f32 to vector<32x256xf32>
    %232 = arith.select %230, %225, %231 : vector<32x256xi1>, vector<32x256xf32>
    %c8_121 = arith.constant 8 : index
    %c0_122 = arith.constant 0 : index
    %c0_123 = arith.constant 0 : index
    %233 = vector.load %arg9[%c8_121, %c0_122, %c0_123] : memref<9x16x32xf32, #tpu.memory_space<vmem>>, vector<1x16x32xf32>
    %234 = vector.shape_cast %233 : vector<1x16x32xf32> to vector<16x32xf32>
    %cst_124 = arith.constant dense<0.000000e+00> : vector<16x256xf32>
    %235 = tpu.matmul %234, %232, %cst_124 {dimension_numbers = #tpu.dot_dimension_numbers<[1], [0], [0], [1], [0, 0, 1, 1], [], []>} : vector<16x32xf32>, vector<32x256xf32>, vector<16x256xf32> -> vector<16x256xf32>
    %236 = arith.addf %224, %235 : vector<16x256xf32>
    %c0_125 = arith.constant 0 : index
    %c0_126 = arith.constant 0 : index
    %237 = vector.load %arg10[%c0_125, %c0_126] : memref<16x1xf32, #tpu.memory_space<vmem>>, vector<16x1xf32>
    %238 = vector.broadcast %237 : vector<16x1xf32> to vector<16x256xf32>
    %239 = arith.addf %236, %238 : vector<16x256xf32>
    %c0_127 = arith.constant 0 : index
    %c0_128 = arith.constant 0 : index
    %240 = vector.load %arg11[%c0_127, %c0_128] : memref<16x1xf32, #tpu.memory_space<vmem>>, vector<16x1xf32>
    %241 = vector.broadcast %240 : vector<16x1xf32> to vector<16x256xf32>
    %242 = arith.mulf %239, %241 : vector<16x256xf32>
    %c0_129 = arith.constant 0 : index
    %c0_130 = arith.constant 0 : index
    %243 = vector.load %arg12[%c0_129, %c0_130] : memref<16x1xf32, #tpu.memory_space<vmem>>, vector<16x1xf32>
    %244 = vector.broadcast %243 : vector<16x1xf32> to vector<16x256xf32>
    %245 = arith.addf %242, %244 : vector<16x256xf32>
    %cst_131 = arith.constant 0.000000e+00 : f32
    %246 = vector.broadcast %cst_131 : f32 to vector<16x256xf32>
    %247 = arith.cmpf oge, %245, %246 : vector<16x256xf32>
    %cst_132 = arith.constant 3.000000e-01 : f32
    %248 = vector.broadcast %cst_132 : f32 to vector<16x256xf32>
    %249 = arith.mulf %248, %245 : vector<16x256xf32>
    %250 = arith.select %247, %245, %249 : vector<16x256xi1>, vector<16x256xf32>
    %cst_133 = arith.constant dense<0.000000e+00> : vector<16xf32>
    %251 = vector.multi_reduction <add>, %250, %cst_133 [1] : vector<16x256xf32> to vector<16xf32>
    %252 = vector.shape_cast %251 : vector<16xf32> to vector<16x1xf32>
    %cst_134 = arith.constant 3.906250e-03 : f32
    %253 = vector.broadcast %cst_134 : f32 to vector<16x1xf32>
    %254 = arith.mulf %252, %253 : vector<16x1xf32>
    %cst_135 = arith.constant dense<0xFF800000> : vector<16xf32>
    %255 = vector.multi_reduction <maximumf>, %250, %cst_135 [1] : vector<16x256xf32> to vector<16xf32>
    %256 = vector.shape_cast %255 : vector<16xf32> to vector<16x1xf32>
    %257 = tpu.concatenate %254, %256 in 1 : vector<16x1xf32>, vector<16x1xf32> -> vector<16x2xf32>
    %c0_136 = arith.constant 0 : index
    %c0_137 = arith.constant 0 : index
    %258 = vector.load %arg13[%c0_136, %c0_137] : memref<16x16xf32, #tpu.memory_space<vmem>>, vector<16x16xf32>
    %cst_138 = arith.constant dense<0.000000e+00> : vector<16x2xf32>
    %259 = tpu.matmul %258, %257, %cst_138 {dimension_numbers = #tpu.dot_dimension_numbers<[1], [0], [0], [1], [0, 0, 1, 1], [], []>} : vector<16x16xf32>, vector<16x2xf32>, vector<16x2xf32> -> vector<16x2xf32>
    %cst_139 = arith.constant 0.000000e+00 : f32
    %260 = vector.broadcast %cst_139 : f32 to vector<16x2xf32>
    %261 = arith.maximumf %259, %260 : vector<16x2xf32>
    %c0_140 = arith.constant 0 : index
    %c0_141 = arith.constant 0 : index
    %262 = vector.load %arg14[%c0_140, %c0_141] : memref<16x16xf32, #tpu.memory_space<vmem>>, vector<16x16xf32>
    %cst_142 = arith.constant dense<0.000000e+00> : vector<16x2xf32>
    %263 = tpu.matmul %262, %261, %cst_142 {dimension_numbers = #tpu.dot_dimension_numbers<[1], [0], [0], [1], [0, 0, 1, 1], [], []>} : vector<16x16xf32>, vector<16x2xf32>, vector<16x2xf32> -> vector<16x2xf32>
    %264 = vector.extract_strided_slice %263 {offsets = [0, 0], sizes = [16, 1], strides = [1, 1]} : vector<16x2xf32> to vector<16x1xf32>
    %265 = vector.extract_strided_slice %263 {offsets = [0, 1], sizes = [16, 1], strides = [1, 1]} : vector<16x2xf32> to vector<16x1xf32>
    %266 = arith.addf %264, %265 : vector<16x1xf32>
    %267 = arith.negf %266 : vector<16x1xf32>
    %268 = math.exp %267 : vector<16x1xf32>
    %cst_143 = arith.constant 1.000000e+00 : f32
    %269 = vector.broadcast %cst_143 : f32 to vector<16x1xf32>
    %270 = arith.addf %269, %268 : vector<16x1xf32>
    %271 = arith.divf %269, %270 : vector<16x1xf32>
    %272 = vector.broadcast %271 : vector<16x1xf32> to vector<16x256xf32>
    %273 = arith.mulf %250, %272 : vector<16x256xf32>
    %c17_i32_144 = arith.constant 17 : i32
    %274 = tpu.dynamic_rotate %273 by %c17_i32_144 dim 1 : vector<16x256xf32>, i32 -> vector<16x256xf32>
    %275 = vector.extract_strided_slice %0 {offsets = [0, 0], sizes = [1, 256], strides = [1, 1]} : vector<9x256xf32> to vector<1x256xf32>
    %cst_145 = arith.constant 0.000000e+00 : f32
    %276 = vector.broadcast %cst_145 : f32 to vector<1x256xf32>
    %277 = arith.cmpf one, %275, %276 : vector<1x256xf32>
    %cst_146 = arith.constant 0.000000e+00 : f32
    %278 = vector.shape_cast %277 : vector<1x256xi1> to vector<1x256xi1>
    %279 = vector.broadcast %278 : vector<1x256xi1> to vector<16x256xi1>
    %280 = vector.broadcast %cst_146 : f32 to vector<16x256xf32>
    %281 = arith.select %279, %274, %280 : vector<16x256xi1>, vector<16x256xf32>
    %c0_147 = arith.constant 0 : index
    %c0_148 = arith.constant 0 : index
    %c0_149 = arith.constant 0 : index
    %282 = vector.load %arg15[%c0_147, %c0_148, %c0_149] : memref<9x4x16xf32, #tpu.memory_space<vmem>>, vector<1x4x16xf32>
    %283 = vector.shape_cast %282 : vector<1x4x16xf32> to vector<4x16xf32>
    %cst_150 = arith.constant dense<0.000000e+00> : vector<4x256xf32>
    %284 = tpu.matmul %283, %281, %cst_150 {dimension_numbers = #tpu.dot_dimension_numbers<[1], [0], [0], [1], [0, 0, 1, 1], [], []>} : vector<4x16xf32>, vector<16x256xf32>, vector<4x256xf32> -> vector<4x256xf32>
    %c16_i32_151 = arith.constant 16 : i32
    %285 = tpu.dynamic_rotate %273 by %c16_i32_151 dim 1 : vector<16x256xf32>, i32 -> vector<16x256xf32>
    %286 = vector.extract_strided_slice %0 {offsets = [1, 0], sizes = [1, 256], strides = [1, 1]} : vector<9x256xf32> to vector<1x256xf32>
    %cst_152 = arith.constant 0.000000e+00 : f32
    %287 = vector.broadcast %cst_152 : f32 to vector<1x256xf32>
    %288 = arith.cmpf one, %286, %287 : vector<1x256xf32>
    %cst_153 = arith.constant 0.000000e+00 : f32
    %289 = vector.shape_cast %288 : vector<1x256xi1> to vector<1x256xi1>
    %290 = vector.broadcast %289 : vector<1x256xi1> to vector<16x256xi1>
    %291 = vector.broadcast %cst_153 : f32 to vector<16x256xf32>
    %292 = arith.select %290, %285, %291 : vector<16x256xi1>, vector<16x256xf32>
    %c1_154 = arith.constant 1 : index
    %c0_155 = arith.constant 0 : index
    %c0_156 = arith.constant 0 : index
    %293 = vector.load %arg15[%c1_154, %c0_155, %c0_156] : memref<9x4x16xf32, #tpu.memory_space<vmem>>, vector<1x4x16xf32>
    %294 = vector.shape_cast %293 : vector<1x4x16xf32> to vector<4x16xf32>
    %cst_157 = arith.constant dense<0.000000e+00> : vector<4x256xf32>
    %295 = tpu.matmul %294, %292, %cst_157 {dimension_numbers = #tpu.dot_dimension_numbers<[1], [0], [0], [1], [0, 0, 1, 1], [], []>} : vector<4x16xf32>, vector<16x256xf32>, vector<4x256xf32> -> vector<4x256xf32>
    %296 = arith.addf %284, %295 : vector<4x256xf32>
    %c15_i32_158 = arith.constant 15 : i32
    %297 = tpu.dynamic_rotate %273 by %c15_i32_158 dim 1 : vector<16x256xf32>, i32 -> vector<16x256xf32>
    %298 = vector.extract_strided_slice %0 {offsets = [2, 0], sizes = [1, 256], strides = [1, 1]} : vector<9x256xf32> to vector<1x256xf32>
    %cst_159 = arith.constant 0.000000e+00 : f32
    %299 = vector.broadcast %cst_159 : f32 to vector<1x256xf32>
    %300 = arith.cmpf one, %298, %299 : vector<1x256xf32>
    %cst_160 = arith.constant 0.000000e+00 : f32
    %301 = vector.shape_cast %300 : vector<1x256xi1> to vector<1x256xi1>
    %302 = vector.broadcast %301 : vector<1x256xi1> to vector<16x256xi1>
    %303 = vector.broadcast %cst_160 : f32 to vector<16x256xf32>
    %304 = arith.select %302, %297, %303 : vector<16x256xi1>, vector<16x256xf32>
    %c2_161 = arith.constant 2 : index
    %c0_162 = arith.constant 0 : index
    %c0_163 = arith.constant 0 : index
    %305 = vector.load %arg15[%c2_161, %c0_162, %c0_163] : memref<9x4x16xf32, #tpu.memory_space<vmem>>, vector<1x4x16xf32>
    %306 = vector.shape_cast %305 : vector<1x4x16xf32> to vector<4x16xf32>
    %cst_164 = arith.constant dense<0.000000e+00> : vector<4x256xf32>
    %307 = tpu.matmul %306, %304, %cst_164 {dimension_numbers = #tpu.dot_dimension_numbers<[1], [0], [0], [1], [0, 0, 1, 1], [], []>} : vector<4x16xf32>, vector<16x256xf32>, vector<4x256xf32> -> vector<4x256xf32>
    %308 = arith.addf %296, %307 : vector<4x256xf32>
    %c1_i32_165 = arith.constant 1 : i32
    %309 = tpu.dynamic_rotate %273 by %c1_i32_165 dim 1 : vector<16x256xf32>, i32 -> vector<16x256xf32>
    %310 = vector.extract_strided_slice %0 {offsets = [3, 0], sizes = [1, 256], strides = [1, 1]} : vector<9x256xf32> to vector<1x256xf32>
    %cst_166 = arith.constant 0.000000e+00 : f32
    %311 = vector.broadcast %cst_166 : f32 to vector<1x256xf32>
    %312 = arith.cmpf one, %310, %311 : vector<1x256xf32>
    %cst_167 = arith.constant 0.000000e+00 : f32
    %313 = vector.shape_cast %312 : vector<1x256xi1> to vector<1x256xi1>
    %314 = vector.broadcast %313 : vector<1x256xi1> to vector<16x256xi1>
    %315 = vector.broadcast %cst_167 : f32 to vector<16x256xf32>
    %316 = arith.select %314, %309, %315 : vector<16x256xi1>, vector<16x256xf32>
    %c3_168 = arith.constant 3 : index
    %c0_169 = arith.constant 0 : index
    %c0_170 = arith.constant 0 : index
    %317 = vector.load %arg15[%c3_168, %c0_169, %c0_170] : memref<9x4x16xf32, #tpu.memory_space<vmem>>, vector<1x4x16xf32>
    %318 = vector.shape_cast %317 : vector<1x4x16xf32> to vector<4x16xf32>
    %cst_171 = arith.constant dense<0.000000e+00> : vector<4x256xf32>
    %319 = tpu.matmul %318, %316, %cst_171 {dimension_numbers = #tpu.dot_dimension_numbers<[1], [0], [0], [1], [0, 0, 1, 1], [], []>} : vector<4x16xf32>, vector<16x256xf32>, vector<4x256xf32> -> vector<4x256xf32>
    %320 = arith.addf %308, %319 : vector<4x256xf32>
    %c4_172 = arith.constant 4 : index
    %c0_173 = arith.constant 0 : index
    %c0_174 = arith.constant 0 : index
    %321 = vector.load %arg15[%c4_172, %c0_173, %c0_174] : memref<9x4x16xf32, #tpu.memory_space<vmem>>, vector<1x4x16xf32>
    %322 = vector.shape_cast %321 : vector<1x4x16xf32> to vector<4x16xf32>
    %cst_175 = arith.constant dense<0.000000e+00> : vector<4x256xf32>
    %323 = tpu.matmul %322, %273, %cst_175 {dimension_numbers = #tpu.dot_dimension_numbers<[1], [0], [0], [1], [0, 0, 1, 1], [], []>} : vector<4x16xf32>, vector<16x256xf32>, vector<4x256xf32> -> vector<4x256xf32>
    %324 = arith.addf %320, %323 : vector<4x256xf32>
    %c255_i32_176 = arith.constant 255 : i32
    %325 = tpu.dynamic_rotate %273 by %c255_i32_176 dim 1 : vector<16x256xf32>, i32 -> vector<16x256xf32>
    %326 = vector.extract_strided_slice %0 {offsets = [5, 0], sizes = [1, 256], strides = [1, 1]} : vector<9x256xf32> to vector<1x256xf32>
    %cst_177 = arith.constant 0.000000e+00 : f32
    %327 = vector.broadcast %cst_177 : f32 to vector<1x256xf32>
    %328 = arith.cmpf one, %326, %327 : vector<1x256xf32>
    %cst_178 = arith.constant 0.000000e+00 : f32
    %329 = vector.shape_cast %328 : vector<1x256xi1> to vector<1x256xi1>
    %330 = vector.broadcast %329 : vector<1x256xi1> to vector<16x256xi1>
    %331 = vector.broadcast %cst_178 : f32 to vector<16x256xf32>
    %332 = arith.select %330, %325, %331 : vector<16x256xi1>, vector<16x256xf32>
    %c5_179 = arith.constant 5 : index
    %c0_180 = arith.constant 0 : index
    %c0_181 = arith.constant 0 : index
    %333 = vector.load %arg15[%c5_179, %c0_180, %c0_181] : memref<9x4x16xf32, #tpu.memory_space<vmem>>, vector<1x4x16xf32>
    %334 = vector.shape_cast %333 : vector<1x4x16xf32> to vector<4x16xf32>
    %cst_182 = arith.constant dense<0.000000e+00> : vector<4x256xf32>
    %335 = tpu.matmul %334, %332, %cst_182 {dimension_numbers = #tpu.dot_dimension_numbers<[1], [0], [0], [1], [0, 0, 1, 1], [], []>} : vector<4x16xf32>, vector<16x256xf32>, vector<4x256xf32> -> vector<4x256xf32>
    %336 = arith.addf %324, %335 : vector<4x256xf32>
    %c241_i32_183 = arith.constant 241 : i32
    %337 = tpu.dynamic_rotate %273 by %c241_i32_183 dim 1 : vector<16x256xf32>, i32 -> vector<16x256xf32>
    %338 = vector.extract_strided_slice %0 {offsets = [6, 0], sizes = [1, 256], strides = [1, 1]} : vector<9x256xf32> to vector<1x256xf32>
    %cst_184 = arith.constant 0.000000e+00 : f32
    %339 = vector.broadcast %cst_184 : f32 to vector<1x256xf32>
    %340 = arith.cmpf one, %338, %339 : vector<1x256xf32>
    %cst_185 = arith.constant 0.000000e+00 : f32
    %341 = vector.shape_cast %340 : vector<1x256xi1> to vector<1x256xi1>
    %342 = vector.broadcast %341 : vector<1x256xi1> to vector<16x256xi1>
    %343 = vector.broadcast %cst_185 : f32 to vector<16x256xf32>
    %344 = arith.select %342, %337, %343 : vector<16x256xi1>, vector<16x256xf32>
    %c6_186 = arith.constant 6 : index
    %c0_187 = arith.constant 0 : index
    %c0_188 = arith.constant 0 : index
    %345 = vector.load %arg15[%c6_186, %c0_187, %c0_188] : memref<9x4x16xf32, #tpu.memory_space<vmem>>, vector<1x4x16xf32>
    %346 = vector.shape_cast %345 : vector<1x4x16xf32> to vector<4x16xf32>
    %cst_189 = arith.constant dense<0.000000e+00> : vector<4x256xf32>
    %347 = tpu.matmul %346, %344, %cst_189 {dimension_numbers = #tpu.dot_dimension_numbers<[1], [0], [0], [1], [0, 0, 1, 1], [], []>} : vector<4x16xf32>, vector<16x256xf32>, vector<4x256xf32> -> vector<4x256xf32>
    %348 = arith.addf %336, %347 : vector<4x256xf32>
    %c240_i32_190 = arith.constant 240 : i32
    %349 = tpu.dynamic_rotate %273 by %c240_i32_190 dim 1 : vector<16x256xf32>, i32 -> vector<16x256xf32>
    %350 = vector.extract_strided_slice %0 {offsets = [7, 0], sizes = [1, 256], strides = [1, 1]} : vector<9x256xf32> to vector<1x256xf32>
    %cst_191 = arith.constant 0.000000e+00 : f32
    %351 = vector.broadcast %cst_191 : f32 to vector<1x256xf32>
    %352 = arith.cmpf one, %350, %351 : vector<1x256xf32>
    %cst_192 = arith.constant 0.000000e+00 : f32
    %353 = vector.shape_cast %352 : vector<1x256xi1> to vector<1x256xi1>
    %354 = vector.broadcast %353 : vector<1x256xi1> to vector<16x256xi1>
    %355 = vector.broadcast %cst_192 : f32 to vector<16x256xf32>
    %356 = arith.select %354, %349, %355 : vector<16x256xi1>, vector<16x256xf32>
    %c7_193 = arith.constant 7 : index
    %c0_194 = arith.constant 0 : index
    %c0_195 = arith.constant 0 : index
    %357 = vector.load %arg15[%c7_193, %c0_194, %c0_195] : memref<9x4x16xf32, #tpu.memory_space<vmem>>, vector<1x4x16xf32>
    %358 = vector.shape_cast %357 : vector<1x4x16xf32> to vector<4x16xf32>
    %cst_196 = arith.constant dense<0.000000e+00> : vector<4x256xf32>
    %359 = tpu.matmul %358, %356, %cst_196 {dimension_numbers = #tpu.dot_dimension_numbers<[1], [0], [0], [1], [0, 0, 1, 1], [], []>} : vector<4x16xf32>, vector<16x256xf32>, vector<4x256xf32> -> vector<4x256xf32>
    %360 = arith.addf %348, %359 : vector<4x256xf32>
    %c239_i32_197 = arith.constant 239 : i32
    %361 = tpu.dynamic_rotate %273 by %c239_i32_197 dim 1 : vector<16x256xf32>, i32 -> vector<16x256xf32>
    %362 = vector.extract_strided_slice %0 {offsets = [8, 0], sizes = [1, 256], strides = [1, 1]} : vector<9x256xf32> to vector<1x256xf32>
    %cst_198 = arith.constant 0.000000e+00 : f32
    %363 = vector.broadcast %cst_198 : f32 to vector<1x256xf32>
    %364 = arith.cmpf one, %362, %363 : vector<1x256xf32>
    %cst_199 = arith.constant 0.000000e+00 : f32
    %365 = vector.shape_cast %364 : vector<1x256xi1> to vector<1x256xi1>
    %366 = vector.broadcast %365 : vector<1x256xi1> to vector<16x256xi1>
    %367 = vector.broadcast %cst_199 : f32 to vector<16x256xf32>
    %368 = arith.select %366, %361, %367 : vector<16x256xi1>, vector<16x256xf32>
    %c8_200 = arith.constant 8 : index
    %c0_201 = arith.constant 0 : index
    %c0_202 = arith.constant 0 : index
    %369 = vector.load %arg15[%c8_200, %c0_201, %c0_202] : memref<9x4x16xf32, #tpu.memory_space<vmem>>, vector<1x4x16xf32>
    %370 = vector.shape_cast %369 : vector<1x4x16xf32> to vector<4x16xf32>
    %cst_203 = arith.constant dense<0.000000e+00> : vector<4x256xf32>
    %371 = tpu.matmul %370, %368, %cst_203 {dimension_numbers = #tpu.dot_dimension_numbers<[1], [0], [0], [1], [0, 0, 1, 1], [], []>} : vector<4x16xf32>, vector<16x256xf32>, vector<4x256xf32> -> vector<4x256xf32>
    %372 = arith.addf %360, %371 : vector<4x256xf32>
    %c0_204 = arith.constant 0 : index
    %c0_205 = arith.constant 0 : index
    %373 = vector.load %arg16[%c0_204, %c0_205] : memref<4x1xf32, #tpu.memory_space<vmem>>, vector<4x1xf32>
    %374 = vector.broadcast %373 : vector<4x1xf32> to vector<4x256xf32>
    %375 = arith.addf %372, %374 : vector<4x256xf32>
    %c0_206 = arith.constant 0 : index
    %c0_207 = arith.constant 0 : index
    %376 = vector.load %arg17[%c0_206, %c0_207] : memref<4x1xf32, #tpu.memory_space<vmem>>, vector<4x1xf32>
    %377 = vector.broadcast %376 : vector<4x1xf32> to vector<4x256xf32>
    %378 = arith.mulf %375, %377 : vector<4x256xf32>
    %c0_208 = arith.constant 0 : index
    %c0_209 = arith.constant 0 : index
    %379 = vector.load %arg18[%c0_208, %c0_209] : memref<4x1xf32, #tpu.memory_space<vmem>>, vector<4x1xf32>
    %380 = vector.broadcast %379 : vector<4x1xf32> to vector<4x256xf32>
    %381 = arith.addf %378, %380 : vector<4x256xf32>
    %382 = arith.addf %1, %381 : vector<4x256xf32>
    %c0_210 = arith.constant 0 : index
    %c0_211 = arith.constant 0 : index
    %383 = vector.load %arg19[%c0_210, %c0_211] : memref<4x256xf32, #tpu.memory_space<vmem>>, vector<4x256xf32>
    tpu.vector_store %arg19[%c0_210, %c0_211], %382 {strides = array<i32>} : memref<4x256xf32, #tpu.memory_space<vmem>>, vector<4x256xf32>,
    return
  }
  func.func @transform_0(%arg0: i32) -> (i32, i32) {
    %c0_i32 = arith.constant 0 : i32
    %c0_i32_0 = arith.constant 0 : i32
    return %c0_i32, %arg0 : i32, i32
  }
  func.func @transform_1(%arg0: i32) -> (i32, i32) {
    %c0_i32 = arith.constant 0 : i32
    %c0_i32_0 = arith.constant 0 : i32
    %c0_i32_1 = arith.constant 0 : i32
    return %c0_i32, %c0_i32_0 : i32, i32
  }
  func.func @transform_2(%arg0: i32) -> (i32, i32, i32) {
    %c0_i32 = arith.constant 0 : i32
    %c0_i32_0 = arith.constant 0 : i32
    %c0_i32_1 = arith.constant 0 : i32
    %c0_i32_2 = arith.constant 0 : i32
    return %c0_i32, %c0_i32_0, %c0_i32_1 : i32, i32, i32
  }
  func.func @transform_3(%arg0: i32) -> (i32, i32) {
    %c0_i32 = arith.constant 0 : i32
    %c0_i32_0 = arith.constant 0 : i32
    %c0_i32_1 = arith.constant 0 : i32
    return %c0_i32, %c0_i32_0 : i32, i32
  }
  func.func @transform_4(%arg0: i32) -> (i32, i32) {
    %c0_i32 = arith.constant 0 : i32
    %c0_i32_0 = arith.constant 0 : i32
    %c0_i32_1 = arith.constant 0 : i32
    return %c0_i32, %c0_i32_0 : i32, i32
  }
  func.func @transform_5(%arg0: i32) -> (i32, i32) {
    %c0_i32 = arith.constant 0 : i32
    %c0_i32_0 = arith.constant 0 : i32
    %c0_i32_1 = arith.constant 0 : i32
    return %c0_i32, %c0_i32_0 : i32, i32
  }
  func.func @transform_6(%arg0: i32) -> (i32, i32) {
    %c0_i32 = arith.constant 0 : i32
    %c0_i32_0 = arith.constant 0 : i32
    %c0_i32_1 = arith.constant 0 : i32
    return %c0_i32, %c0_i32_0 : i32, i32
  }
  func.func @transform_7(%arg0: i32) -> (i32, i32) {
    %c0_i32 = arith.constant 0 : i32
    %c0_i32_0 = arith.constant 0 : i32
    %c0_i32_1 = arith.constant 0 : i32
    return %c0_i32, %c0_i32_0 : i32, i32
  }
  func.func @transform_8(%arg0: i32) -> (i32, i32, i32) {
    %c0_i32 = arith.constant 0 : i32
    %c0_i32_0 = arith.constant 0 : i32
    %c0_i32_1 = arith.constant 0 : i32
    %c0_i32_2 = arith.constant 0 : i32
    return %c0_i32, %c0_i32_0, %c0_i32_1 : i32, i32, i32
  }
  func.func @transform_9(%arg0: i32) -> (i32, i32) {
    %c0_i32 = arith.constant 0 : i32
    %c0_i32_0 = arith.constant 0 : i32
    %c0_i32_1 = arith.constant 0 : i32
    return %c0_i32, %c0_i32_0 : i32, i32
  }
  func.func @transform_10(%arg0: i32) -> (i32, i32) {
    %c0_i32 = arith.constant 0 : i32
    %c0_i32_0 = arith.constant 0 : i32
    %c0_i32_1 = arith.constant 0 : i32
    return %c0_i32, %c0_i32_0 : i32, i32
  }
  func.func @transform_11(%arg0: i32) -> (i32, i32) {
    %c0_i32 = arith.constant 0 : i32
    %c0_i32_0 = arith.constant 0 : i32
    %c0_i32_1 = arith.constant 0 : i32
    return %c0_i32, %c0_i32_0 : i32, i32
  }
  func.func @transform_12(%arg0: i32) -> (i32, i32) {
    %c0_i32 = arith.constant 0 : i32
    %c0_i32_0 = arith.constant 0 : i32
    %c0_i32_1 = arith.constant 0 : i32
    return %c0_i32, %c0_i32_0 : i32, i32
  }
  func.func @transform_13(%arg0: i32) -> (i32, i32) {
    %c0_i32 = arith.constant 0 : i32
    %c0_i32_0 = arith.constant 0 : i32
    %c0_i32_1 = arith.constant 0 : i32
    return %c0_i32, %c0_i32_0 : i32, i32
  }
  func.func @transform_14(%arg0: i32) -> (i32, i32, i32) {
    %c0_i32 = arith.constant 0 : i32
    %c0_i32_0 = arith.constant 0 : i32
    %c0_i32_1 = arith.constant 0 : i32
    %c0_i32_2 = arith.constant 0 : i32
    return %c0_i32, %c0_i32_0, %c0_i32_1 : i32, i32, i32
  }
  func.func @transform_15(%arg0: i32) -> (i32, i32) {
    %c0_i32 = arith.constant 0 : i32
    %c0_i32_0 = arith.constant 0 : i32
    %c0_i32_1 = arith.constant 0 : i32
    return %c0_i32, %c0_i32_0 : i32, i32
  }
  func.func @transform_16(%arg0: i32) -> (i32, i32) {
    %c0_i32 = arith.constant 0 : i32
    %c0_i32_0 = arith.constant 0 : i32
    %c0_i32_1 = arith.constant 0 : i32
    return %c0_i32, %c0_i32_0 : i32, i32
  }
  func.func @transform_17(%arg0: i32) -> (i32, i32) {
    %c0_i32 = arith.constant 0 : i32
    %c0_i32_0 = arith.constant 0 : i32
    %c0_i32_1 = arith.constant 0 : i32
    return %c0_i32, %c0_i32_0 : i32, i32
  }
  func.func @transform_18(%arg0: i32) -> (i32, i32) {
    %c0_i32 = arith.constant 0 : i32
    %c0_i32_0 = arith.constant 0 : i32
    return %c0_i32, %arg0 : i32, i32
  }
}

</mosaic_0001>

<llo_original>
// kernel: tpu_custom_call.1
$region0: #{tpu_custom_call.1}
  #allocation0 [shape = 'u32[]', space=smem, size = 0x4, offset = 0x4, fixed_abs, tag = 'smem constant byte address 0x4 - core index']
  #allocation1 [shape = 'u32[144,128]{1,0:T(1,128)}', space=vmem, size = 0x12000, scoped, tag = 'internal scratch']
  %s0 = inlined_call_operand.vmem [shape: f32[4,512], index: 0, kind: input, shape index: {}]
  %s1 = inlined_call_operand.vmem [shape: f32[9,256], index: 1, kind: input, shape index: {}]
  %s2 = inlined_call_operand.vmem [shape: f32[9,32,4], index: 2, kind: input, shape index: {}]
  %s3 = inlined_call_operand.vmem [shape: f32[32,1], index: 3, kind: input, shape index: {}]
  %s4 = inlined_call_operand.vmem [shape: f32[32,1], index: 4, kind: input, shape index: {}]
  %s5 = inlined_call_operand.vmem [shape: f32[32,1], index: 5, kind: input, shape index: {}]
  %s6 = inlined_call_operand.vmem [shape: f32[32,32], index: 6, kind: input, shape index: {}]
  %s7 = inlined_call_operand.vmem [shape: f32[32,32], index: 7, kind: input, shape index: {}]
  %s8 = inlined_call_operand.vmem [shape: f32[9,16,32], index: 8, kind: input, shape index: {}]
  %s9 = inlined_call_operand.vmem [shape: f32[16,1], index: 9, kind: input, shape index: {}]
  %s10 = inlined_call_operand.vmem [shape: f32[16,1], index: 10, kind: input, shape index: {}]
  %s11 = inlined_call_operand.vmem [shape: f32[16,1], index: 11, kind: input, shape index: {}]
  %s12 = inlined_call_operand.vmem [shape: f32[16,16], index: 12, kind: input, shape index: {}]
  %s13 = inlined_call_operand.vmem [shape: f32[16,16], index: 13, kind: input, shape index: {}]
  %s14 = inlined_call_operand.vmem [shape: f32[9,4,16], index: 14, kind: input, shape index: {}]
  %s15 = inlined_call_operand.vmem [shape: f32[4,1], index: 15, kind: input, shape index: {}]
  %s16 = inlined_call_operand.vmem [shape: f32[4,1], index: 16, kind: input, shape index: {}]
  %s17 = inlined_call_operand.vmem [shape: f32[4,1], index: 17, kind: input, shape index: {}]
  %s18 = inlined_call_operand.hbm [shape: f32[4,512], index: 18, kind: output, shape index: {}]
  %s19 = sld [smem:[#allocation0]]
  $region105: #{tpu_custom_call.1} parent=0
    _
  %s21 = ssub.s32 1, %s19
  %s22 = scalar_select 0, %s21, %s19
  $region1: #{tpu_custom_call.1} parent=0
    #allocation2 [shape = 'u8[8192]{0}', space=vmem, size = 0x2000, scoped, tag = 'output window, operand 0']
    #allocation3 [shape = 's32[2]{0}', space=sflag, size = 0x8, scoped, tag = 'scoped memory for tpu_custom_call.1']
    %23 = vsyncpa [#allocation3], 0
    %s24 = scalar_lea.sflag [#allocation3], 1
    %25 = vsyncpa %s24, 0
    loop: start=0, step=1, limit=4
    $region2: #{tpu_custom_call.1} parent=1 // loop_pre_header
      _
    $region3: #{tpu_custom_call.1} parent=1 // loop_header
      %s27 = sphi 0, %s31
      %p28 = scmp.ge.s32.totalorder %s27, 4
      %s37 = sphi 0, %s39
      %s40 = sphi 0, %s37
      %s41 = sphi 0, %s40
      %s57 = sphi 0, %s41
      %s61 = sphi 0, %s61
      %s63 = sphi 0, %s61
      %s64 = sphi 0, %s63
      %s78 = sphi 0, %s64
      %s82 = sphi 0, %s82
      %s84 = sphi 0, %s82
      %s85 = sphi 0, %s84
      %s99 = sphi 0, %s85
      %s103 = sphi 0, %s103
      %s105 = sphi 0, %s103
      %s106 = sphi 0, %s105
      %s120 = sphi 0, %s106
      %s124 = sphi 0, %s124
      %s126 = sphi 0, %s124
      %s127 = sphi 0, %s126
      %s141 = sphi 0, %s127
      %s145 = sphi 0, %s145
      %s147 = sphi 0, %s145
      %s148 = sphi 0, %s147
      %s162 = sphi 0, %s148
      %s166 = sphi 0, %s166
      %s168 = sphi 0, %s166
      %s169 = sphi 0, %s168
      %s183 = sphi 0, %s169
      %s187 = sphi 0, %s187
      %s189 = sphi 0, %s187
      %s190 = sphi 0, %s189
      %s204 = sphi 0, %s190
      %s208 = sphi 0, %s208
      %s210 = sphi 0, %s208
      %s211 = sphi 0, %s210
      %s225 = sphi 0, %s211
      %s229 = sphi 0, %s229
      %s231 = sphi 0, %s229
      %s232 = sphi 0, %s231
      %s246 = sphi 0, %s232
      %s250 = sphi 0, %s250
      %s252 = sphi 0, %s250
      %s253 = sphi 0, %s252
      %s267 = sphi 0, %s253
      %s271 = sphi 0, %s271
      %s273 = sphi 0, %s271
      %s274 = sphi 0, %s273
      %s288 = sphi 0, %s274
      %s292 = sphi 0, %s292
      %s294 = sphi 0, %s292
      %s295 = sphi 0, %s294
      %s309 = sphi 0, %s295
      %s313 = sphi 0, %s313
      %s315 = sphi 0, %s313
      %s316 = sphi 0, %s315
      %s330 = sphi 0, %s316
      %s334 = sphi 0, %s334
      %s336 = sphi 0, %s334
      %s337 = sphi 0, %s336
      %s351 = sphi 0, %s337
      %s355 = sphi 0, %s355
      %s357 = sphi 0, %s355
      %s358 = sphi 0, %s357
      %s372 = sphi 0, %s358
      %s376 = sphi 0, %s376
      %s378 = sphi 0, %s376
      %s379 = sphi 0, %s378
      %s393 = sphi 0, %s379
      %s397 = sphi 0, %s397
      %s399 = sphi 0, %s397
      %s400 = sphi 0, %s399
      %s414 = sphi 0, %s400
      %s420 = sphi 0, %s422
      %s423 = sphi 0, %s420
      %s424 = sphi 0, %s423
      %s440 = sphi 0, %s424
    $region4: #{tpu_custom_call.1} parent=1 // loop_header_branch
      %30 = sbr.rel (%p28) target = $region8
    $region5: #{tpu_custom_call.1} parent=1 // loop_body
      %s32 = ssub.s32 %s27, 1
      %s33 = ssub.s32 %s27, 2
      %s34 = sadd.s32 %s27, 1
      %s35 = ssub.s32 %s27, %s34
      %p36 = scmp.eq.s32.totalorder %s35, 0
      %s38 = sadd.s32 %s37, 1
      %s39 = scalar_select %p36, %s37, %s38
      %p42 = pneg %p36
      %p43 = scmp.eq.s32.totalorder %s27, 1
      %p44 = por %p42, %p43
      %p45 = scmp.ne.s32.totalorder %s37, %s40
      %p46 = scmp.eq.s32.totalorder %s27, 0
      %p47 = por %p45, %p46
      %p48 = scmp.ne.s32.totalorder %s37, %s40
      %p49 = scmp.eq.s32.totalorder %s32, 1
      %p50 = por %p48, %p49
      %p51 = scmp.ne.s32.totalorder %s40, %s41
      %p52 = scmp.eq.s32.totalorder %s32, 0
      %p53 = por %p51, %p52
      %p54 = scmp.ne.s32.totalorder %s40, %s41
      %p55 = scmp.eq.s32.totalorder %s33, 1
      %p56 = por %p54, %p55
      %p58 = scmp.ne.s32.totalorder %s41, %s57
      %p59 = scmp.eq.s32.totalorder %s33, 0
      %p60 = por %p58, %p59
      %s62 = sadd.s32 %s61, 1
      %p65 = scmp.eq.s32.totalorder %s27, 1
      %p66 = scmp.ne.s32.totalorder %s61, %s63
      %p67 = scmp.eq.s32.totalorder %s27, 0
      %p68 = por %p66, %p67
      %p69 = scmp.ne.s32.totalorder %s61, %s63
      %p70 = scmp.eq.s32.totalorder %s32, 1
      %p71 = por %p69, %p70
      %p72 = scmp.ne.s32.totalorder %s63, %s64
      %p73 = scmp.eq.s32.totalorder %s32, 0
      %p74 = por %p72, %p73
      %p75 = scmp.ne.s32.totalorder %s63, %s64
      %p76 = scmp.eq.s32.totalorder %s33, 1
      %p77 = por %p75, %p76
      %p79 = scmp.ne.s32.totalorder %s64, %s78
      %p80 = scmp.eq.s32.totalorder %s33, 0
      %p81 = por %p79, %p80
      %s83 = sadd.s32 %s82, 1
      %p86 = scmp.eq.s32.totalorder %s27, 1
      %p87 = scmp.ne.s32.totalorder %s82, %s84
      %p88 = scmp.eq.s32.totalorder %s27, 0
      %p89 = por %p87, %p88
      %p90 = scmp.ne.s32.totalorder %s82, %s84
      %p91 = scmp.eq.s32.totalorder %s32, 1
      %p92 = por %p90, %p91
      %p93 = scmp.ne.s32.totalorder %s84, %s85
      %p94 = scmp.eq.s32.totalorder %s32, 0
      %p95 = por %p93, %p94
      %p96 = scmp.ne.s32.totalorder %s84, %s85
      %p97 = scmp.eq.s32.totalorder %s33, 1
      %p98 = por %p96, %p97
      %p100 = scmp.ne.s32.totalorder %s85, %s99
      %p101 = scmp.eq.s32.totalorder %s33, 0
      %p102 = por %p100, %p101
      %s104 = sadd.s32 %s103, 1
      %p107 = scmp.eq.s32.totalorder %s27, 1
      %p108 = scmp.ne.s32.totalorder %s103, %s105
      %p109 = scmp.eq.s32.totalorder %s27, 0
      %p110 = por %p108, %p109
      %p111 = scmp.ne.s32.totalorder %s103, %s105
      %p112 = scmp.eq.s32.totalorder %s32, 1
      %p113 = por %p111, %p112
      %p114 = scmp.ne.s32.totalorder %s105, %s106
      %p115 = scmp.eq.s32.totalorder %s32, 0
      %p116 = por %p114, %p115
      %p117 = scmp.ne.s32.totalorder %s105, %s106
      %p118 = scmp.eq.s32.totalorder %s33, 1
      %p119 = por %p117, %p118
      %p121 = scmp.ne.s32.totalorder %s106, %s120
      %p122 = scmp.eq.s32.totalorder %s33, 0
      %p123 = por %p121, %p122
      %s125 = sadd.s32 %s124, 1
      %p128 = scmp.eq.s32.totalorder %s27, 1
      %p129 = scmp.ne.s32.totalorder %s124, %s126
      %p130 = scmp.eq.s32.totalorder %s27, 0
      %p131 = por %p129, %p130
      %p132 = scmp.ne.s32.totalorder %s124, %s126
      %p133 = scmp.eq.s32.totalorder %s32, 1
      %p134 = por %p132, %p133
      %p135 = scmp.ne.s32.totalorder %s126, %s127
      %p136 = scmp.eq.s32.totalorder %s32, 0
      %p137 = por %p135, %p136
      %p138 = scmp.ne.s32.totalorder %s126, %s127
      %p139 = scmp.eq.s32.totalorder %s33, 1
      %p140 = por %p138, %p139
      %p142 = scmp.ne.s32.totalorder %s127, %s141
      %p143 = scmp.eq.s32.totalorder %s33, 0
      %p144 = por %p142, %p143
      %s146 = sadd.s32 %s145, 1
      %p149 = scmp.eq.s32.totalorder %s27, 1
      %p150 = scmp.ne.s32.totalorder %s145, %s147
      %p151 = scmp.eq.s32.totalorder %s27, 0
      %p152 = por %p150, %p151
      %p153 = scmp.ne.s32.totalorder %s145, %s147
      %p154 = scmp.eq.s32.totalorder %s32, 1
      %p155 = por %p153, %p154
      %p156 = scmp.ne.s32.totalorder %s147, %s148
      %p157 = scmp.eq.s32.totalorder %s32, 0
      %p158 = por %p156, %p157
      %p159 = scmp.ne.s32.totalorder %s147, %s148
      %p160 = scmp.eq.s32.totalorder %s33, 1
      %p161 = por %p159, %p160
      %p163 = scmp.ne.s32.totalorder %s148, %s162
      %p164 = scmp.eq.s32.totalorder %s33, 0
      %p165 = por %p163, %p164
      %s167 = sadd.s32 %s166, 1
      %p170 = scmp.eq.s32.totalorder %s27, 1
      %p171 = scmp.ne.s32.totalorder %s166, %s168
      %p172 = scmp.eq.s32.totalorder %s27, 0
      %p173 = por %p171, %p172
      %p174 = scmp.ne.s32.totalorder %s166, %s168
      %p175 = scmp.eq.s32.totalorder %s32, 1
      %p176 = por %p174, %p175
      %p177 = scmp.ne.s32.totalorder %s168, %s169
      %p178 = scmp.eq.s32.totalorder %s32, 0
      %p179 = por %p177, %p178
      %p180 = scmp.ne.s32.totalorder %s168, %s169
      %p181 = scmp.eq.s32.totalorder %s33, 1
      %p182 = por %p180, %p181
      %p184 = scmp.ne.s32.totalorder %s169, %s183
      %p185 = scmp.eq.s32.totalorder %s33, 0
      %p186 = por %p184, %p185
      %s188 = sadd.s32 %s187, 1
      %p191 = scmp.eq.s32.totalorder %s27, 1
      %p192 = scmp.ne.s32.totalorder %s187, %s189
      %p193 = scmp.eq.s32.totalorder %s27, 0
      %p194 = por %p192, %p193
      %p195 = scmp.ne.s32.totalorder %s187, %s189
      %p196 = scmp.eq.s32.totalorder %s32, 1
      %p197 = por %p195, %p196
      %p198 = scmp.ne.s32.totalorder %s189, %s190
      %p199 = scmp.eq.s32.totalorder %s32, 0
      %p200 = por %p198, %p199
      %p201 = scmp.ne.s32.totalorder %s189, %s190
      %p202 = scmp.eq.s32.totalorder %s33, 1
      %p203 = por %p201, %p202
      %p205 = scmp.ne.s32.totalorder %s190, %s204
      %p206 = scmp.eq.s32.totalorder %s33, 0
      %p207 = por %p205, %p206
      %s209 = sadd.s32 %s208, 1
      %p212 = scmp.eq.s32.totalorder %s27, 1
      %p213 = scmp.ne.s32.totalorder %s208, %s210
      %p214 = scmp.eq.s32.totalorder %s27, 0
      %p215 = por %p213, %p214
      %p216 = scmp.ne.s32.totalorder %s208, %s210
      %p217 = scmp.eq.s32.totalorder %s32, 1
      %p218 = por %p216, %p217
      %p219 = scmp.ne.s32.totalorder %s210, %s211
      %p220 = scmp.eq.s32.totalorder %s32, 0
      %p221 = por %p219, %p220
      %p222 = scmp.ne.s32.totalorder %s210, %s211
      %p223 = scmp.eq.s32.totalorder %s33, 1
      %p224 = por %p222, %p223
      %p226 = scmp.ne.s32.totalorder %s211, %s225
      %p227 = scmp.eq.s32.totalorder %s33, 0
      %p228 = por %p226, %p227
      %s230 = sadd.s32 %s229, 1
      %p233 = scmp.eq.s32.totalorder %s27, 1
      %p234 = scmp.ne.s32.totalorder %s229, %s231
      %p235 = scmp.eq.s32.totalorder %s27, 0
      %p236 = por %p234, %p235
      %p237 = scmp.ne.s32.totalorder %s229, %s231
      %p238 = scmp.eq.s32.totalorder %s32, 1
      %p239 = por %p237, %p238
      %p240 = scmp.ne.s32.totalorder %s231, %s232
      %p241 = scmp.eq.s32.totalorder %s32, 0
      %p242 = por %p240, %p241
      %p243 = scmp.ne.s32.totalorder %s231, %s232
      %p244 = scmp.eq.s32.totalorder %s33, 1
      %p245 = por %p243, %p244
      %p247 = scmp.ne.s32.totalorder %s232, %s246
      %p248 = scmp.eq.s32.totalorder %s33, 0
      %p249 = por %p247, %p248
      %s251 = sadd.s32 %s250, 1
      %p254 = scmp.eq.s32.totalorder %s27, 1
      %p255 = scmp.ne.s32.totalorder %s250, %s252
      %p256 = scmp.eq.s32.totalorder %s27, 0
      %p257 = por %p255, %p256
      %p258 = scmp.ne.s32.totalorder %s250, %s252
      %p259 = scmp.eq.s32.totalorder %s32, 1
      %p260 = por %p258, %p259
      %p261 = scmp.ne.s32.totalorder %s252, %s253
      %p262 = scmp.eq.s32.totalorder %s32, 0
      %p263 = por %p261, %p262
      %p264 = scmp.ne.s32.totalorder %s252, %s253
      %p265 = scmp.eq.s32.totalorder %s33, 1
      %p266 = por %p264, %p265
      %p268 = scmp.ne.s32.totalorder %s253, %s267
      %p269 = scmp.eq.s32.totalorder %s33, 0
      %p270 = por %p268, %p269
      %s272 = sadd.s32 %s271, 1
      %p275 = scmp.eq.s32.totalorder %s27, 1
      %p276 = scmp.ne.s32.totalorder %s271, %s273
      %p277 = scmp.eq.s32.totalorder %s27, 0
      %p278 = por %p276, %p277
      %p279 = scmp.ne.s32.totalorder %s271, %s273
      %p280 = scmp.eq.s32.totalorder %s32, 1
      %p281 = por %p279, %p280
      %p282 = scmp.ne.s32.totalorder %s273, %s274
      %p283 = scmp.eq.s32.totalorder %s32, 0
      %p284 = por %p282, %p283
      %p285 = scmp.ne.s32.totalorder %s273, %s274
      %p286 = scmp.eq.s32.totalorder %s33, 1
      %p287 = por %p285, %p286
      %p289 = scmp.ne.s32.totalorder %s274, %s288
      %p290 = scmp.eq.s32.totalorder %s33, 0
      %p291 = por %p289, %p290
      %s293 = sadd.s32 %s292, 1
      %p296 = scmp.eq.s32.totalorder %s27, 1
      %p297 = scmp.ne.s32.totalorder %s292, %s294
      %p298 = scmp.eq.s32.totalorder %s27, 0
      %p299 = por %p297, %p298
      %p300 = scmp.ne.s32.totalorder %s292, %s294
      %p301 = scmp.eq.s32.totalorder %s32, 1
      %p302 = por %p300, %p301
      %p303 = scmp.ne.s32.totalorder %s294, %s295
      %p304 = scmp.eq.s32.totalorder %s32, 0
      %p305 = por %p303, %p304
      %p306 = scmp.ne.s32.totalorder %s294, %s295
      %p307 = scmp.eq.s32.totalorder %s33, 1
      %p308 = por %p306, %p307
      %p310 = scmp.ne.s32.totalorder %s295, %s309
      %p311 = scmp.eq.s32.totalorder %s33, 0
      %p312 = por %p310, %p311
      %s314 = sadd.s32 %s313, 1
      %p317 = scmp.eq.s32.totalorder %s27, 1
      %p318 = scmp.ne.s32.totalorder %s313, %s315
      %p319 = scmp.eq.s32.totalorder %s27, 0
      %p320 = por %p318, %p319
      %p321 = scmp.ne.s32.totalorder %s313, %s315
      %p322 = scmp.eq.s32.totalorder %s32, 1
      %p323 = por %p321, %p322
      %p324 = scmp.ne.s32.totalorder %s315, %s316
      %p325 = scmp.eq.s32.totalorder %s32, 0
      %p326 = por %p324, %p325
      %p327 = scmp.ne.s32.totalorder %s315, %s316
      %p328 = scmp.eq.s32.totalorder %s33, 1
      %p329 = por %p327, %p328
      %p331 = scmp.ne.s32.totalorder %s316, %s330
      %p332 = scmp.eq.s32.totalorder %s33, 0
      %p333 = por %p331, %p332
      %s335 = sadd.s32 %s334, 1
      %p338 = scmp.eq.s32.totalorder %s27, 1
      %p339 = scmp.ne.s32.totalorder %s334, %s336
      %p340 = scmp.eq.s32.totalorder %s27, 0
      %p341 = por %p339, %p340
      %p342 = scmp.ne.s32.totalorder %s334, %s336
      %p343 = scmp.eq.s32.totalorder %s32, 1
      %p344 = por %p342, %p343
      %p345 = scmp.ne.s32.totalorder %s336, %s337
      %p346 = scmp.eq.s32.totalorder %s32, 0
      %p347 = por %p345, %p346
      %p348 = scmp.ne.s32.totalorder %s336, %s337
      %p349 = scmp.eq.s32.totalorder %s33, 1
      %p350 = por %p348, %p349
      %p352 = scmp.ne.s32.totalorder %s337, %s351
      %p353 = scmp.eq.s32.totalorder %s33, 0
      %p354 = por %p352, %p353
      %s356 = sadd.s32 %s355, 1
      %p359 = scmp.eq.s32.totalorder %s27, 1
      %p360 = scmp.ne.s32.totalorder %s355, %s357
      %p361 = scmp.eq.s32.totalorder %s27, 0
      %p362 = por %p360, %p361
      %p363 = scmp.ne.s32.totalorder %s355, %s357
      %p364 = scmp.eq.s32.totalorder %s32, 1
      %p365 = por %p363, %p364
      %p366 = scmp.ne.s32.totalorder %s357, %s358
      %p367 = scmp.eq.s32.totalorder %s32, 0
      %p368 = por %p366, %p367
      %p369 = scmp.ne.s32.totalorder %s357, %s358
      %p370 = scmp.eq.s32.totalorder %s33, 1
      %p371 = por %p369, %p370
      %p373 = scmp.ne.s32.totalorder %s358, %s372
      %p374 = scmp.eq.s32.totalorder %s33, 0
      %p375 = por %p373, %p374
      %s377 = sadd.s32 %s376, 1
      %p380 = scmp.eq.s32.totalorder %s27, 1
      %p381 = scmp.ne.s32.totalorder %s376, %s378
      %p382 = scmp.eq.s32.totalorder %s27, 0
      %p383 = por %p381, %p382
      %p384 = scmp.ne.s32.totalorder %s376, %s378
      %p385 = scmp.eq.s32.totalorder %s32, 1
      %p386 = por %p384, %p385
      %p387 = scmp.ne.s32.totalorder %s378, %s379
      %p388 = scmp.eq.s32.totalorder %s32, 0
      %p389 = por %p387, %p388
      %p390 = scmp.ne.s32.totalorder %s378, %s379
      %p391 = scmp.eq.s32.totalorder %s33, 1
      %p392 = por %p390, %p391
      %p394 = scmp.ne.s32.totalorder %s379, %s393
      %p395 = scmp.eq.s32.totalorder %s33, 0
      %p396 = por %p394, %p395
      %s398 = sadd.s32 %s397, 1
      %p401 = scmp.eq.s32.totalorder %s27, 1
      %p402 = scmp.ne.s32.totalorder %s397, %s399
      %p403 = scmp.eq.s32.totalorder %s27, 0
      %p404 = por %p402, %p403
      %p405 = scmp.ne.s32.totalorder %s397, %s399
      %p406 = scmp.eq.s32.totalorder %s32, 1
      %p407 = por %p405, %p406
      %p408 = scmp.ne.s32.totalorder %s399, %s400
      %p409 = scmp.eq.s32.totalorder %s32, 0
      %p410 = por %p408, %p409
      %p411 = scmp.ne.s32.totalorder %s399, %s400
      %p412 = scmp.eq.s32.totalorder %s33, 1
      %p413 = por %p411, %p412
      %p415 = scmp.ne.s32.totalorder %s400, %s414
      %p416 = scmp.eq.s32.totalorder %s33, 0
      %p417 = por %p415, %p416
      %s418 = ssub.s32 %s27, %s34
      %p419 = scmp.eq.s32.totalorder %s418, 0
      %s421 = sadd.s32 %s420, 1
      %s422 = scalar_select %p419, %s420, %s421
      %p425 = pneg %p419
      %p426 = scmp.eq.s32.totalorder %s27, 1
      %p427 = por %p425, %p426
      %p428 = scmp.ne.s32.totalorder %s420, %s423
      %p429 = scmp.eq.s32.totalorder %s27, 0
      %p430 = por %p428, %p429
      %p431 = scmp.ne.s32.totalorder %s420, %s423
      %p432 = scmp.eq.s32.totalorder %s32, 1
      %p433 = por %p431, %p432
      %p434 = scmp.ne.s32.totalorder %s423, %s424
      %p435 = scmp.eq.s32.totalorder %s32, 0
      %p436 = por %p434, %p435
      %p437 = scmp.ne.s32.totalorder %s423, %s424
      %p438 = scmp.eq.s32.totalorder %s33, 1
      %p439 = por %p437, %p438
      %p441 = scmp.ne.s32.totalorder %s424, %s440
      %p442 = scmp.eq.s32.totalorder %s33, 0
      %p443 = por %p441, %p442
      %p444 = scmp.le.s32.totalorder 1, %s27
      %p445 = scmp.lt.s32.totalorder %s27, 3
      %p446 = pnand %p444, %p445
      %p447 = pneg %p446
      // Predicated region
      $region9: #{tpu_custom_call.1} parent=5 // pred_check
        _
      $region10: #{tpu_custom_call.1} parent=5 // pred_check_branch
        %449 = sbr.rel (%p446) target = $region12
      $region11: #{tpu_custom_call.1} parent=5 // pred_region
        %s450 = ssub.s32 %s27, 1
        // Predicated region
        $region13: #{tpu_custom_call.1} parent=11 // pred_check
          %p451 = pneg %p74
        $region14: #{tpu_custom_call.1} parent=11 // pred_check_branch
          %453 = sbr.rel (%p451) target = $region16
        $region15: #{tpu_custom_call.1} parent=11 // pred_region
          _
        $region16: #{tpu_custom_call.1} parent=11 // pred_fallthru
          _
        // Predicated region
        $region17: #{tpu_custom_call.1} parent=11 // pred_check
          %p454 = pneg %p95
        $region18: #{tpu_custom_call.1} parent=11 // pred_check_branch
          %456 = sbr.rel (%p454) target = $region20
        $region19: #{tpu_custom_call.1} parent=11 // pred_region
          _
        $region20: #{tpu_custom_call.1} parent=11 // pred_fallthru
          _
        // Predicated region
        $region21: #{tpu_custom_call.1} parent=11 // pred_check
          %p457 = pneg %p116
        $region22: #{tpu_custom_call.1} parent=11 // pred_check_branch
          %459 = sbr.rel (%p457) target = $region24
        $region23: #{tpu_custom_call.1} parent=11 // pred_region
          _
        $region24: #{tpu_custom_call.1} parent=11 // pred_fallthru
          _
        // Predicated region
        $region25: #{tpu_custom_call.1} parent=11 // pred_check
          %p460 = pneg %p137
        $region26: #{tpu_custom_call.1} parent=11 // pred_check_branch
          %462 = sbr.rel (%p460) target = $region28
        $region27: #{tpu_custom_call.1} parent=11 // pred_region
          _
        $region28: #{tpu_custom_call.1} parent=11 // pred_fallthru
          _
        // Predicated region
        $region29: #{tpu_custom_call.1} parent=11 // pred_check
          %p463 = pneg %p158
        $region30: #{tpu_custom_call.1} parent=11 // pred_check_branch
          %465 = sbr.rel (%p463) target = $region32
        $region31: #{tpu_custom_call.1} parent=11 // pred_region
          _
        $region32: #{tpu_custom_call.1} parent=11 // pred_fallthru
          _
        // Predicated region
        $region33: #{tpu_custom_call.1} parent=11 // pred_check
          %p466 = pneg %p179
        $region34: #{tpu_custom_call.1} parent=11 // pred_check_branch
          %468 = sbr.rel (%p466) target = $region36
        $region35: #{tpu_custom_call.1} parent=11 // pred_region
          _
        $region36: #{tpu_custom_call.1} parent=11 // pred_fallthru
          _
        // Predicated region
        $region37: #{tpu_custom_call.1} parent=11 // pred_check
          %p469 = pneg %p200
        $region38: #{tpu_custom_call.1} parent=11 // pred_check_branch
          %471 = sbr.rel (%p469) target = $region40
        $region39: #{tpu_custom_call.1} parent=11 // pred_region
          _
        $region40: #{tpu_custom_call.1} parent=11 // pred_fallthru
          _
        // Predicated region
        $region41: #{tpu_custom_call.1} parent=11 // pred_check
          %p472 = pneg %p221
        $region42: #{tpu_custom_call.1} parent=11 // pred_check_branch
          %474 = sbr.rel (%p472) target = $region44
        $region43: #{tpu_custom_call.1} parent=11 // pred_region
          _
        $region44: #{tpu_custom_call.1} parent=11 // pred_fallthru
          _
        // Predicated region
        $region45: #{tpu_custom_call.1} parent=11 // pred_check
          %p475 = pneg %p242
        $region46: #{tpu_custom_call.1} parent=11 // pred_check_branch
          %477 = sbr.rel (%p475) target = $region48
        $region47: #{tpu_custom_call.1} parent=11 // pred_region
          _
        $region48: #{tpu_custom_call.1} parent=11 // pred_fallthru
          _
        // Predicated region
        $region49: #{tpu_custom_call.1} parent=11 // pred_check
          %p478 = pneg %p263
        $region50: #{tpu_custom_call.1} parent=11 // pred_check_branch
          %480 = sbr.rel (%p478) target = $region52
        $region51: #{tpu_custom_call.1} parent=11 // pred_region
          _
        $region52: #{tpu_custom_call.1} parent=11 // pred_fallthru
          _
        // Predicated region
        $region53: #{tpu_custom_call.1} parent=11 // pred_check
          %p481 = pneg %p284
        $region54: #{tpu_custom_call.1} parent=11 // pred_check_branch
          %483 = sbr.rel (%p481) target = $region56
        $region55: #{tpu_custom_call.1} parent=11 // pred_region
          _
        $region56: #{tpu_custom_call.1} parent=11 // pred_fallthru
          _
        // Predicated region
        $region57: #{tpu_custom_call.1} parent=11 // pred_check
          %p484 = pneg %p305
        $region58: #{tpu_custom_call.1} parent=11 // pred_check_branch
          %486 = sbr.rel (%p484) target = $region60
        $region59: #{tpu_custom_call.1} parent=11 // pred_region
          _
        $region60: #{tpu_custom_call.1} parent=11 // pred_fallthru
          _
        // Predicated region
        $region61: #{tpu_custom_call.1} parent=11 // pred_check
          %p487 = pneg %p326
        $region62: #{tpu_custom_call.1} parent=11 // pred_check_branch
          %489 = sbr.rel (%p487) target = $region64
        $region63: #{tpu_custom_call.1} parent=11 // pred_region
          _
        $region64: #{tpu_custom_call.1} parent=11 // pred_fallthru
          _
        // Predicated region
        $region65: #{tpu_custom_call.1} parent=11 // pred_check
          %p490 = pneg %p347
        $region66: #{tpu_custom_call.1} parent=11 // pred_check_branch
          %492 = sbr.rel (%p490) target = $region68
        $region67: #{tpu_custom_call.1} parent=11 // pred_region
          _
        $region68: #{tpu_custom_call.1} parent=11 // pred_fallthru
          _
        // Predicated region
        $region69: #{tpu_custom_call.1} parent=11 // pred_check
          %p493 = pneg %p368
        $region70: #{tpu_custom_call.1} parent=11 // pred_check_branch
          %495 = sbr.rel (%p493) target = $region72
        $region71: #{tpu_custom_call.1} parent=11 // pred_region
          _
        $region72: #{tpu_custom_call.1} parent=11 // pred_fallthru
          _
        // Predicated region
        $region73: #{tpu_custom_call.1} parent=11 // pred_check
          %p496 = pneg %p389
        $region74: #{tpu_custom_call.1} parent=11 // pred_check_branch
          %498 = sbr.rel (%p496) target = $region76
        $region75: #{tpu_custom_call.1} parent=11 // pred_region
          _
        $region76: #{tpu_custom_call.1} parent=11 // pred_fallthru
          _
        // Predicated region
        $region77: #{tpu_custom_call.1} parent=11 // pred_check
          %p499 = pneg %p410
        $region78: #{tpu_custom_call.1} parent=11 // pred_check_branch
          %501 = sbr.rel (%p499) target = $region80
        $region79: #{tpu_custom_call.1} parent=11 // pred_region
          _
        $region80: #{tpu_custom_call.1} parent=11 // pred_fallthru
          _
      $region12: #{tpu_custom_call.1} parent=5 // pred_fallthru
        _
      %p502 = scmp.lt.s32.totalorder %s27, 2
      // Predicated region
      $region81: #{tpu_custom_call.1} parent=5 // pred_check
        %p503 = pneg %p502
      $region82: #{tpu_custom_call.1} parent=5 // pred_check_branch
        %505 = sbr.rel (%p503) target = $region84
      $region83: #{tpu_custom_call.1} parent=5 // pred_region
        // Predicated region
        $region85: #{tpu_custom_call.1} parent=83 // pred_check
          %p506 = pneg %p47
        $region86: #{tpu_custom_call.1} parent=83 // pred_check_branch
          %508 = sbr.rel (%p506) target = $region88
        $region87: #{tpu_custom_call.1} parent=83 // pred_region
          %s509 = smul.u32 2, %s27
          %p510 = scmp.lt.s32.totalorder %s509, 3
          %s511 = scalar_select %p510, %s509, 3
          %s512 = smul.addr %s511, 4
          %s513 = scalar_lea.vmem %s0, %s512
          %s514 = smul.u32 2, %s27
        $region88: #{tpu_custom_call.1} parent=83 // pred_fallthru
          _
      $region84: #{tpu_custom_call.1} parent=5 // pred_fallthru
        _
      %p515 = scmp.le.s32.totalorder 1, %s27
      %p516 = scmp.lt.s32.totalorder %s27, 3
      %p517 = pnand %p515, %p516
      %p518 = pneg %p517
      // Predicated region
      $region89: #{tpu_custom_call.1} parent=5 // pred_check
        _
      $region90: #{tpu_custom_call.1} parent=5 // pred_check_branch
        %520 = sbr.rel (%p517) target = $region92
      $region91: #{tpu_custom_call.1} parent=5 // pred_region
        %s521 = ssub.s32 %s27, 1
        %s522 = smul.u32 2, %s32
        %p523 = scmp.lt.s32.totalorder %s522, 3
        %s524 = scalar_select %p523, %s522, 3
        %s525 = smul.addr %s524, 4
        %s526 = scalar_lea.vmem %s0, %s525
        %p527 = pneg %p53
        %p528 = pneg %p50
        %p529 = pneg %p74
        %p530 = pneg %p71
        %p531 = pneg %p95
        %p532 = pneg %p92
        %p533 = pneg %p116
        %p534 = pneg %p113
        %p535 = pneg %p137
        %p536 = pneg %p134
        %p537 = pneg %p158
        %p538 = pneg %p155
        %p539 = pneg %p179
        %p540 = pneg %p176
        %p541 = pneg %p200
        %p542 = pneg %p197
        %p543 = pneg %p221
        %p544 = pneg %p218
        %p545 = pneg %p242
        %p546 = pneg %p239
        %p547 = pneg %p263
        %p548 = pneg %p260
        %p549 = pneg %p284
        %p550 = pneg %p281
        %p551 = pneg %p305
        %p552 = pneg %p302
        %p553 = pneg %p326
        %p554 = pneg %p323
        %p555 = pneg %p347
        %p556 = pneg %p344
        %p557 = pneg %p368
        %p558 = pneg %p365
        %p559 = pneg %p389
        %p560 = pneg %p386
        %p561 = pneg %p410
        %p562 = pneg %p407
        %p563 = pneg %p436
        %p564 = pneg %p433
        %s565 = sand.u32 %s423, 1
        %s566 = scalar_lea.sflag [#allocation3], %s565
        %s567 = sand.u32 %s423, 1
        %s568 = smul.addr %s567, 8
        %s569 = scalar_lea.vmem [#allocation2], %s568
        %s570 = smul.u32 2, %s32
        %p571 = scmp.lt.s32.totalorder %s570, 3
        %s572 = scalar_select %p571, %s570, 3
        %s573 = smul.addr %s572, 4
        %s574 = scalar_lea.vmem %s0, %s573
        %s575 = smul.u32 2, %s32
        %s576 = smul.u32 2, %s32
        %v577 = vld [vmem:[%s1] sm:$0xff]
        %v578 = vld [vmem:[%s1 + $0x8] sm:$0xff]
        %v579 = vld [vmem:[%s1 + $0x10] sm:$0x1]
        %v580 = vld [vmem:[%s1 + $0x18] sm:$0x1]
        %v581 = vld [vmem:[%s574] sm:$0xff]
        %v583 = vcombine.high %v581, %v581
        %585 = vrot.lane.b32.xlu0 %v581, 17
        %v586 = vpop.permute.xlu0 %585
        %587 = vrot.lane.b32.xlu0 %v583, 17
        %v588 = vpop.permute.xlu0 %587
        %v589 = vlaneseq
        %v590 = vand.u32 %v589, 127
        %vm591 = vcmp.lt.s32.totalorder %v590, 17
        %v592 = vsel %vm591, %v586, %v588
        %v593 = vsel %vm591, %v588, %v586
        %vm594 = vcmp.ne.f32.partialorder %v577, 0.0
        %vm595 = vcmp.ne.f32.partialorder %v578, 0.0
        %v596 = vsel %vm594, 1, 0
        %v597 = vsel %vm595, 1, 0
        %v598 = vlaneseq
        %v599 = vshrl.u32 %v598, 7
        %v600 = vsub.s32 0, %v599
        %v601 = vrot.slane %v596, %v600
        %v602 = vlaneseq
        %v603 = vshrl.u32 %v602, 7
        %v604 = vsub.s32 0, %v603
        %v605 = vrot.slane %v597, %v604
        %vm606 = vcmp.eq.s32.totalorder %v601, 1
        %vm607 = vcmp.eq.s32.totalorder %v605, 1
        %v608 = vsel %vm606, %v593, 0.0
        %v609 = vsel %vm607, %v592, 0.0
        %v610 = vld [vmem:[%s2] sm:$0xff]
        %v611 = vld [vmem:[%s2 + $0x8] sm:$0xff]
        %v612 = vld [vmem:[%s2 + $0x10] sm:$0xff]
        %v613 = vld [vmem:[%s2 + $0x18] sm:$0xff]
        %614 = vrot.lane.b32.xlu0 %v581, 16
        %v615 = vpop.permute.xlu0 %614
        %616 = vrot.lane.b32.xlu0 %v583, 16
        %v617 = vpop.permute.xlu0 %616
        %vm618 = vcmp.lt.s32.totalorder %v590, 16
        %v619 = vsel %vm618, %v615, %v617
        %v620 = vsel %vm618, %v617, %v615
        %v621 = vlaneseq
        %v622 = vshrl.u32 %v621, 7
        %v623 = vsub.s32 1, %v622
        %v624 = vrot.slane %v596, %v623
        %v625 = vlaneseq
        %v626 = vshrl.u32 %v625, 7
        %v627 = vsub.s32 1, %v626
        %v628 = vrot.slane %v597, %v627
        %vm629 = vcmp.eq.s32.totalorder %v624, 1
        %vm630 = vcmp.eq.s32.totalorder %v628, 1
        %v631 = vsel %vm629, %v620, 0.0
        %v632 = vsel %vm630, %v619, 0.0
        %s633 = scalar_lea.vmem %s2, 32
        %v634 = vld [vmem:[%s633] sm:$0xff]
        %v635 = vld [vmem:[%s633 + $0x8] sm:$0xff]
        %v636 = vld [vmem:[%s633 + $0x10] sm:$0xff]
        %v637 = vld [vmem:[%s633 + $0x18] sm:$0xff]
        %vm638 = vcmask 31744
        %v640 = vsel %vm638, %v634, 0
        %v643 = vsel %vm638, %v635, 0
        %v646 = vsel %vm638, %v636, 0
        %v649 = vsel %vm638, %v637, 0
        %vm651 = vcmask 1043456
        %v653 = vsel %vm651, %v631, 0
        %v656 = vsel %vm651, %v632, 0
        %658 = vmatprep.subr.mxu0 0.0
        %659 = vmatpush1.msra.mxu0 0.0
        %660 = vmatprep.subr.mxu0 0.0
        %661 = vmatpush1.msra.mxu0 0.0
        %662 = vmatprep.subr.mxu0 0.0
        %663 = vmatpush1.msra.mxu0 0.0
        %664 = vmatprep.subr.mxu0 0.0
        %665 = vmatpush1.msra.mxu0 0.0
        %666 = vmatprep.subr.mxu0 0.0
        %667 = vmatpush1.msra.mxu0 0.0
        %668 = vmatprep.subr.mxu0 0.0
        %669 = vmatpush1.msra.mxu0 0.0
        %670 = vmatprep.subr.mxu0 0.0
        %671 = vmatpush1.msra.mxu0 0.0
        %672 = vmatprep.subr.mxu0 0.0
        %673 = vmatpush1.msra.mxu0 0.0
        %674 = vmatprep.subr.mxu0 0.0
        %675 = vmatpush1.msra.mxu0 0.0
        %676 = vmatprep.subr.mxu0 0.0
        %677 = vmatpush1.msra.mxu0 0.0
        %678 = vmatprep.subr.mxu0 0.0
        %679 = vmatpush1.msra.mxu0 0.0
        %680 = vmatprep.subr.mxu0 0.0
        %681 = vmatpush1.msra.mxu0 0.0
        %682 = vmatprep.subr.mxu0 0.0
        %683 = vmatpush1.msra.mxu0 0.0
        %684 = vmatprep.subr.mxu0 0.0
        %685 = vmatpush1.msra.mxu0 0.0
        %686 = vmatprep.subr.mxu0 0.0
        %687 = vmatpush1.msra.mxu0 0.0
        %688 = vmatprep.subr.mxu0 %v656
        %689 = vmatpush1.msra.mxu0 %v653
        %690 = vmatprep.subr.mxu0 0.0
        %691 = vmatpush2.msra.mxu0 0.0
        %692 = vmatprep.subr.mxu0 0.0
        %693 = vmatpush2.msra.mxu0 0.0
        %694 = vmatprep.subr.mxu0 0.0
        %695 = vmatpush2.msra.mxu0 0.0
        %696 = vmatprep.subr.mxu0 0.0
        %697 = vmatpush2.msra.mxu0 0.0
        %698 = vmatprep.subr.mxu0 0.0
        %699 = vmatpush2.msra.mxu0 0.0
        %700 = vmatprep.subr.mxu0 0.0
        %701 = vmatpush2.msra.mxu0 0.0
        %702 = vmatprep.subr.mxu0 0.0
        %703 = vmatpush2.msra.mxu0 0.0
        %704 = vmatprep.subr.mxu0 0.0
        %705 = vmatpush2.msra.mxu0 0.0
        %706 = vmatprep.subr.mxu0 0.0
        %707 = vmatpush2.msra.mxu0 0.0
        %708 = vmatprep.subr.mxu0 0.0
        %709 = vmatpush2.msra.mxu0 0.0
        %710 = vmatprep.subr.mxu0 0.0
        %711 = vmatpush2.msra.mxu0 0.0
        %712 = vmatprep.subr.mxu0 0.0
        %713 = vmatpush2.msra.mxu0 0.0
        %714 = vmatprep.subr.mxu0 0.0
        %715 = vmatpush2.msra.mxu0 0.0
        %716 = vmatprep.subr.mxu0 0.0
        %717 = vmatpush2.msra.mxu0 0.0
        %718 = vmatprep.subr.mxu0 0.0
        %719 = vmatpush2.msra.mxu0 0.0
        %720 = vmatprep.subr.mxu0 0.0
        %721 = vmatpush2.msra.mxu0 0.0
        %722 = vmatprep.mubr.f32.mxu0 0.0
        %723 = vmatmul.mubr.f32.gmra.mxu0 %v640
        %v724 = vpop.f32.mrf.mxu0
        %v725 = vadd.f32 0.0, %v724
        %v726 = vpop.f32.mrf.mxu0
        %v727 = vadd.f32 0.0, %v726
        %728 = vmatprep.mubr.f32.mxu0 0.0
        %729 = vmatmul.mubr.f32.gmra.mxu0 %v643
        %v730 = vpop.f32.mrf.mxu0
        %v731 = vadd.f32 0.0, %v730
        %v732 = vpop.f32.mrf.mxu0
        %v733 = vadd.f32 0.0, %v732
        %734 = vmatprep.mubr.f32.mxu0 0.0
        %735 = vmatmul.mubr.f32.gmra.mxu0 %v646
        %v736 = vpop.f32.mrf.mxu0
        %v737 = vadd.f32 0.0, %v736
        %v738 = vpop.f32.mrf.mxu0
        %v739 = vadd.f32 0.0, %v738
        %740 = vmatprep.mubr.f32.mxu0 0.0
        %741 = vmatmul.mubr.f32.gmra.mxu0 %v649
        %v742 = vpop.f32.mrf.mxu0
        %v743 = vadd.f32 0.0, %v742
        %v744 = vpop.f32.mrf.mxu0
        %v745 = vadd.f32 0.0, %v744
        %746 = vdwg.mxu0
        %v748 = vsel %vm638, %v610, 0
        %v751 = vsel %vm638, %v611, 0
        %v754 = vsel %vm638, %v612, 0
        %v757 = vsel %vm638, %v613, 0
        %v760 = vsel %vm651, %v608, 0
        %v763 = vsel %vm651, %v609, 0
        %765 = vmatprep.subr.mxu0 0.0
        %766 = vmatpush1.msra.mxu0 0.0
        %767 = vmatprep.subr.mxu0 0.0
        %768 = vmatpush1.msra.mxu0 0.0
        %769 = vmatprep.subr.mxu0 0.0
        %770 = vmatpush1.msra.mxu0 0.0
        %771 = vmatprep.subr.mxu0 0.0
        %772 = vmatpush1.msra.mxu0 0.0
        %773 = vmatprep.subr.mxu0 0.0
        %774 = vmatpush1.msra.mxu0 0.0
        %775 = vmatprep.subr.mxu0 0.0
        %776 = vmatpush1.msra.mxu0 0.0
        %777 = vmatprep.subr.mxu0 0.0
        %778 = vmatpush1.msra.mxu0 0.0
        %779 = vmatprep.subr.mxu0 0.0
        %780 = vmatpush1.msra.mxu0 0.0
        %781 = vmatprep.subr.mxu0 0.0
        %782 = vmatpush1.msra.mxu0 0.0
        %783 = vmatprep.subr.mxu0 0.0
        %784 = vmatpush1.msra.mxu0 0.0
        %785 = vmatprep.subr.mxu0 0.0
        %786 = vmatpush1.msra.mxu0 0.0
        %787 = vmatprep.subr.mxu0 0.0
        %788 = vmatpush1.msra.mxu0 0.0
        %789 = vmatprep.subr.mxu0 0.0
        %790 = vmatpush1.msra.mxu0 0.0
        %791 = vmatprep.subr.mxu0 0.0
        %792 = vmatpush1.msra.mxu0 0.0
        %793 = vmatprep.subr.mxu0 0.0
        %794 = vmatpush1.msra.mxu0 0.0
        %795 = vmatprep.subr.mxu0 %v763
        %796 = vmatpush1.msra.mxu0 %v760
        %797 = vmatprep.subr.mxu0 0.0
        %798 = vmatpush2.msra.mxu0 0.0
        %799 = vmatprep.subr.mxu0 0.0
        %800 = vmatpush2.msra.mxu0 0.0
        %801 = vmatprep.subr.mxu0 0.0
        %802 = vmatpush2.msra.mxu0 0.0
        %803 = vmatprep.subr.mxu0 0.0
        %804 = vmatpush2.msra.mxu0 0.0
        %805 = vmatprep.subr.mxu0 0.0
        %806 = vmatpush2.msra.mxu0 0.0
        %807 = vmatprep.subr.mxu0 0.0
        %808 = vmatpush2.msra.mxu0 0.0
        %809 = vmatprep.subr.mxu0 0.0
        %810 = vmatpush2.msra.mxu0 0.0
        %811 = vmatprep.subr.mxu0 0.0
        %812 = vmatpush2.msra.mxu0 0.0
        %813 = vmatprep.subr.mxu0 0.0
        %814 = vmatpush2.msra.mxu0 0.0
        %815 = vmatprep.subr.mxu0 0.0
        %816 = vmatpush2.msra.mxu0 0.0
        %817 = vmatprep.subr.mxu0 0.0
        %818 = vmatpush2.msra.mxu0 0.0
        %819 = vmatprep.subr.mxu0 0.0
        %820 = vmatpush2.msra.mxu0 0.0
        %821 = vmatprep.subr.mxu0 0.0
        %822 = vmatpush2.msra.mxu0 0.0
        %823 = vmatprep.subr.mxu0 0.0
        %824 = vmatpush2.msra.mxu0 0.0
        %825 = vmatprep.subr.mxu0 0.0
        %826 = vmatpush2.msra.mxu0 0.0
        %827 = vmatprep.subr.mxu0 0.0
        %828 = vmatpush2.msra.mxu0 0.0
        %829 = vmatprep.mubr.f32.mxu0 0.0
        %830 = vmatmul.mubr.f32.gmra.mxu0 %v748
        %v831 = vpop.f32.mrf.mxu0
        %v832 = vadd.f32 %v725, %v831
        %v833 = vpop.f32.mrf.mxu0
        %v834 = vadd.f32 %v727, %v833
        %835 = vmatprep.mubr.f32.mxu0 0.0
        %836 = vmatmul.mubr.f32.gmra.mxu0 %v751
        %v837 = vpop.f32.mrf.mxu0
        %v838 = vadd.f32 %v731, %v837
        %v839 = vpop.f32.mrf.mxu0
        %v840 = vadd.f32 %v733, %v839
        %841 = vmatprep.mubr.f32.mxu0 0.0
        %842 = vmatmul.mubr.f32.gmra.mxu0 %v754
        %v843 = vpop.f32.mrf.mxu0
        %v844 = vadd.f32 %v737, %v843
        %v845 = vpop.f32.mrf.mxu0
        %v846 = vadd.f32 %v739, %v845
        %847 = vmatprep.mubr.f32.mxu0 0.0
        %848 = vmatmul.mubr.f32.gmra.mxu0 %v757
        %v849 = vpop.f32.mrf.mxu0
        %v850 = vadd.f32 %v743, %v849
        %v851 = vpop.f32.mrf.mxu0
        %v852 = vadd.f32 %v745, %v851
        %853 = vdwg.mxu0
        %854 = vrot.lane.b32.xlu0 %v581, 15
        %v855 = vpop.permute.xlu0 %854
        %856 = vrot.lane.b32.xlu0 %v583, 15
        %v857 = vpop.permute.xlu0 %856
        %vm858 = vcmp.lt.s32.totalorder %v590, 15
        %v859 = vsel %vm858, %v855, %v857
        %v860 = vsel %vm858, %v857, %v855
        %v861 = vlaneseq
        %v862 = vshrl.u32 %v861, 7
        %v863 = vsub.s32 2, %v862
        %v864 = vrot.slane %v596, %v863
        %v865 = vlaneseq
        %v866 = vshrl.u32 %v865, 7
        %v867 = vsub.s32 2, %v866
        %v868 = vrot.slane %v597, %v867
        %vm869 = vcmp.eq.s32.totalorder %v864, 1
        %vm870 = vcmp.eq.s32.totalorder %v868, 1
        %v871 = vsel %vm869, %v860, 0.0
        %v872 = vsel %vm870, %v859, 0.0
        %s873 = scalar_lea.vmem %s2, 64
        %v874 = vld [vmem:[%s873] sm:$0xff]
        %v875 = vld [vmem:[%s873 + $0x8] sm:$0xff]
        %v876 = vld [vmem:[%s873 + $0x10] sm:$0xff]
        %v877 = vld [vmem:[%s873 + $0x18] sm:$0xff]
        %v879 = vsel %vm638, %v874, 0
        %v882 = vsel %vm638, %v875, 0
        %v885 = vsel %vm638, %v876, 0
        %v888 = vsel %vm638, %v877, 0
        %v891 = vsel %vm651, %v871, 0
        %v894 = vsel %vm651, %v872, 0
        %896 = vmatprep.subr.mxu0 0.0
        %897 = vmatpush1.msra.mxu0 0.0
        %898 = vmatprep.subr.mxu0 0.0
        %899 = vmatpush1.msra.mxu0 0.0
        %900 = vmatprep.subr.mxu0 0.0
        %901 = vmatpush1.msra.mxu0 0.0
        %902 = vmatprep.subr.mxu0 0.0
        %903 = vmatpush1.msra.mxu0 0.0
        %904 = vmatprep.subr.mxu0 0.0
        %905 = vmatpush1.msra.mxu0 0.0
        %906 = vmatprep.subr.mxu0 0.0
        %907 = vmatpush1.msra.mxu0 0.0
        %908 = vmatprep.subr.mxu0 0.0
        %909 = vmatpush1.msra.mxu0 0.0
        %910 = vmatprep.subr.mxu0 0.0
        %911 = vmatpush1.msra.mxu0 0.0
        %912 = vmatprep.subr.mxu0 0.0
        %913 = vmatpush1.msra.mxu0 0.0
        %914 = vmatprep.subr.mxu0 0.0
        %915 = vmatpush1.msra.mxu0 0.0
        %916 = vmatprep.subr.mxu0 0.0
        %917 = vmatpush1.msra.mxu0 0.0
        %918 = vmatprep.subr.mxu0 0.0
        %919 = vmatpush1.msra.mxu0 0.0
        %920 = vmatprep.subr.mxu0 0.0
        %921 = vmatpush1.msra.mxu0 0.0
        %922 = vmatprep.subr.mxu0 0.0
        %923 = vmatpush1.msra.mxu0 0.0
        %924 = vmatprep.subr.mxu0 0.0
        %925 = vmatpush1.msra.mxu0 0.0
        %926 = vmatprep.subr.mxu0 %v894
        %927 = vmatpush1.msra.mxu0 %v891
        %928 = vmatprep.subr.mxu0 0.0
        %929 = vmatpush2.msra.mxu0 0.0
        %930 = vmatprep.subr.mxu0 0.0
        %931 = vmatpush2.msra.mxu0 0.0
        %932 = vmatprep.subr.mxu0 0.0
        %933 = vmatpush2.msra.mxu0 0.0
        %934 = vmatprep.subr.mxu0 0.0
        %935 = vmatpush2.msra.mxu0 0.0
        %936 = vmatprep.subr.mxu0 0.0
        %937 = vmatpush2.msra.mxu0 0.0
        %938 = vmatprep.subr.mxu0 0.0
        %939 = vmatpush2.msra.mxu0 0.0
        %940 = vmatprep.subr.mxu0 0.0
        %941 = vmatpush2.msra.mxu0 0.0
        %942 = vmatprep.subr.mxu0 0.0
        %943 = vmatpush2.msra.mxu0 0.0
        %944 = vmatprep.subr.mxu0 0.0
        %945 = vmatpush2.msra.mxu0 0.0
        %946 = vmatprep.subr.mxu0 0.0
        %947 = vmatpush2.msra.mxu0 0.0
        %948 = vmatprep.subr.mxu0 0.0
        %949 = vmatpush2.msra.mxu0 0.0
        %950 = vmatprep.subr.mxu0 0.0
        %951 = vmatpush2.msra.mxu0 0.0
        %952 = vmatprep.subr.mxu0 0.0
        %953 = vmatpush2.msra.mxu0 0.0
        %954 = vmatprep.subr.mxu0 0.0
        %955 = vmatpush2.msra.mxu0 0.0
        %956 = vmatprep.subr.mxu0 0.0
        %957 = vmatpush2.msra.mxu0 0.0
        %958 = vmatprep.subr.mxu0 0.0
        %959 = vmatpush2.msra.mxu0 0.0
        %960 = vmatprep.mubr.f32.mxu0 0.0
        %961 = vmatmul.mubr.f32.gmra.mxu0 %v879
        %v962 = vpop.f32.mrf.mxu0
        %v963 = vadd.f32 0.0, %v962
        %v964 = vpop.f32.mrf.mxu0
        %v965 = vadd.f32 0.0, %v964
        %966 = vmatprep.mubr.f32.mxu0 0.0
        %967 = vmatmul.mubr.f32.gmra.mxu0 %v882
        %v968 = vpop.f32.mrf.mxu0
        %v969 = vadd.f32 0.0, %v968
        %v970 = vpop.f32.mrf.mxu0
        %v971 = vadd.f32 0.0, %v970
        %972 = vmatprep.mubr.f32.mxu0 0.0
        %973 = vmatmul.mubr.f32.gmra.mxu0 %v885
        %v974 = vpop.f32.mrf.mxu0
        %v975 = vadd.f32 0.0, %v974
        %v976 = vpop.f32.mrf.mxu0
        %v977 = vadd.f32 0.0, %v976
        %978 = vmatprep.mubr.f32.mxu0 0.0
        %979 = vmatmul.mubr.f32.gmra.mxu0 %v888
        %v980 = vpop.f32.mrf.mxu0
        %v981 = vadd.f32 0.0, %v980
        %v982 = vpop.f32.mrf.mxu0
        %v983 = vadd.f32 0.0, %v982
        %984 = vdwg.mxu0
        %v985 = vadd.f32 %v832, %v963
        %v986 = vadd.f32 %v834, %v965
        %v987 = vadd.f32 %v838, %v969
        %v988 = vadd.f32 %v840, %v971
        %v989 = vadd.f32 %v844, %v975
        %v990 = vadd.f32 %v846, %v977
        %v991 = vadd.f32 %v850, %v981
        %v992 = vadd.f32 %v852, %v983
        %993 = vrot.lane.b32.xlu0 %v581, 1
        %v994 = vpop.permute.xlu0 %993
        %995 = vrot.lane.b32.xlu0 %v583, 1
        %v996 = vpop.permute.xlu0 %995
        %vm997 = vcmp.lt.s32.totalorder %v590, 1
        %v998 = vsel %vm997, %v994, %v996
        %v999 = vsel %vm997, %v996, %v994
        %v1000 = vlaneseq
        %v1001 = vshrl.u32 %v1000, 7
        %v1002 = vsub.s32 3, %v1001
        %v1003 = vrot.slane %v596, %v1002
        %v1004 = vlaneseq
        %v1005 = vshrl.u32 %v1004, 7
        %v1006 = vsub.s32 3, %v1005
        %v1007 = vrot.slane %v597, %v1006
        %vm1008 = vcmp.eq.s32.totalorder %v1003, 1
        %vm1009 = vcmp.eq.s32.totalorder %v1007, 1
        %v1010 = vsel %vm1008, %v999, 0.0
        %v1011 = vsel %vm1009, %v998, 0.0
        %s1012 = scalar_lea.vmem %s2, 96
        %v1013 = vld [vmem:[%s1012] sm:$0xff]
        %v1014 = vld [vmem:[%s1012 + $0x8] sm:$0xff]
        %v1015 = vld [vmem:[%s1012 + $0x10] sm:$0xff]
        %v1016 = vld [vmem:[%s1012 + $0x18] sm:$0xff]
        %v1018 = vsel %vm638, %v1013, 0
        %v1021 = vsel %vm638, %v1014, 0
        %v1024 = vsel %vm638, %v1015, 0
        %v1027 = vsel %vm638, %v1016, 0
        %v1030 = vsel %vm651, %v1010, 0
        %v1033 = vsel %vm651, %v1011, 0
        %1035 = vmatprep.subr.mxu0 0.0
        %1036 = vmatpush1.msra.mxu0 0.0
        %1037 = vmatprep.subr.mxu0 0.0
        %1038 = vmatpush1.msra.mxu0 0.0
        %1039 = vmatprep.subr.mxu0 0.0
        %1040 = vmatpush1.msra.mxu0 0.0
        %1041 = vmatprep.subr.mxu0 0.0
        %1042 = vmatpush1.msra.mxu0 0.0
        %1043 = vmatprep.subr.mxu0 0.0
        %1044 = vmatpush1.msra.mxu0 0.0
        %1045 = vmatprep.subr.mxu0 0.0
        %1046 = vmatpush1.msra.mxu0 0.0
        %1047 = vmatprep.subr.mxu0 0.0
        %1048 = vmatpush1.msra.mxu0 0.0
        %1049 = vmatprep.subr.mxu0 0.0
        %1050 = vmatpush1.msra.mxu0 0.0
        %1051 = vmatprep.subr.mxu0 0.0
        %1052 = vmatpush1.msra.mxu0 0.0
        %1053 = vmatprep.subr.mxu0 0.0
        %1054 = vmatpush1.msra.mxu0 0.0
        %1055 = vmatprep.subr.mxu0 0.0
        %1056 = vmatpush1.msra.mxu0 0.0
        %1057 = vmatprep.subr.mxu0 0.0
        %1058 = vmatpush1.msra.mxu0 0.0
        %1059 = vmatprep.subr.mxu0 0.0
        %1060 = vmatpush1.msra.mxu0 0.0
        %1061 = vmatprep.subr.mxu0 0.0
        %1062 = vmatpush1.msra.mxu0 0.0
        %1063 = vmatprep.subr.mxu0 0.0
        %1064 = vmatpush1.msra.mxu0 0.0
        %1065 = vmatprep.subr.mxu0 %v1033
        %1066 = vmatpush1.msra.mxu0 %v1030
        %1067 = vmatprep.subr.mxu0 0.0
        %1068 = vmatpush2.msra.mxu0 0.0
        %1069 = vmatprep.subr.mxu0 0.0
        %1070 = vmatpush2.msra.mxu0 0.0
        %1071 = vmatprep.subr.mxu0 0.0
        %1072 = vmatpush2.msra.mxu0 0.0
        %1073 = vmatprep.subr.mxu0 0.0
        %1074 = vmatpush2.msra.mxu0 0.0
        %1075 = vmatprep.subr.mxu0 0.0
        %1076 = vmatpush2.msra.mxu0 0.0
        %1077 = vmatprep.subr.mxu0 0.0
        %1078 = vmatpush2.msra.mxu0 0.0
        %1079 = vmatprep.subr.mxu0 0.0
        %1080 = vmatpush2.msra.mxu0 0.0
        %1081 = vmatprep.subr.mxu0 0.0
        %1082 = vmatpush2.msra.mxu0 0.0
        %1083 = vmatprep.subr.mxu0 0.0
        %1084 = vmatpush2.msra.mxu0 0.0
        %1085 = vmatprep.subr.mxu0 0.0
        %1086 = vmatpush2.msra.mxu0 0.0
        %1087 = vmatprep.subr.mxu0 0.0
        %1088 = vmatpush2.msra.mxu0 0.0
        %1089 = vmatprep.subr.mxu0 0.0
        %1090 = vmatpush2.msra.mxu0 0.0
        %1091 = vmatprep.subr.mxu0 0.0
        %1092 = vmatpush2.msra.mxu0 0.0
        %1093 = vmatprep.subr.mxu0 0.0
        %1094 = vmatpush2.msra.mxu0 0.0
        %1095 = vmatprep.subr.mxu0 0.0
        %1096 = vmatpush2.msra.mxu0 0.0
        %1097 = vmatprep.subr.mxu0 0.0
        %1098 = vmatpush2.msra.mxu0 0.0
        %1099 = vmatprep.mubr.f32.mxu0 0.0
        %1100 = vmatmul.mubr.f32.gmra.mxu0 %v1018
        %v1101 = vpop.f32.mrf.mxu0
        %v1102 = vadd.f32 0.0, %v1101
        %v1103 = vpop.f32.mrf.mxu0
        %v1104 = vadd.f32 0.0, %v1103
        %1105 = vmatprep.mubr.f32.mxu0 0.0
        %1106 = vmatmul.mubr.f32.gmra.mxu0 %v1021
        %v1107 = vpop.f32.mrf.mxu0
        %v1108 = vadd.f32 0.0, %v1107
        %v1109 = vpop.f32.mrf.mxu0
        %v1110 = vadd.f32 0.0, %v1109
        %1111 = vmatprep.mubr.f32.mxu0 0.0
        %1112 = vmatmul.mubr.f32.gmra.mxu0 %v1024
        %v1113 = vpop.f32.mrf.mxu0
        %v1114 = vadd.f32 0.0, %v1113
        %v1115 = vpop.f32.mrf.mxu0
        %v1116 = vadd.f32 0.0, %v1115
        %1117 = vmatprep.mubr.f32.mxu0 0.0
        %1118 = vmatmul.mubr.f32.gmra.mxu0 %v1027
        %v1119 = vpop.f32.mrf.mxu0
        %v1120 = vadd.f32 0.0, %v1119
        %v1121 = vpop.f32.mrf.mxu0
        %v1122 = vadd.f32 0.0, %v1121
        %1123 = vdwg.mxu0
        %v1124 = vadd.f32 %v985, %v1102
        %v1125 = vadd.f32 %v986, %v1104
        %v1126 = vadd.f32 %v987, %v1108
        %v1127 = vadd.f32 %v988, %v1110
        %v1128 = vadd.f32 %v989, %v1114
        %v1129 = vadd.f32 %v990, %v1116
        %v1130 = vadd.f32 %v991, %v1120
        %v1131 = vadd.f32 %v992, %v1122
        %s1132 = scalar_lea.vmem %s2, 128
        %v1133 = vld [vmem:[%s1132] sm:$0xff]
        %v1134 = vld [vmem:[%s1132 + $0x8] sm:$0xff]
        %v1135 = vld [vmem:[%s1132 + $0x10] sm:$0xff]
        %v1136 = vld [vmem:[%s1132 + $0x18] sm:$0xff]
        %v1138 = vsel %vm638, %v1133, 0
        %v1141 = vsel %vm638, %v1134, 0
        %v1144 = vsel %vm638, %v1135, 0
        %v1147 = vsel %vm638, %v1136, 0
        %v1149 = vsel %vm651, %v581, 0
        %v1151 = vsel %vm651, %v583, 0
        %1153 = vmatprep.subr.mxu0 0.0
        %1154 = vmatpush1.msra.mxu0 0.0
        %1155 = vmatprep.subr.mxu0 0.0
        %1156 = vmatpush1.msra.mxu0 0.0
        %1157 = vmatprep.subr.mxu0 0.0
        %1158 = vmatpush1.msra.mxu0 0.0
        %1159 = vmatprep.subr.mxu0 0.0
        %1160 = vmatpush1.msra.mxu0 0.0
        %1161 = vmatprep.subr.mxu0 0.0
        %1162 = vmatpush1.msra.mxu0 0.0
        %1163 = vmatprep.subr.mxu0 0.0
        %1164 = vmatpush1.msra.mxu0 0.0
        %1165 = vmatprep.subr.mxu0 0.0
        %1166 = vmatpush1.msra.mxu0 0.0
        %1167 = vmatprep.subr.mxu0 0.0
        %1168 = vmatpush1.msra.mxu0 0.0
        %1169 = vmatprep.subr.mxu0 0.0
        %1170 = vmatpush1.msra.mxu0 0.0
        %1171 = vmatprep.subr.mxu0 0.0
        %1172 = vmatpush1.msra.mxu0 0.0
        %1173 = vmatprep.subr.mxu0 0.0
        %1174 = vmatpush1.msra.mxu0 0.0
        %1175 = vmatprep.subr.mxu0 0.0
        %1176 = vmatpush1.msra.mxu0 0.0
        %1177 = vmatprep.subr.mxu0 0.0
        %1178 = vmatpush1.msra.mxu0 0.0
        %1179 = vmatprep.subr.mxu0 0.0
        %1180 = vmatpush1.msra.mxu0 0.0
        %1181 = vmatprep.subr.mxu0 0.0
        %1182 = vmatpush1.msra.mxu0 0.0
        %1183 = vmatprep.subr.mxu0 %v1151
        %1184 = vmatpush1.msra.mxu0 %v1149
        %1185 = vmatprep.subr.mxu0 0.0
        %1186 = vmatpush2.msra.mxu0 0.0
        %1187 = vmatprep.subr.mxu0 0.0
        %1188 = vmatpush2.msra.mxu0 0.0
        %1189 = vmatprep.subr.mxu0 0.0
        %1190 = vmatpush2.msra.mxu0 0.0
        %1191 = vmatprep.subr.mxu0 0.0
        %1192 = vmatpush2.msra.mxu0 0.0
        %1193 = vmatprep.subr.mxu0 0.0
        %1194 = vmatpush2.msra.mxu0 0.0
        %1195 = vmatprep.subr.mxu0 0.0
        %1196 = vmatpush2.msra.mxu0 0.0
        %1197 = vmatprep.subr.mxu0 0.0
        %1198 = vmatpush2.msra.mxu0 0.0
        %1199 = vmatprep.subr.mxu0 0.0
        %1200 = vmatpush2.msra.mxu0 0.0
        %1201 = vmatprep.subr.mxu0 0.0
        %1202 = vmatpush2.msra.mxu0 0.0
        %1203 = vmatprep.subr.mxu0 0.0
        %1204 = vmatpush2.msra.mxu0 0.0
        %1205 = vmatprep.subr.mxu0 0.0
        %1206 = vmatpush2.msra.mxu0 0.0
        %1207 = vmatprep.subr.mxu0 0.0
        %1208 = vmatpush2.msra.mxu0 0.0
        %1209 = vmatprep.subr.mxu0 0.0
        %1210 = vmatpush2.msra.mxu0 0.0
        %1211 = vmatprep.subr.mxu0 0.0
        %1212 = vmatpush2.msra.mxu0 0.0
        %1213 = vmatprep.subr.mxu0 0.0
        %1214 = vmatpush2.msra.mxu0 0.0
        %1215 = vmatprep.subr.mxu0 0.0
        %1216 = vmatpush2.msra.mxu0 0.0
        %1217 = vmatprep.mubr.f32.mxu0 0.0
        %1218 = vmatmul.mubr.f32.gmra.mxu0 %v1138
        %v1219 = vpop.f32.mrf.mxu0
        %v1220 = vadd.f32 0.0, %v1219
        %v1221 = vpop.f32.mrf.mxu0
        %v1222 = vadd.f32 0.0, %v1221
        %1223 = vmatprep.mubr.f32.mxu0 0.0
        %1224 = vmatmul.mubr.f32.gmra.mxu0 %v1141
        %v1225 = vpop.f32.mrf.mxu0
        %v1226 = vadd.f32 0.0, %v1225
        %v1227 = vpop.f32.mrf.mxu0
        %v1228 = vadd.f32 0.0, %v1227
        %1229 = vmatprep.mubr.f32.mxu0 0.0
        %1230 = vmatmul.mubr.f32.gmra.mxu0 %v1144
        %v1231 = vpop.f32.mrf.mxu0
        %v1232 = vadd.f32 0.0, %v1231
        %v1233 = vpop.f32.mrf.mxu0
        %v1234 = vadd.f32 0.0, %v1233
        %1235 = vmatprep.mubr.f32.mxu0 0.0
        %1236 = vmatmul.mubr.f32.gmra.mxu0 %v1147
        %v1237 = vpop.f32.mrf.mxu0
        %v1238 = vadd.f32 0.0, %v1237
        %v1239 = vpop.f32.mrf.mxu0
        %v1240 = vadd.f32 0.0, %v1239
        %1241 = vdwg.mxu0
        %v1242 = vadd.f32 %v1124, %v1220
        %v1243 = vadd.f32 %v1125, %v1222
        %v1244 = vadd.f32 %v1126, %v1226
        %v1245 = vadd.f32 %v1127, %v1228
        %v1246 = vadd.f32 %v1128, %v1232
        %v1247 = vadd.f32 %v1129, %v1234
        %v1248 = vadd.f32 %v1130, %v1238
        %v1249 = vadd.f32 %v1131, %v1240
        %1250 = vrot.lane.b32.xlu0 %v581, 127
        %v1251 = vpop.permute.xlu0 %1250
        %1252 = vrot.lane.b32.xlu0 %v583, 127
        %v1253 = vpop.permute.xlu0 %1252
        %vm1254 = vcmp.lt.s32.totalorder %v590, 127
        %v1255 = vsel %vm1254, %v1251, %v1253
        %v1256 = vsel %vm1254, %v1253, %v1251
        %v1257 = vlaneseq
        %v1258 = vshrl.u32 %v1257, 7
        %v1259 = vsub.s32 5, %v1258
        %v1260 = vrot.slane %v596, %v1259
        %v1261 = vlaneseq
        %v1262 = vshrl.u32 %v1261, 7
        %v1263 = vsub.s32 5, %v1262
        %v1264 = vrot.slane %v597, %v1263
        %vm1265 = vcmp.eq.s32.totalorder %v1260, 1
        %vm1266 = vcmp.eq.s32.totalorder %v1264, 1
        %v1267 = vsel %vm1265, %v1255, 0.0
        %v1268 = vsel %vm1266, %v1256, 0.0
        %s1269 = scalar_lea.vmem %s2, 160
        %v1270 = vld [vmem:[%s1269] sm:$0xff]
        %v1271 = vld [vmem:[%s1269 + $0x8] sm:$0xff]
        %v1272 = vld [vmem:[%s1269 + $0x10] sm:$0xff]
        %v1273 = vld [vmem:[%s1269 + $0x18] sm:$0xff]
        %v1275 = vsel %vm638, %v1270, 0
        %v1278 = vsel %vm638, %v1271, 0
        %v1281 = vsel %vm638, %v1272, 0
        %v1284 = vsel %vm638, %v1273, 0
        %v1287 = vsel %vm651, %v1267, 0
        %v1290 = vsel %vm651, %v1268, 0
        %1292 = vmatprep.subr.mxu0 0.0
        %1293 = vmatpush1.msra.mxu0 0.0
        %1294 = vmatprep.subr.mxu0 0.0
        %1295 = vmatpush1.msra.mxu0 0.0
        %1296 = vmatprep.subr.mxu0 0.0
        %1297 = vmatpush1.msra.mxu0 0.0
        %1298 = vmatprep.subr.mxu0 0.0
        %1299 = vmatpush1.msra.mxu0 0.0
        %1300 = vmatprep.subr.mxu0 0.0
        %1301 = vmatpush1.msra.mxu0 0.0
        %1302 = vmatprep.subr.mxu0 0.0
        %1303 = vmatpush1.msra.mxu0 0.0
        %1304 = vmatprep.subr.mxu0 0.0
        %1305 = vmatpush1.msra.mxu0 0.0
        %1306 = vmatprep.subr.mxu0 0.0
        %1307 = vmatpush1.msra.mxu0 0.0
        %1308 = vmatprep.subr.mxu0 0.0
        %1309 = vmatpush1.msra.mxu0 0.0
        %1310 = vmatprep.subr.mxu0 0.0
        %1311 = vmatpush1.msra.mxu0 0.0
        %1312 = vmatprep.subr.mxu0 0.0
        %1313 = vmatpush1.msra.mxu0 0.0
        %1314 = vmatprep.subr.mxu0 0.0
        %1315 = vmatpush1.msra.mxu0 0.0
        %1316 = vmatprep.subr.mxu0 0.0
        %1317 = vmatpush1.msra.mxu0 0.0
        %1318 = vmatprep.subr.mxu0 0.0
        %1319 = vmatpush1.msra.mxu0 0.0
        %1320 = vmatprep.subr.mxu0 0.0
        %1321 = vmatpush1.msra.mxu0 0.0
        %1322 = vmatprep.subr.mxu0 %v1290
        %1323 = vmatpush1.msra.mxu0 %v1287
        %1324 = vmatprep.subr.mxu0 0.0
        %1325 = vmatpush2.msra.mxu0 0.0
        %1326 = vmatprep.subr.mxu0 0.0
        %1327 = vmatpush2.msra.mxu0 0.0
        %1328 = vmatprep.subr.mxu0 0.0
        %1329 = vmatpush2.msra.mxu0 0.0
        %1330 = vmatprep.subr.mxu0 0.0
        %1331 = vmatpush2.msra.mxu0 0.0
        %1332 = vmatprep.subr.mxu0 0.0
        %1333 = vmatpush2.msra.mxu0 0.0
        %1334 = vmatprep.subr.mxu0 0.0
        %1335 = vmatpush2.msra.mxu0 0.0
        %1336 = vmatprep.subr.mxu0 0.0
        %1337 = vmatpush2.msra.mxu0 0.0
        %1338 = vmatprep.subr.mxu0 0.0
        %1339 = vmatpush2.msra.mxu0 0.0
        %1340 = vmatprep.subr.mxu0 0.0
        %1341 = vmatpush2.msra.mxu0 0.0
        %1342 = vmatprep.subr.mxu0 0.0
        %1343 = vmatpush2.msra.mxu0 0.0
        %1344 = vmatprep.subr.mxu0 0.0
        %1345 = vmatpush2.msra.mxu0 0.0
        %1346 = vmatprep.subr.mxu0 0.0
        %1347 = vmatpush2.msra.mxu0 0.0
        %1348 = vmatprep.subr.mxu0 0.0
        %1349 = vmatpush2.msra.mxu0 0.0
        %1350 = vmatprep.subr.mxu0 0.0
        %1351 = vmatpush2.msra.mxu0 0.0
        %1352 = vmatprep.subr.mxu0 0.0
        %1353 = vmatpush2.msra.mxu0 0.0
        %1354 = vmatprep.subr.mxu0 0.0
        %1355 = vmatpush2.msra.mxu0 0.0
        %1356 = vmatprep.mubr.f32.mxu0 0.0
        %1357 = vmatmul.mubr.f32.gmra.mxu0 %v1275
        %v1358 = vpop.f32.mrf.mxu0
        %v1359 = vadd.f32 0.0, %v1358
        %v1360 = vpop.f32.mrf.mxu0
        %v1361 = vadd.f32 0.0, %v1360
        %1362 = vmatprep.mubr.f32.mxu0 0.0
        %1363 = vmatmul.mubr.f32.gmra.mxu0 %v1278
        %v1364 = vpop.f32.mrf.mxu0
        %v1365 = vadd.f32 0.0, %v1364
        %v1366 = vpop.f32.mrf.mxu0
        %v1367 = vadd.f32 0.0, %v1366
        %1368 = vmatprep.mubr.f32.mxu0 0.0
        %1369 = vmatmul.mubr.f32.gmra.mxu0 %v1281
        %v1370 = vpop.f32.mrf.mxu0
        %v1371 = vadd.f32 0.0, %v1370
        %v1372 = vpop.f32.mrf.mxu0
        %v1373 = vadd.f32 0.0, %v1372
        %1374 = vmatprep.mubr.f32.mxu0 0.0
        %1375 = vmatmul.mubr.f32.gmra.mxu0 %v1284
        %v1376 = vpop.f32.mrf.mxu0
        %v1377 = vadd.f32 0.0, %v1376
        %v1378 = vpop.f32.mrf.mxu0
        %v1379 = vadd.f32 0.0, %v1378
        %1380 = vdwg.mxu0
        %v1381 = vadd.f32 %v1242, %v1359
        %v1382 = vadd.f32 %v1243, %v1361
        %v1383 = vadd.f32 %v1244, %v1365
        %v1384 = vadd.f32 %v1245, %v1367
        %v1385 = vadd.f32 %v1246, %v1371
        %v1386 = vadd.f32 %v1247, %v1373
        %v1387 = vadd.f32 %v1248, %v1377
        %v1388 = vadd.f32 %v1249, %v1379
        %1389 = vrot.lane.b32.xlu0 %v581, 113
        %v1390 = vpop.permute.xlu0 %1389
        %1391 = vrot.lane.b32.xlu0 %v583, 113
        %v1392 = vpop.permute.xlu0 %1391
        %vm1393 = vcmp.lt.s32.totalorder %v590, 113
        %v1394 = vsel %vm1393, %v1390, %v1392
        %v1395 = vsel %vm1393, %v1392, %v1390
        %v1396 = vlaneseq
        %v1397 = vshrl.u32 %v1396, 7
        %v1398 = vsub.s32 6, %v1397
        %v1399 = vrot.slane %v596, %v1398
        %v1400 = vlaneseq
        %v1401 = vshrl.u32 %v1400, 7
        %v1402 = vsub.s32 6, %v1401
        %v1403 = vrot.slane %v597, %v1402
        %vm1404 = vcmp.eq.s32.totalorder %v1399, 1
        %vm1405 = vcmp.eq.s32.totalorder %v1403, 1
        %v1406 = vsel %vm1404, %v1394, 0.0
        %v1407 = vsel %vm1405, %v1395, 0.0
        %s1408 = scalar_lea.vmem %s2, 192
        %v1409 = vld [vmem:[%s1408] sm:$0xff]
        %v1410 = vld [vmem:[%s1408 + $0x8] sm:$0xff]
        %v1411 = vld [vmem:[%s1408 + $0x10] sm:$0xff]
        %v1412 = vld [vmem:[%s1408 + $0x18] sm:$0xff]
        %v1414 = vsel %vm638, %v1409, 0
        %v1417 = vsel %vm638, %v1410, 0
        %v1420 = vsel %vm638, %v1411, 0
        %v1423 = vsel %vm638, %v1412, 0
        %v1426 = vsel %vm651, %v1406, 0
        %v1429 = vsel %vm651, %v1407, 0
        %1431 = vmatprep.subr.mxu0 0.0
        %1432 = vmatpush1.msra.mxu0 0.0
        %1433 = vmatprep.subr.mxu0 0.0
        %1434 = vmatpush1.msra.mxu0 0.0
        %1435 = vmatprep.subr.mxu0 0.0
        %1436 = vmatpush1.msra.mxu0 0.0
        %1437 = vmatprep.subr.mxu0 0.0
        %1438 = vmatpush1.msra.mxu0 0.0
        %1439 = vmatprep.subr.mxu0 0.0
        %1440 = vmatpush1.msra.mxu0 0.0
        %1441 = vmatprep.subr.mxu0 0.0
        %1442 = vmatpush1.msra.mxu0 0.0
        %1443 = vmatprep.subr.mxu0 0.0
        %1444 = vmatpush1.msra.mxu0 0.0
        %1445 = vmatprep.subr.mxu0 0.0
        %1446 = vmatpush1.msra.mxu0 0.0
        %1447 = vmatprep.subr.mxu0 0.0
        %1448 = vmatpush1.msra.mxu0 0.0
        %1449 = vmatprep.subr.mxu0 0.0
        %1450 = vmatpush1.msra.mxu0 0.0
        %1451 = vmatprep.subr.mxu0 0.0
        %1452 = vmatpush1.msra.mxu0 0.0
        %1453 = vmatprep.subr.mxu0 0.0
        %1454 = vmatpush1.msra.mxu0 0.0
        %1455 = vmatprep.subr.mxu0 0.0
        %1456 = vmatpush1.msra.mxu0 0.0
        %1457 = vmatprep.subr.mxu0 0.0
        %1458 = vmatpush1.msra.mxu0 0.0
        %1459 = vmatprep.subr.mxu0 0.0
        %1460 = vmatpush1.msra.mxu0 0.0
        %1461 = vmatprep.subr.mxu0 %v1429
        %1462 = vmatpush1.msra.mxu0 %v1426
        %1463 = vmatprep.subr.mxu0 0.0
        %1464 = vmatpush2.msra.mxu0 0.0
        %1465 = vmatprep.subr.mxu0 0.0
        %1466 = vmatpush2.msra.mxu0 0.0
        %1467 = vmatprep.subr.mxu0 0.0
        %1468 = vmatpush2.msra.mxu0 0.0
        %1469 = vmatprep.subr.mxu0 0.0
        %1470 = vmatpush2.msra.mxu0 0.0
        %1471 = vmatprep.subr.mxu0 0.0
        %1472 = vmatpush2.msra.mxu0 0.0
        %1473 = vmatprep.subr.mxu0 0.0
        %1474 = vmatpush2.msra.mxu0 0.0
        %1475 = vmatprep.subr.mxu0 0.0
        %1476 = vmatpush2.msra.mxu0 0.0
        %1477 = vmatprep.subr.mxu0 0.0
        %1478 = vmatpush2.msra.mxu0 0.0
        %1479 = vmatprep.subr.mxu0 0.0
        %1480 = vmatpush2.msra.mxu0 0.0
        %1481 = vmatprep.subr.mxu0 0.0
        %1482 = vmatpush2.msra.mxu0 0.0
        %1483 = vmatprep.subr.mxu0 0.0
        %1484 = vmatpush2.msra.mxu0 0.0
        %1485 = vmatprep.subr.mxu0 0.0
        %1486 = vmatpush2.msra.mxu0 0.0
        %1487 = vmatprep.subr.mxu0 0.0
        %1488 = vmatpush2.msra.mxu0 0.0
        %1489 = vmatprep.subr.mxu0 0.0
        %1490 = vmatpush2.msra.mxu0 0.0
        %1491 = vmatprep.subr.mxu0 0.0
        %1492 = vmatpush2.msra.mxu0 0.0
        %1493 = vmatprep.subr.mxu0 0.0
        %1494 = vmatpush2.msra.mxu0 0.0
        %1495 = vmatprep.mubr.f32.mxu0 0.0
        %1496 = vmatmul.mubr.f32.gmra.mxu0 %v1414
        %v1497 = vpop.f32.mrf.mxu0
        %v1498 = vadd.f32 0.0, %v1497
        %v1499 = vpop.f32.mrf.mxu0
        %v1500 = vadd.f32 0.0, %v1499
        %1501 = vmatprep.mubr.f32.mxu0 0.0
        %1502 = vmatmul.mubr.f32.gmra.mxu0 %v1417
        %v1503 = vpop.f32.mrf.mxu0
        %v1504 = vadd.f32 0.0, %v1503
        %v1505 = vpop.f32.mrf.mxu0
        %v1506 = vadd.f32 0.0, %v1505
        %1507 = vmatprep.mubr.f32.mxu0 0.0
        %1508 = vmatmul.mubr.f32.gmra.mxu0 %v1420
        %v1509 = vpop.f32.mrf.mxu0
        %v1510 = vadd.f32 0.0, %v1509
        %v1511 = vpop.f32.mrf.mxu0
        %v1512 = vadd.f32 0.0, %v1511
        %1513 = vmatprep.mubr.f32.mxu0 0.0
        %1514 = vmatmul.mubr.f32.gmra.mxu0 %v1423
        %v1515 = vpop.f32.mrf.mxu0
        %v1516 = vadd.f32 0.0, %v1515
        %v1517 = vpop.f32.mrf.mxu0
        %v1518 = vadd.f32 0.0, %v1517
        %1519 = vdwg.mxu0
        %v1520 = vadd.f32 %v1381, %v1498
        %v1521 = vadd.f32 %v1382, %v1500
        %v1522 = vadd.f32 %v1383, %v1504
        %v1523 = vadd.f32 %v1384, %v1506
        %v1524 = vadd.f32 %v1385, %v1510
        %v1525 = vadd.f32 %v1386, %v1512
        %v1526 = vadd.f32 %v1387, %v1516
        %v1527 = vadd.f32 %v1388, %v1518
        %1528 = vrot.lane.b32.xlu0 %v581, 112
        %v1529 = vpop.permute.xlu0 %1528
        %1530 = vrot.lane.b32.xlu0 %v583, 112
        %v1531 = vpop.permute.xlu0 %1530
        %vm1532 = vcmp.lt.s32.totalorder %v590, 112
        %v1533 = vsel %vm1532, %v1529, %v1531
        %v1534 = vsel %vm1532, %v1531, %v1529
        %v1535 = vlaneseq
        %v1536 = vshrl.u32 %v1535, 7
        %v1537 = vsub.s32 7, %v1536
        %v1538 = vrot.slane %v596, %v1537
        %v1539 = vlaneseq
        %v1540 = vshrl.u32 %v1539, 7
        %v1541 = vsub.s32 7, %v1540
        %v1542 = vrot.slane %v597, %v1541
        %vm1543 = vcmp.eq.s32.totalorder %v1538, 1
        %vm1544 = vcmp.eq.s32.totalorder %v1542, 1
        %v1545 = vsel %vm1543, %v1533, 0.0
        %v1546 = vsel %vm1544, %v1534, 0.0
        %s1547 = scalar_lea.vmem %s2, 224
        %v1548 = vld [vmem:[%s1547] sm:$0xff]
        %v1549 = vld [vmem:[%s1547 + $0x8] sm:$0xff]
        %v1550 = vld [vmem:[%s1547 + $0x10] sm:$0xff]
        %v1551 = vld [vmem:[%s1547 + $0x18] sm:$0xff]
        %v1553 = vsel %vm638, %v1548, 0
        %v1556 = vsel %vm638, %v1549, 0
        %v1559 = vsel %vm638, %v1550, 0
        %v1562 = vsel %vm638, %v1551, 0
        %v1565 = vsel %vm651, %v1545, 0
        %v1568 = vsel %vm651, %v1546, 0
        %1570 = vmatprep.subr.mxu0 0.0
        %1571 = vmatpush1.msra.mxu0 0.0
        %1572 = vmatprep.subr.mxu0 0.0
        %1573 = vmatpush1.msra.mxu0 0.0
        %1574 = vmatprep.subr.mxu0 0.0
        %1575 = vmatpush1.msra.mxu0 0.0
        %1576 = vmatprep.subr.mxu0 0.0
        %1577 = vmatpush1.msra.mxu0 0.0
        %1578 = vmatprep.subr.mxu0 0.0
        %1579 = vmatpush1.msra.mxu0 0.0
        %1580 = vmatprep.subr.mxu0 0.0
        %1581 = vmatpush1.msra.mxu0 0.0
        %1582 = vmatprep.subr.mxu0 0.0
        %1583 = vmatpush1.msra.mxu0 0.0
        %1584 = vmatprep.subr.mxu0 0.0
        %1585 = vmatpush1.msra.mxu0 0.0
        %1586 = vmatprep.subr.mxu0 0.0
        %1587 = vmatpush1.msra.mxu0 0.0
        %1588 = vmatprep.subr.mxu0 0.0
        %1589 = vmatpush1.msra.mxu0 0.0
        %1590 = vmatprep.subr.mxu0 0.0
        %1591 = vmatpush1.msra.mxu0 0.0
        %1592 = vmatprep.subr.mxu0 0.0
        %1593 = vmatpush1.msra.mxu0 0.0
        %1594 = vmatprep.subr.mxu0 0.0
        %1595 = vmatpush1.msra.mxu0 0.0
        %1596 = vmatprep.subr.mxu0 0.0
        %1597 = vmatpush1.msra.mxu0 0.0
        %1598 = vmatprep.subr.mxu0 0.0
        %1599 = vmatpush1.msra.mxu0 0.0
        %1600 = vmatprep.subr.mxu0 %v1568
        %1601 = vmatpush1.msra.mxu0 %v1565
        %1602 = vmatprep.subr.mxu0 0.0
        %1603 = vmatpush2.msra.mxu0 0.0
        %1604 = vmatprep.subr.mxu0 0.0
        %1605 = vmatpush2.msra.mxu0 0.0
        %1606 = vmatprep.subr.mxu0 0.0
        %1607 = vmatpush2.msra.mxu0 0.0
        %1608 = vmatprep.subr.mxu0 0.0
        %1609 = vmatpush2.msra.mxu0 0.0
        %1610 = vmatprep.subr.mxu0 0.0
        %1611 = vmatpush2.msra.mxu0 0.0
        %1612 = vmatprep.subr.mxu0 0.0
        %1613 = vmatpush2.msra.mxu0 0.0
        %1614 = vmatprep.subr.mxu0 0.0
        %1615 = vmatpush2.msra.mxu0 0.0
        %1616 = vmatprep.subr.mxu0 0.0
        %1617 = vmatpush2.msra.mxu0 0.0
        %1618 = vmatprep.subr.mxu0 0.0
        %1619 = vmatpush2.msra.mxu0 0.0
        %1620 = vmatprep.subr.mxu0 0.0
        %1621 = vmatpush2.msra.mxu0 0.0
        %1622 = vmatprep.subr.mxu0 0.0
        %1623 = vmatpush2.msra.mxu0 0.0
        %1624 = vmatprep.subr.mxu0 0.0
        %1625 = vmatpush2.msra.mxu0 0.0
        %1626 = vmatprep.subr.mxu0 0.0
        %1627 = vmatpush2.msra.mxu0 0.0
        %1628 = vmatprep.subr.mxu0 0.0
        %1629 = vmatpush2.msra.mxu0 0.0
        %1630 = vmatprep.subr.mxu0 0.0
        %1631 = vmatpush2.msra.mxu0 0.0
        %1632 = vmatprep.subr.mxu0 0.0
        %1633 = vmatpush2.msra.mxu0 0.0
        %1634 = vmatprep.mubr.f32.mxu0 0.0
        %1635 = vmatmul.mubr.f32.gmra.mxu0 %v1553
        %v1636 = vpop.f32.mrf.mxu0
        %v1637 = vadd.f32 0.0, %v1636
        %v1638 = vpop.f32.mrf.mxu0
        %v1639 = vadd.f32 0.0, %v1638
        %1640 = vmatprep.mubr.f32.mxu0 0.0
        %1641 = vmatmul.mubr.f32.gmra.mxu0 %v1556
        %v1642 = vpop.f32.mrf.mxu0
        %v1643 = vadd.f32 0.0, %v1642
        %v1644 = vpop.f32.mrf.mxu0
        %v1645 = vadd.f32 0.0, %v1644
        %1646 = vmatprep.mubr.f32.mxu0 0.0
        %1647 = vmatmul.mubr.f32.gmra.mxu0 %v1559
        %v1648 = vpop.f32.mrf.mxu0
        %v1649 = vadd.f32 0.0, %v1648
        %v1650 = vpop.f32.mrf.mxu0
        %v1651 = vadd.f32 0.0, %v1650
        %1652 = vmatprep.mubr.f32.mxu0 0.0
        %1653 = vmatmul.mubr.f32.gmra.mxu0 %v1562
        %v1654 = vpop.f32.mrf.mxu0
        %v1655 = vadd.f32 0.0, %v1654
        %v1656 = vpop.f32.mrf.mxu0
        %v1657 = vadd.f32 0.0, %v1656
        %1658 = vdwg.mxu0
        %v1659 = vadd.f32 %v1520, %v1637
        %v1660 = vadd.f32 %v1521, %v1639
        %v1661 = vadd.f32 %v1522, %v1643
        %v1662 = vadd.f32 %v1523, %v1645
        %v1663 = vadd.f32 %v1524, %v1649
        %v1664 = vadd.f32 %v1525, %v1651
        %v1665 = vadd.f32 %v1526, %v1655
        %v1666 = vadd.f32 %v1527, %v1657
        %1667 = vrot.lane.b32.xlu0 %v581, 111
        %v1668 = vpop.permute.xlu0 %1667
        %1669 = vrot.lane.b32.xlu0 %v583, 111
        %v1670 = vpop.permute.xlu0 %1669
        %vm1671 = vcmp.lt.s32.totalorder %v590, 111
        %v1672 = vsel %vm1671, %v1668, %v1670
        %v1673 = vsel %vm1671, %v1670, %v1668
        %vm1674 = vcmp.ne.f32.partialorder %v579, 0.0
        %vm1675 = vcmp.ne.f32.partialorder %v580, 0.0
        %v1676 = vsel %vm1674, 1, 0
        %v1677 = vsel %vm1675, 1, 0
        %v1678 = vlaneseq
        %v1679 = vshrl.u32 %v1678, 7
        %v1680 = vsub.s32 0, %v1679
        %v1681 = vrot.slane %v1676, %v1680
        %v1682 = vlaneseq
        %v1683 = vshrl.u32 %v1682, 7
        %v1684 = vsub.s32 0, %v1683
        %v1685 = vrot.slane %v1677, %v1684
        %vm1686 = vcmp.eq.s32.totalorder %v1681, 1
        %vm1687 = vcmp.eq.s32.totalorder %v1685, 1
        %v1688 = vsel %vm1686, %v1672, 0.0
        %v1689 = vsel %vm1687, %v1673, 0.0
        %s1690 = scalar_lea.vmem %s2, 256
        %v1691 = vld [vmem:[%s1690] sm:$0xff]
        %v1692 = vld [vmem:[%s1690 + $0x8] sm:$0xff]
        %v1693 = vld [vmem:[%s1690 + $0x10] sm:$0xff]
        %v1694 = vld [vmem:[%s1690 + $0x18] sm:$0xff]
        %v1696 = vsel %vm638, %v1691, 0
        %v1699 = vsel %vm638, %v1692, 0
        %v1702 = vsel %vm638, %v1693, 0
        %v1705 = vsel %vm638, %v1694, 0
        %v1708 = vsel %vm651, %v1688, 0
        %v1711 = vsel %vm651, %v1689, 0
        %1713 = vmatprep.subr.mxu0 0.0
        %1714 = vmatpush1.msra.mxu0 0.0
        %1715 = vmatprep.subr.mxu0 0.0
        %1716 = vmatpush1.msra.mxu0 0.0
        %1717 = vmatprep.subr.mxu0 0.0
        %1718 = vmatpush1.msra.mxu0 0.0
        %1719 = vmatprep.subr.mxu0 0.0
        %1720 = vmatpush1.msra.mxu0 0.0
        %1721 = vmatprep.subr.mxu0 0.0
        %1722 = vmatpush1.msra.mxu0 0.0
        %1723 = vmatprep.subr.mxu0 0.0
        %1724 = vmatpush1.msra.mxu0 0.0
        %1725 = vmatprep.subr.mxu0 0.0
        %1726 = vmatpush1.msra.mxu0 0.0
        %1727 = vmatprep.subr.mxu0 0.0
        %1728 = vmatpush1.msra.mxu0 0.0
        %1729 = vmatprep.subr.mxu0 0.0
        %1730 = vmatpush1.msra.mxu0 0.0
        %1731 = vmatprep.subr.mxu0 0.0
        %1732 = vmatpush1.msra.mxu0 0.0
        %1733 = vmatprep.subr.mxu0 0.0
        %1734 = vmatpush1.msra.mxu0 0.0
        %1735 = vmatprep.subr.mxu0 0.0
        %1736 = vmatpush1.msra.mxu0 0.0
        %1737 = vmatprep.subr.mxu0 0.0
        %1738 = vmatpush1.msra.mxu0 0.0
        %1739 = vmatprep.subr.mxu0 0.0
        %1740 = vmatpush1.msra.mxu0 0.0
        %1741 = vmatprep.subr.mxu0 0.0
        %1742 = vmatpush1.msra.mxu0 0.0
        %1743 = vmatprep.subr.mxu0 %v1711
        %1744 = vmatpush1.msra.mxu0 %v1708
        %1745 = vmatprep.subr.mxu0 0.0
        %1746 = vmatpush2.msra.mxu0 0.0
        %1747 = vmatprep.subr.mxu0 0.0
        %1748 = vmatpush2.msra.mxu0 0.0
        %1749 = vmatprep.subr.mxu0 0.0
        %1750 = vmatpush2.msra.mxu0 0.0
        %1751 = vmatprep.subr.mxu0 0.0
        %1752 = vmatpush2.msra.mxu0 0.0
        %1753 = vmatprep.subr.mxu0 0.0
        %1754 = vmatpush2.msra.mxu0 0.0
        %1755 = vmatprep.subr.mxu0 0.0
        %1756 = vmatpush2.msra.mxu0 0.0
        %1757 = vmatprep.subr.mxu0 0.0
        %1758 = vmatpush2.msra.mxu0 0.0
        %1759 = vmatprep.subr.mxu0 0.0
        %1760 = vmatpush2.msra.mxu0 0.0
        %1761 = vmatprep.subr.mxu0 0.0
        %1762 = vmatpush2.msra.mxu0 0.0
        %1763 = vmatprep.subr.mxu0 0.0
        %1764 = vmatpush2.msra.mxu0 0.0
        %1765 = vmatprep.subr.mxu0 0.0
        %1766 = vmatpush2.msra.mxu0 0.0
        %1767 = vmatprep.subr.mxu0 0.0
        %1768 = vmatpush2.msra.mxu0 0.0
        %1769 = vmatprep.subr.mxu0 0.0
        %1770 = vmatpush2.msra.mxu0 0.0
        %1771 = vmatprep.subr.mxu0 0.0
        %1772 = vmatpush2.msra.mxu0 0.0
        %1773 = vmatprep.subr.mxu0 0.0
        %1774 = vmatpush2.msra.mxu0 0.0
        %1775 = vmatprep.subr.mxu0 0.0
        %1776 = vmatpush2.msra.mxu0 0.0
        %1777 = vmatprep.mubr.f32.mxu0 0.0
        %1778 = vmatmul.mubr.f32.gmra.mxu0 %v1696
        %v1779 = vpop.f32.mrf.mxu0
        %v1780 = vadd.f32 0.0, %v1779
        %v1781 = vpop.f32.mrf.mxu0
        %v1782 = vadd.f32 0.0, %v1781
        %1783 = vmatprep.mubr.f32.mxu0 0.0
        %1784 = vmatmul.mubr.f32.gmra.mxu0 %v1699
        %v1785 = vpop.f32.mrf.mxu0
        %v1786 = vadd.f32 0.0, %v1785
        %v1787 = vpop.f32.mrf.mxu0
        %v1788 = vadd.f32 0.0, %v1787
        %1789 = vmatprep.mubr.f32.mxu0 0.0
        %1790 = vmatmul.mubr.f32.gmra.mxu0 %v1702
        %v1791 = vpop.f32.mrf.mxu0
        %v1792 = vadd.f32 0.0, %v1791
        %v1793 = vpop.f32.mrf.mxu0
        %v1794 = vadd.f32 0.0, %v1793
        %1795 = vmatprep.mubr.f32.mxu0 0.0
        %1796 = vmatmul.mubr.f32.gmra.mxu0 %v1705
        %v1797 = vpop.f32.mrf.mxu0
        %v1798 = vadd.f32 0.0, %v1797
        %v1799 = vpop.f32.mrf.mxu0
        %v1800 = vadd.f32 0.0, %v1799
        %1801 = vdwg.mxu0
        %v1802 = vadd.f32 %v1659, %v1780
        %v1803 = vadd.f32 %v1660, %v1782
        %v1804 = vadd.f32 %v1661, %v1786
        %v1805 = vadd.f32 %v1662, %v1788
        %v1806 = vadd.f32 %v1663, %v1792
        %v1807 = vadd.f32 %v1664, %v1794
        %v1808 = vadd.f32 %v1665, %v1798
        %v1809 = vadd.f32 %v1666, %v1800
        %v1810 = vld [vmem:[%s3] sm:$0xff]
        %v1811 = vld [vmem:[%s3 + $0x8] sm:$0xff]
        %v1812 = vld [vmem:[%s3 + $0x10] sm:$0xff]
        %v1813 = vld [vmem:[%s3 + $0x18] sm:$0xff]
        %1815 = vset.pattern.permute.xlu0 0
        %1816 = vperm.xlu0 %1815, %v1810
        %v1817 = vpop.permute.xlu0 %1816
        %1820 = vset.pattern.permute.xlu0 0
        %1821 = vperm.xlu0 %1820, %v1811
        %v1822 = vpop.permute.xlu0 %1821
        %1825 = vset.pattern.permute.xlu0 0
        %1826 = vperm.xlu0 %1825, %v1812
        %v1827 = vpop.permute.xlu0 %1826
        %1830 = vset.pattern.permute.xlu0 0
        %1831 = vperm.xlu0 %1830, %v1813
        %v1832 = vpop.permute.xlu0 %1831
        %v1834 = vadd.f32 %v1802, %v1817
        %v1835 = vadd.f32 %v1803, %v1817
        %v1836 = vadd.f32 %v1804, %v1822
        %v1837 = vadd.f32 %v1805, %v1822
        %v1838 = vadd.f32 %v1806, %v1827
        %v1839 = vadd.f32 %v1807, %v1827
        %v1840 = vadd.f32 %v1808, %v1832
        %v1841 = vadd.f32 %v1809, %v1832
        %v1842 = vld [vmem:[%s4] sm:$0xff]
        %v1843 = vld [vmem:[%s4 + $0x8] sm:$0xff]
        %v1844 = vld [vmem:[%s4 + $0x10] sm:$0xff]
        %v1845 = vld [vmem:[%s4 + $0x18] sm:$0xff]
        %1847 = vset.pattern.permute.xlu0 0
        %1848 = vperm.xlu0 %1847, %v1842
        %v1849 = vpop.permute.xlu0 %1848
        %1852 = vset.pattern.permute.xlu0 0
        %1853 = vperm.xlu0 %1852, %v1843
        %v1854 = vpop.permute.xlu0 %1853
        %1857 = vset.pattern.permute.xlu0 0
        %1858 = vperm.xlu0 %1857, %v1844
        %v1859 = vpop.permute.xlu0 %1858
        %1862 = vset.pattern.permute.xlu0 0
        %1863 = vperm.xlu0 %1862, %v1845
        %v1864 = vpop.permute.xlu0 %1863
        %v1866 = vmul.f32 %v1834, %v1849
        %v1867 = vmul.f32 %v1835, %v1849
        %v1868 = vmul.f32 %v1836, %v1854
        %v1869 = vmul.f32 %v1837, %v1854
        %v1870 = vmul.f32 %v1838, %v1859
        %v1871 = vmul.f32 %v1839, %v1859
        %v1872 = vmul.f32 %v1840, %v1864
        %v1873 = vmul.f32 %v1841, %v1864
        %v1874 = vld [vmem:[%s5] sm:$0xff]
        %v1875 = vld [vmem:[%s5 + $0x8] sm:$0xff]
        %v1876 = vld [vmem:[%s5 + $0x10] sm:$0xff]
        %v1877 = vld [vmem:[%s5 + $0x18] sm:$0xff]
        %1879 = vset.pattern.permute.xlu0 0
        %1880 = vperm.xlu0 %1879, %v1874
        %v1881 = vpop.permute.xlu0 %1880
        %1884 = vset.pattern.permute.xlu0 0
        %1885 = vperm.xlu0 %1884, %v1875
        %v1886 = vpop.permute.xlu0 %1885
        %1889 = vset.pattern.permute.xlu0 0
        %1890 = vperm.xlu0 %1889, %v1876
        %v1891 = vpop.permute.xlu0 %1890
        %1894 = vset.pattern.permute.xlu0 0
        %1895 = vperm.xlu0 %1894, %v1877
        %v1896 = vpop.permute.xlu0 %1895
        %v1898 = vadd.f32 %v1866, %v1881
        %v1899 = vadd.f32 %v1867, %v1881
        %v1900 = vadd.f32 %v1868, %v1886
        %v1901 = vadd.f32 %v1869, %v1886
        %v1902 = vadd.f32 %v1870, %v1891
        %v1903 = vadd.f32 %v1871, %v1891
        %v1904 = vadd.f32 %v1872, %v1896
        %v1905 = vadd.f32 %v1873, %v1896
        %vm1906 = vcmp.ge.f32.partialorder %v1898, 0.0
        %vm1907 = vcmp.ge.f32.partialorder %v1899, 0.0
        %vm1908 = vcmp.ge.f32.partialorder %v1900, 0.0
        %vm1909 = vcmp.ge.f32.partialorder %v1901, 0.0
        %vm1910 = vcmp.ge.f32.partialorder %v1902, 0.0
        %vm1911 = vcmp.ge.f32.partialorder %v1903, 0.0
        %vm1912 = vcmp.ge.f32.partialorder %v1904, 0.0
        %vm1913 = vcmp.ge.f32.partialorder %v1905, 0.0
        %v1914 = vmul.f32 %v1898, 0.3
        %v1915 = vmul.f32 %v1899, 0.3
        %v1916 = vmul.f32 %v1900, 0.3
        %v1917 = vmul.f32 %v1901, 0.3
        %v1918 = vmul.f32 %v1902, 0.3
        %v1919 = vmul.f32 %v1903, 0.3
        %v1920 = vmul.f32 %v1904, 0.3
        %v1921 = vmul.f32 %v1905, 0.3
        %v1922 = vsel %vm1906, %v1898, %v1914
        %v1923 = vsel %vm1907, %v1899, %v1915
        %v1924 = vsel %vm1908, %v1900, %v1916
        %v1925 = vsel %vm1909, %v1901, %v1917
        %v1926 = vsel %vm1910, %v1902, %v1918
        %v1927 = vsel %vm1911, %v1903, %v1919
        %v1928 = vsel %vm1912, %v1904, %v1920
        %v1929 = vsel %vm1913, %v1905, %v1921
        %v1930 = vadd.f32 %v1922, %v1923
        %1931 = vadd.xlane.f32.xlu0 %v1930
        %v1932 = vpop.xlane.xlu0 %1931
        %v1933 = vadd.f32 %v1924, %v1925
        %1934 = vadd.xlane.f32.xlu0 %v1933
        %v1935 = vpop.xlane.xlu0 %1934
        %v1936 = vadd.f32 %v1926, %v1927
        %1937 = vadd.xlane.f32.xlu0 %v1936
        %v1938 = vpop.xlane.xlu0 %1937
        %v1939 = vadd.f32 %v1928, %v1929
        %1940 = vadd.xlane.f32.xlu0 %v1939
        %v1941 = vpop.xlane.xlu0 %1940
        %v1942 = vmul.f32 %v1932, 0.00390625
        %v1943 = vmul.f32 %v1935, 0.00390625
        %v1944 = vmul.f32 %v1938, 0.00390625
        %v1945 = vmul.f32 %v1941, 0.00390625
        %v1946 = vmax.f32 %v1922, %v1923
        %1947 = vmax.xlane.f32.xlu0 %v1946
        %v1948 = vpop.xlane.xlu0 %1947
        %v1949 = vmax.f32 %v1924, %v1925
        %1950 = vmax.xlane.f32.xlu0 %v1949
        %v1951 = vpop.xlane.xlu0 %1950
        %v1952 = vmax.f32 %v1926, %v1927
        %1953 = vmax.xlane.f32.xlu0 %v1952
        %v1954 = vpop.xlane.xlu0 %1953
        %v1955 = vmax.f32 %v1928, %v1929
        %1956 = vmax.xlane.f32.xlu0 %v1955
        %v1957 = vpop.xlane.xlu0 %1956
        %vm1958 = vcmask 7168
        %v1959 = vsel %vm1958, %v1942, %v1948
        %v1960 = vsel %vm1958, %v1943, %v1951
        %v1961 = vsel %vm1958, %v1944, %v1954
        %v1962 = vsel %vm1958, %v1945, %v1957
        %v1963 = vld [vmem:[%s6] sm:$0xff]
        %v1964 = vld [vmem:[%s6 + $0x8] sm:$0xff]
        %v1965 = vld [vmem:[%s6 + $0x10] sm:$0xff]
        %v1966 = vld [vmem:[%s6 + $0x18] sm:$0xff]
        %vm1967 = vcmask 261120
        %v1969 = vsel %vm1967, %v1963, 0
        %v1972 = vsel %vm1967, %v1964, 0
        %v1975 = vsel %vm1967, %v1965, 0
        %v1978 = vsel %vm1967, %v1966, 0
        %1980 = vmatprep.subr.mxu0 0.0
        %1981 = vmatpush1.msra.mxu0 0.0
        %1982 = vmatprep.subr.mxu0 0.0
        %1983 = vmatpush1.msra.mxu0 0.0
        %1984 = vmatprep.subr.mxu0 0.0
        %1985 = vmatpush1.msra.mxu0 0.0
        %1986 = vmatprep.subr.mxu0 0.0
        %1987 = vmatpush1.msra.mxu0 0.0
        %1988 = vmatprep.subr.mxu0 0.0
        %1989 = vmatpush1.msra.mxu0 0.0
        %1990 = vmatprep.subr.mxu0 0.0
        %1991 = vmatpush1.msra.mxu0 0.0
        %1992 = vmatprep.subr.mxu0 0.0
        %1993 = vmatpush1.msra.mxu0 0.0
        %1994 = vmatprep.subr.mxu0 0.0
        %1995 = vmatpush1.msra.mxu0 0.0
        %1996 = vmatprep.subr.mxu0 0.0
        %1997 = vmatpush1.msra.mxu0 0.0
        %1998 = vmatprep.subr.mxu0 0.0
        %1999 = vmatpush1.msra.mxu0 0.0
        %2000 = vmatprep.subr.mxu0 0.0
        %2001 = vmatpush1.msra.mxu0 0.0
        %2002 = vmatprep.subr.mxu0 0.0
        %2003 = vmatpush1.msra.mxu0 0.0
        %2004 = vmatprep.subr.mxu0 0.0
        %2005 = vmatpush1.msra.mxu0 %v1962
        %2006 = vmatprep.subr.mxu0 0.0
        %2007 = vmatpush1.msra.mxu0 %v1961
        %2008 = vmatprep.subr.mxu0 0.0
        %2009 = vmatpush1.msra.mxu0 %v1960
        %2010 = vmatprep.subr.mxu0 0.0
        %2011 = vmatpush1.msra.mxu0 %v1959
        %2012 = vmatprep.subr.mxu0 0.0
        %2013 = vmatpush2.msra.mxu0 0.0
        %2014 = vmatprep.subr.mxu0 0.0
        %2015 = vmatpush2.msra.mxu0 0.0
        %2016 = vmatprep.subr.mxu0 0.0
        %2017 = vmatpush2.msra.mxu0 0.0
        %2018 = vmatprep.subr.mxu0 0.0
        %2019 = vmatpush2.msra.mxu0 0.0
        %2020 = vmatprep.subr.mxu0 0.0
        %2021 = vmatpush2.msra.mxu0 0.0
        %2022 = vmatprep.subr.mxu0 0.0
        %2023 = vmatpush2.msra.mxu0 0.0
        %2024 = vmatprep.subr.mxu0 0.0
        %2025 = vmatpush2.msra.mxu0 0.0
        %2026 = vmatprep.subr.mxu0 0.0
        %2027 = vmatpush2.msra.mxu0 0.0
        %2028 = vmatprep.subr.mxu0 0.0
        %2029 = vmatpush2.msra.mxu0 0.0
        %2030 = vmatprep.subr.mxu0 0.0
        %2031 = vmatpush2.msra.mxu0 0.0
        %2032 = vmatprep.subr.mxu0 0.0
        %2033 = vmatpush2.msra.mxu0 0.0
        %2034 = vmatprep.subr.mxu0 0.0
        %2035 = vmatpush2.msra.mxu0 0.0
        %2036 = vmatprep.subr.mxu0 0.0
        %2037 = vmatpush2.msra.mxu0 0.0
        %2038 = vmatprep.subr.mxu0 0.0
        %2039 = vmatpush2.msra.mxu0 0.0
        %2040 = vmatprep.subr.mxu0 0.0
        %2041 = vmatpush2.msra.mxu0 0.0
        %2042 = vmatprep.subr.mxu0 0.0
        %2043 = vmatpush2.msra.mxu0 0.0
        %2044 = vmatprep.mubr.f32.mxu0 0.0
        %2045 = vmatmul.mubr.f32.gmra.mxu0 %v1969
        %v2046 = vpop.f32.mrf.mxu0
        %v2047 = vadd.f32 0.0, %v2046
        %v2048 = vpop.f32.mrf.mxu0
        %2049 = vmatprep.mubr.f32.mxu0 0.0
        %2050 = vmatmul.mubr.f32.gmra.mxu0 %v1972
        %v2051 = vpop.f32.mrf.mxu0
        %v2052 = vadd.f32 0.0, %v2051
        %v2053 = vpop.f32.mrf.mxu0
        %2054 = vmatprep.mubr.f32.mxu0 0.0
        %2055 = vmatmul.mubr.f32.gmra.mxu0 %v1975
        %v2056 = vpop.f32.mrf.mxu0
        %v2057 = vadd.f32 0.0, %v2056
        %v2058 = vpop.f32.mrf.mxu0
        %2059 = vmatprep.mubr.f32.mxu0 0.0
        %2060 = vmatmul.mubr.f32.gmra.mxu0 %v1978
        %v2061 = vpop.f32.mrf.mxu0
        %v2062 = vadd.f32 0.0, %v2061
        %v2063 = vpop.f32.mrf.mxu0
        %2064 = vdwg.mxu0
        %v2065 = vmax.f32 %v2047, 0.0
        %v2066 = vmax.f32 %v2052, 0.0
        %v2067 = vmax.f32 %v2057, 0.0
        %v2068 = vmax.f32 %v2062, 0.0
        %v2069 = vld [vmem:[%s7] sm:$0xff]
        %v2070 = vld [vmem:[%s7 + $0x8] sm:$0xff]
        %v2071 = vld [vmem:[%s7 + $0x10] sm:$0xff]
        %v2072 = vld [vmem:[%s7 + $0x18] sm:$0xff]
        %v2074 = vsel %vm1967, %v2069, 0
        %v2077 = vsel %vm1967, %v2070, 0
        %v2080 = vsel %vm1967, %v2071, 0
        %v2083 = vsel %vm1967, %v2072, 0
        %2085 = vmatprep.subr.mxu0 0.0
        %2086 = vmatpush1.msra.mxu0 0.0
        %2087 = vmatprep.subr.mxu0 0.0
        %2088 = vmatpush1.msra.mxu0 0.0
        %2089 = vmatprep.subr.mxu0 0.0
        %2090 = vmatpush1.msra.mxu0 0.0
        %2091 = vmatprep.subr.mxu0 0.0
        %2092 = vmatpush1.msra.mxu0 0.0
        %2093 = vmatprep.subr.mxu0 0.0
        %2094 = vmatpush1.msra.mxu0 0.0
        %2095 = vmatprep.subr.mxu0 0.0
        %2096 = vmatpush1.msra.mxu0 0.0
        %2097 = vmatprep.subr.mxu0 0.0
        %2098 = vmatpush1.msra.mxu0 0.0
        %2099 = vmatprep.subr.mxu0 0.0
        %2100 = vmatpush1.msra.mxu0 0.0
        %2101 = vmatprep.subr.mxu0 0.0
        %2102 = vmatpush1.msra.mxu0 0.0
        %2103 = vmatprep.subr.mxu0 0.0
        %2104 = vmatpush1.msra.mxu0 0.0
        %2105 = vmatprep.subr.mxu0 0.0
        %2106 = vmatpush1.msra.mxu0 0.0
        %2107 = vmatprep.subr.mxu0 0.0
        %2108 = vmatpush1.msra.mxu0 0.0
        %2109 = vmatprep.subr.mxu0 0.0
        %2110 = vmatpush1.msra.mxu0 %v2068
        %2111 = vmatprep.subr.mxu0 0.0
        %2112 = vmatpush1.msra.mxu0 %v2067
        %2113 = vmatprep.subr.mxu0 0.0
        %2114 = vmatpush1.msra.mxu0 %v2066
        %2115 = vmatprep.subr.mxu0 0.0
        %2116 = vmatpush1.msra.mxu0 %v2065
        %2117 = vmatprep.subr.mxu0 0.0
        %2118 = vmatpush2.msra.mxu0 0.0
        %2119 = vmatprep.subr.mxu0 0.0
        %2120 = vmatpush2.msra.mxu0 0.0
        %2121 = vmatprep.subr.mxu0 0.0
        %2122 = vmatpush2.msra.mxu0 0.0
        %2123 = vmatprep.subr.mxu0 0.0
        %2124 = vmatpush2.msra.mxu0 0.0
        %2125 = vmatprep.subr.mxu0 0.0
        %2126 = vmatpush2.msra.mxu0 0.0
        %2127 = vmatprep.subr.mxu0 0.0
        %2128 = vmatpush2.msra.mxu0 0.0
        %2129 = vmatprep.subr.mxu0 0.0
        %2130 = vmatpush2.msra.mxu0 0.0
        %2131 = vmatprep.subr.mxu0 0.0
        %2132 = vmatpush2.msra.mxu0 0.0
        %2133 = vmatprep.subr.mxu0 0.0
        %2134 = vmatpush2.msra.mxu0 0.0
        %2135 = vmatprep.subr.mxu0 0.0
        %2136 = vmatpush2.msra.mxu0 0.0
        %2137 = vmatprep.subr.mxu0 0.0
        %2138 = vmatpush2.msra.mxu0 0.0
        %2139 = vmatprep.subr.mxu0 0.0
        %2140 = vmatpush2.msra.mxu0 0.0
        %2141 = vmatprep.subr.mxu0 0.0
        %2142 = vmatpush2.msra.mxu0 0.0
        %2143 = vmatprep.subr.mxu0 0.0
        %2144 = vmatpush2.msra.mxu0 0.0
        %2145 = vmatprep.subr.mxu0 0.0
        %2146 = vmatpush2.msra.mxu0 0.0
        %2147 = vmatprep.subr.mxu0 0.0
        %2148 = vmatpush2.msra.mxu0 0.0
        %2149 = vmatprep.mubr.f32.mxu0 0.0
        %2150 = vmatmul.mubr.f32.gmra.mxu0 %v2074
        %v2151 = vpop.f32.mrf.mxu0
        %v2152 = vadd.f32 0.0, %v2151
        %v2153 = vpop.f32.mrf.mxu0
        %2154 = vmatprep.mubr.f32.mxu0 0.0
        %2155 = vmatmul.mubr.f32.gmra.mxu0 %v2077
        %v2156 = vpop.f32.mrf.mxu0
        %v2157 = vadd.f32 0.0, %v2156
        %v2158 = vpop.f32.mrf.mxu0
        %2159 = vmatprep.mubr.f32.mxu0 0.0
        %2160 = vmatmul.mubr.f32.gmra.mxu0 %v2080
        %v2161 = vpop.f32.mrf.mxu0
        %v2162 = vadd.f32 0.0, %v2161
        %v2163 = vpop.f32.mrf.mxu0
        %2164 = vmatprep.mubr.f32.mxu0 0.0
        %2165 = vmatmul.mubr.f32.gmra.mxu0 %v2083
        %v2166 = vpop.f32.mrf.mxu0
        %v2167 = vadd.f32 0.0, %v2166
        %v2168 = vpop.f32.mrf.mxu0
        %2169 = vdwg.mxu0
        %2174 = vrot.lane.b32.xlu0 %v2152, 127
        %v2175 = vpop.permute.xlu0 %2174
        %2176 = vrot.lane.b32.xlu0 %v2157, 127
        %v2177 = vpop.permute.xlu0 %2176
        %2178 = vrot.lane.b32.xlu0 %v2162, 127
        %v2179 = vpop.permute.xlu0 %2178
        %2180 = vrot.lane.b32.xlu0 %v2167, 127
        %v2181 = vpop.permute.xlu0 %2180
        %v2186 = vadd.f32 %v2152, %v2175
        %v2187 = vadd.f32 %v2157, %v2177
        %v2188 = vadd.f32 %v2162, %v2179
        %v2189 = vadd.f32 %v2167, %v2181
        %v2190 = vxor.u32 %v2186, 2147483648
        %v2191 = vxor.u32 %v2187, 2147483648
        %v2192 = vxor.u32 %v2188, 2147483648
        %v2193 = vxor.u32 %v2189, 2147483648
        %v2194 = vmul.f32 %v2190, 1.442695
        %v2195 = vpow.pop %v2194
        %v2196 = vmul.f32 %v2191, 1.442695
        %v2197 = vpow.pop %v2196
        %v2198 = vmul.f32 %v2192, 1.442695
        %v2199 = vpow.pop %v2198
        %v2200 = vmul.f32 %v2193, 1.442695
        %v2201 = vpow.pop %v2200
        %v2202 = vadd.f32 %v2195, 1.0
        %v2203 = vadd.f32 %v2197, 1.0
        %v2204 = vadd.f32 %v2199, 1.0
        %v2205 = vadd.f32 %v2201, 1.0
        %v2206 = vrcp.pop %v2202
        %v2207 = vmul.f32 1.0, %v2206
        %v2208 = vrcp.pop %v2203
        %v2209 = vmul.f32 1.0, %v2208
        %v2210 = vrcp.pop %v2204
        %v2211 = vmul.f32 1.0, %v2210
        %v2212 = vrcp.pop %v2205
        %v2213 = vmul.f32 1.0, %v2212
        %2215 = vset.pattern.permute.xlu0 0
        %2216 = vperm.xlu0 %2215, %v2207
        %v2217 = vpop.permute.xlu0 %2216
        %2220 = vset.pattern.permute.xlu0 0
        %2221 = vperm.xlu0 %2220, %v2209
        %v2222 = vpop.permute.xlu0 %2221
        %2225 = vset.pattern.permute.xlu0 0
        %2226 = vperm.xlu0 %2225, %v2211
        %v2227 = vpop.permute.xlu0 %2226
        %2230 = vset.pattern.permute.xlu0 0
        %2231 = vperm.xlu0 %2230, %v2213
        %v2232 = vpop.permute.xlu0 %2231
        %v2234 = vmul.f32 %v1922, %v2217
        %v2235 = vmul.f32 %v1923, %v2217
        %v2236 = vmul.f32 %v1924, %v2222
        %v2237 = vmul.f32 %v1925, %v2222
        %v2238 = vmul.f32 %v1926, %v2227
        %v2239 = vmul.f32 %v1927, %v2227
        %v2240 = vmul.f32 %v1928, %v2232
        %v2241 = vmul.f32 %v1929, %v2232
        %2242 = vrot.lane.b32.xlu0 %v2234, 17
        %v2243 = vpop.permute.xlu0 %2242
        %2244 = vrot.lane.b32.xlu0 %v2236, 17
        %v2245 = vpop.permute.xlu0 %2244
        %2246 = vrot.lane.b32.xlu0 %v2238, 17
        %v2247 = vpop.permute.xlu0 %2246
        %2248 = vrot.lane.b32.xlu0 %v2240, 17
        %v2249 = vpop.permute.xlu0 %2248
        %2250 = vrot.lane.b32.xlu0 %v2235, 17
        %v2251 = vpop.permute.xlu0 %2250
        %2252 = vrot.lane.b32.xlu0 %v2237, 17
        %v2253 = vpop.permute.xlu0 %2252
        %2254 = vrot.lane.b32.xlu0 %v2239, 17
        %v2255 = vpop.permute.xlu0 %2254
        %2256 = vrot.lane.b32.xlu0 %v2241, 17
        %v2257 = vpop.permute.xlu0 %2256
        %v2258 = vsel %vm591, %v2243, %v2251
        %v2259 = vsel %vm591, %v2245, %v2253
        %v2260 = vsel %vm591, %v2247, %v2255
        %v2261 = vsel %vm591, %v2249, %v2257
        %v2262 = vsel %vm591, %v2251, %v2243
        %v2263 = vsel %vm591, %v2253, %v2245
        %v2264 = vsel %vm591, %v2255, %v2247
        %v2265 = vsel %vm591, %v2257, %v2249
        %v2266 = vsel %vm606, %v2262, 0.0
        %v2267 = vsel %vm607, %v2258, 0.0
        %v2268 = vsel %vm606, %v2263, 0.0
        %v2269 = vsel %vm607, %v2259, 0.0
        %v2270 = vsel %vm606, %v2264, 0.0
        %v2271 = vsel %vm607, %v2260, 0.0
        %v2272 = vsel %vm606, %v2265, 0.0
        %v2273 = vsel %vm607, %v2261, 0.0
        %v2274 = vld [vmem:[%s8] sm:$0xff]
        %v2275 = vld [vmem:[%s8 + $0x8] sm:$0xff]
        %2276 = vrot.lane.b32.xlu0 %v2234, 16
        %v2277 = vpop.permute.xlu0 %2276
        %2278 = vrot.lane.b32.xlu0 %v2236, 16
        %v2279 = vpop.permute.xlu0 %2278
        %2280 = vrot.lane.b32.xlu0 %v2238, 16
        %v2281 = vpop.permute.xlu0 %2280
        %2282 = vrot.lane.b32.xlu0 %v2240, 16
        %v2283 = vpop.permute.xlu0 %2282
        %2284 = vrot.lane.b32.xlu0 %v2235, 16
        %v2285 = vpop.permute.xlu0 %2284
        %2286 = vrot.lane.b32.xlu0 %v2237, 16
        %v2287 = vpop.permute.xlu0 %2286
        %2288 = vrot.lane.b32.xlu0 %v2239, 16
        %v2289 = vpop.permute.xlu0 %2288
        %2290 = vrot.lane.b32.xlu0 %v2241, 16
        %v2291 = vpop.permute.xlu0 %2290
        %v2292 = vsel %vm618, %v2277, %v2285
        %v2293 = vsel %vm618, %v2279, %v2287
        %v2294 = vsel %vm618, %v2281, %v2289
        %v2295 = vsel %vm618, %v2283, %v2291
        %v2296 = vsel %vm618, %v2285, %v2277
        %v2297 = vsel %vm618, %v2287, %v2279
        %v2298 = vsel %vm618, %v2289, %v2281
        %v2299 = vsel %vm618, %v2291, %v2283
        %v2300 = vsel %vm629, %v2296, 0.0
        %v2301 = vsel %vm630, %v2292, 0.0
        %v2302 = vsel %vm629, %v2297, 0.0
        %v2303 = vsel %vm630, %v2293, 0.0
        %v2304 = vsel %vm629, %v2298, 0.0
        %v2305 = vsel %vm630, %v2294, 0.0
        %v2306 = vsel %vm629, %v2299, 0.0
        %v2307 = vsel %vm630, %v2295, 0.0
        %s2308 = scalar_lea.vmem %s8, 16
        %v2309 = vld [vmem:[%s2308] sm:$0xff]
        %v2310 = vld [vmem:[%s2308 + $0x8] sm:$0xff]
        %v2312 = vsel %vm1967, %v2309, 0
        %v2315 = vsel %vm1967, %v2310, 0
        %2317 = vmatprep.subr.mxu0 0.0
        %2318 = vmatpush1.msra.mxu0 0.0
        %2319 = vmatprep.subr.mxu0 0.0
        %2320 = vmatpush1.msra.mxu0 0.0
        %2321 = vmatprep.subr.mxu0 0.0
        %2322 = vmatpush1.msra.mxu0 0.0
        %2323 = vmatprep.subr.mxu0 0.0
        %2324 = vmatpush1.msra.mxu0 0.0
        %2325 = vmatprep.subr.mxu0 0.0
        %2326 = vmatpush1.msra.mxu0 0.0
        %2327 = vmatprep.subr.mxu0 0.0
        %2328 = vmatpush1.msra.mxu0 0.0
        %2329 = vmatprep.subr.mxu0 0.0
        %2330 = vmatpush1.msra.mxu0 0.0
        %2331 = vmatprep.subr.mxu0 0.0
        %2332 = vmatpush1.msra.mxu0 0.0
        %2333 = vmatprep.subr.mxu0 0.0
        %2334 = vmatpush1.msra.mxu0 0.0
        %2335 = vmatprep.subr.mxu0 0.0
        %2336 = vmatpush1.msra.mxu0 0.0
        %2337 = vmatprep.subr.mxu0 0.0
        %2338 = vmatpush1.msra.mxu0 0.0
        %2339 = vmatprep.subr.mxu0 0.0
        %2340 = vmatpush1.msra.mxu0 0.0
        %2341 = vmatprep.subr.mxu0 %v2307
        %2342 = vmatpush1.msra.mxu0 %v2306
        %2343 = vmatprep.subr.mxu0 %v2305
        %2344 = vmatpush1.msra.mxu0 %v2304
        %2345 = vmatprep.subr.mxu0 %v2303
        %2346 = vmatpush1.msra.mxu0 %v2302
        %2347 = vmatprep.subr.mxu0 %v2301
        %2348 = vmatpush1.msra.mxu0 %v2300
        %2349 = vmatprep.subr.mxu0 0.0
        %2350 = vmatpush2.msra.mxu0 0.0
        %2351 = vmatprep.subr.mxu0 0.0
        %2352 = vmatpush2.msra.mxu0 0.0
        %2353 = vmatprep.subr.mxu0 0.0
        %2354 = vmatpush2.msra.mxu0 0.0
        %2355 = vmatprep.subr.mxu0 0.0
        %2356 = vmatpush2.msra.mxu0 0.0
        %2357 = vmatprep.subr.mxu0 0.0
        %2358 = vmatpush2.msra.mxu0 0.0
        %2359 = vmatprep.subr.mxu0 0.0
        %2360 = vmatpush2.msra.mxu0 0.0
        %2361 = vmatprep.subr.mxu0 0.0
        %2362 = vmatpush2.msra.mxu0 0.0
        %2363 = vmatprep.subr.mxu0 0.0
        %2364 = vmatpush2.msra.mxu0 0.0
        %2365 = vmatprep.subr.mxu0 0.0
        %2366 = vmatpush2.msra.mxu0 0.0
        %2367 = vmatprep.subr.mxu0 0.0
        %2368 = vmatpush2.msra.mxu0 0.0
        %2369 = vmatprep.subr.mxu0 0.0
        %2370 = vmatpush2.msra.mxu0 0.0
        %2371 = vmatprep.subr.mxu0 0.0
        %2372 = vmatpush2.msra.mxu0 0.0
        %2373 = vmatprep.subr.mxu0 0.0
        %2374 = vmatpush2.msra.mxu0 0.0
        %2375 = vmatprep.subr.mxu0 0.0
        %2376 = vmatpush2.msra.mxu0 0.0
        %2377 = vmatprep.subr.mxu0 0.0
        %2378 = vmatpush2.msra.mxu0 0.0
        %2379 = vmatprep.subr.mxu0 0.0
        %2380 = vmatpush2.msra.mxu0 0.0
        %2381 = vmatprep.mubr.f32.mxu0 0.0
        %2382 = vmatmul.mubr.f32.gmra.mxu0 %v2312
        %v2383 = vpop.f32.mrf.mxu0
        %v2384 = vadd.f32 0.0, %v2383
        %v2385 = vpop.f32.mrf.mxu0
        %v2386 = vadd.f32 0.0, %v2385
        %2387 = vmatprep.mubr.f32.mxu0 0.0
        %2388 = vmatmul.mubr.f32.gmra.mxu0 %v2315
        %v2389 = vpop.f32.mrf.mxu0
        %v2390 = vadd.f32 0.0, %v2389
        %v2391 = vpop.f32.mrf.mxu0
        %v2392 = vadd.f32 0.0, %v2391
        %2393 = vdwg.mxu0
        %v2395 = vsel %vm1967, %v2274, 0
        %v2398 = vsel %vm1967, %v2275, 0
        %2400 = vmatprep.subr.mxu0 0.0
        %2401 = vmatpush1.msra.mxu0 0.0
        %2402 = vmatprep.subr.mxu0 0.0
        %2403 = vmatpush1.msra.mxu0 0.0
        %2404 = vmatprep.subr.mxu0 0.0
        %2405 = vmatpush1.msra.mxu0 0.0
        %2406 = vmatprep.subr.mxu0 0.0
        %2407 = vmatpush1.msra.mxu0 0.0
        %2408 = vmatprep.subr.mxu0 0.0
        %2409 = vmatpush1.msra.mxu0 0.0
        %2410 = vmatprep.subr.mxu0 0.0
        %2411 = vmatpush1.msra.mxu0 0.0
        %2412 = vmatprep.subr.mxu0 0.0
        %2413 = vmatpush1.msra.mxu0 0.0
        %2414 = vmatprep.subr.mxu0 0.0
        %2415 = vmatpush1.msra.mxu0 0.0
        %2416 = vmatprep.subr.mxu0 0.0
        %2417 = vmatpush1.msra.mxu0 0.0
        %2418 = vmatprep.subr.mxu0 0.0
        %2419 = vmatpush1.msra.mxu0 0.0
        %2420 = vmatprep.subr.mxu0 0.0
        %2421 = vmatpush1.msra.mxu0 0.0
        %2422 = vmatprep.subr.mxu0 0.0
        %2423 = vmatpush1.msra.mxu0 0.0
        %2424 = vmatprep.subr.mxu0 %v2273
        %2425 = vmatpush1.msra.mxu0 %v2272
        %2426 = vmatprep.subr.mxu0 %v2271
        %2427 = vmatpush1.msra.mxu0 %v2270
        %2428 = vmatprep.subr.mxu0 %v2269
        %2429 = vmatpush1.msra.mxu0 %v2268
        %2430 = vmatprep.subr.mxu0 %v2267
        %2431 = vmatpush1.msra.mxu0 %v2266
        %2432 = vmatprep.subr.mxu0 0.0
        %2433 = vmatpush2.msra.mxu0 0.0
        %2434 = vmatprep.subr.mxu0 0.0
        %2435 = vmatpush2.msra.mxu0 0.0
        %2436 = vmatprep.subr.mxu0 0.0
        %2437 = vmatpush2.msra.mxu0 0.0
        %2438 = vmatprep.subr.mxu0 0.0
        %2439 = vmatpush2.msra.mxu0 0.0
        %2440 = vmatprep.subr.mxu0 0.0
        %2441 = vmatpush2.msra.mxu0 0.0
        %2442 = vmatprep.subr.mxu0 0.0
        %2443 = vmatpush2.msra.mxu0 0.0
        %2444 = vmatprep.subr.mxu0 0.0
        %2445 = vmatpush2.msra.mxu0 0.0
        %2446 = vmatprep.subr.mxu0 0.0
        %2447 = vmatpush2.msra.mxu0 0.0
        %2448 = vmatprep.subr.mxu0 0.0
        %2449 = vmatpush2.msra.mxu0 0.0
        %2450 = vmatprep.subr.mxu0 0.0
        %2451 = vmatpush2.msra.mxu0 0.0
        %2452 = vmatprep.subr.mxu0 0.0
        %2453 = vmatpush2.msra.mxu0 0.0
        %2454 = vmatprep.subr.mxu0 0.0
        %2455 = vmatpush2.msra.mxu0 0.0
        %2456 = vmatprep.subr.mxu0 0.0
        %2457 = vmatpush2.msra.mxu0 0.0
        %2458 = vmatprep.subr.mxu0 0.0
        %2459 = vmatpush2.msra.mxu0 0.0
        %2460 = vmatprep.subr.mxu0 0.0
        %2461 = vmatpush2.msra.mxu0 0.0
        %2462 = vmatprep.subr.mxu0 0.0
        %2463 = vmatpush2.msra.mxu0 0.0
        %2464 = vmatprep.mubr.f32.mxu0 0.0
        %2465 = vmatmul.mubr.f32.gmra.mxu0 %v2395
        %v2466 = vpop.f32.mrf.mxu0
        %v2467 = vadd.f32 %v2384, %v2466
        %v2468 = vpop.f32.mrf.mxu0
        %v2469 = vadd.f32 %v2386, %v2468
        %2470 = vmatprep.mubr.f32.mxu0 0.0
        %2471 = vmatmul.mubr.f32.gmra.mxu0 %v2398
        %v2472 = vpop.f32.mrf.mxu0
        %v2473 = vadd.f32 %v2390, %v2472
        %v2474 = vpop.f32.mrf.mxu0
        %v2475 = vadd.f32 %v2392, %v2474
        %2476 = vdwg.mxu0
        %2477 = vrot.lane.b32.xlu0 %v2234, 15
        %v2478 = vpop.permute.xlu0 %2477
        %2479 = vrot.lane.b32.xlu0 %v2236, 15
        %v2480 = vpop.permute.xlu0 %2479
        %2481 = vrot.lane.b32.xlu0 %v2238, 15
        %v2482 = vpop.permute.xlu0 %2481
        %2483 = vrot.lane.b32.xlu0 %v2240, 15
        %v2484 = vpop.permute.xlu0 %2483
        %2485 = vrot.lane.b32.xlu0 %v2235, 15
        %v2486 = vpop.permute.xlu0 %2485
        %2487 = vrot.lane.b32.xlu0 %v2237, 15
        %v2488 = vpop.permute.xlu0 %2487
        %2489 = vrot.lane.b32.xlu0 %v2239, 15
        %v2490 = vpop.permute.xlu0 %2489
        %2491 = vrot.lane.b32.xlu0 %v2241, 15
        %v2492 = vpop.permute.xlu0 %2491
        %v2493 = vsel %vm858, %v2478, %v2486
        %v2494 = vsel %vm858, %v2480, %v2488
        %v2495 = vsel %vm858, %v2482, %v2490
        %v2496 = vsel %vm858, %v2484, %v2492
        %v2497 = vsel %vm858, %v2486, %v2478
        %v2498 = vsel %vm858, %v2488, %v2480
        %v2499 = vsel %vm858, %v2490, %v2482
        %v2500 = vsel %vm858, %v2492, %v2484
        %v2501 = vsel %vm869, %v2497, 0.0
        %v2502 = vsel %vm870, %v2493, 0.0
        %v2503 = vsel %vm869, %v2498, 0.0
        %v2504 = vsel %vm870, %v2494, 0.0
        %v2505 = vsel %vm869, %v2499, 0.0
        %v2506 = vsel %vm870, %v2495, 0.0
        %v2507 = vsel %vm869, %v2500, 0.0
        %v2508 = vsel %vm870, %v2496, 0.0
        %s2509 = scalar_lea.vmem %s8, 32
        %v2510 = vld [vmem:[%s2509] sm:$0xff]
        %v2511 = vld [vmem:[%s2509 + $0x8] sm:$0xff]
        %v2513 = vsel %vm1967, %v2510, 0
        %v2516 = vsel %vm1967, %v2511, 0
        %2518 = vmatprep.subr.mxu0 0.0
        %2519 = vmatpush1.msra.mxu0 0.0
        %2520 = vmatprep.subr.mxu0 0.0
        %2521 = vmatpush1.msra.mxu0 0.0
        %2522 = vmatprep.subr.mxu0 0.0
        %2523 = vmatpush1.msra.mxu0 0.0
        %2524 = vmatprep.subr.mxu0 0.0
        %2525 = vmatpush1.msra.mxu0 0.0
        %2526 = vmatprep.subr.mxu0 0.0
        %2527 = vmatpush1.msra.mxu0 0.0
        %2528 = vmatprep.subr.mxu0 0.0
        %2529 = vmatpush1.msra.mxu0 0.0
        %2530 = vmatprep.subr.mxu0 0.0
        %2531 = vmatpush1.msra.mxu0 0.0
        %2532 = vmatprep.subr.mxu0 0.0
        %2533 = vmatpush1.msra.mxu0 0.0
        %2534 = vmatprep.subr.mxu0 0.0
        %2535 = vmatpush1.msra.mxu0 0.0
        %2536 = vmatprep.subr.mxu0 0.0
        %2537 = vmatpush1.msra.mxu0 0.0
        %2538 = vmatprep.subr.mxu0 0.0
        %2539 = vmatpush1.msra.mxu0 0.0
        %2540 = vmatprep.subr.mxu0 0.0
        %2541 = vmatpush1.msra.mxu0 0.0
        %2542 = vmatprep.subr.mxu0 %v2508
        %2543 = vmatpush1.msra.mxu0 %v2507
        %2544 = vmatprep.subr.mxu0 %v2506
        %2545 = vmatpush1.msra.mxu0 %v2505
        %2546 = vmatprep.subr.mxu0 %v2504
        %2547 = vmatpush1.msra.mxu0 %v2503
        %2548 = vmatprep.subr.mxu0 %v2502
        %2549 = vmatpush1.msra.mxu0 %v2501
        %2550 = vmatprep.subr.mxu0 0.0
        %2551 = vmatpush2.msra.mxu0 0.0
        %2552 = vmatprep.subr.mxu0 0.0
        %2553 = vmatpush2.msra.mxu0 0.0
        %2554 = vmatprep.subr.mxu0 0.0
        %2555 = vmatpush2.msra.mxu0 0.0
        %2556 = vmatprep.subr.mxu0 0.0
        %2557 = vmatpush2.msra.mxu0 0.0
        %2558 = vmatprep.subr.mxu0 0.0
        %2559 = vmatpush2.msra.mxu0 0.0
        %2560 = vmatprep.subr.mxu0 0.0
        %2561 = vmatpush2.msra.mxu0 0.0
        %2562 = vmatprep.subr.mxu0 0.0
        %2563 = vmatpush2.msra.mxu0 0.0
        %2564 = vmatprep.subr.mxu0 0.0
        %2565 = vmatpush2.msra.mxu0 0.0
        %2566 = vmatprep.subr.mxu0 0.0
        %2567 = vmatpush2.msra.mxu0 0.0
        %2568 = vmatprep.subr.mxu0 0.0
        %2569 = vmatpush2.msra.mxu0 0.0
        %2570 = vmatprep.subr.mxu0 0.0
        %2571 = vmatpush2.msra.mxu0 0.0
        %2572 = vmatprep.subr.mxu0 0.0
        %2573 = vmatpush2.msra.mxu0 0.0
        %2574 = vmatprep.subr.mxu0 0.0
        %2575 = vmatpush2.msra.mxu0 0.0
        %2576 = vmatprep.subr.mxu0 0.0
        %2577 = vmatpush2.msra.mxu0 0.0
        %2578 = vmatprep.subr.mxu0 0.0
        %2579 = vmatpush2.msra.mxu0 0.0
        %2580 = vmatprep.subr.mxu0 0.0
        %2581 = vmatpush2.msra.mxu0 0.0
        %2582 = vmatprep.mubr.f32.mxu0 0.0
        %2583 = vmatmul.mubr.f32.gmra.mxu0 %v2513
        %v2584 = vpop.f32.mrf.mxu0
        %v2585 = vadd.f32 0.0, %v2584
        %v2586 = vpop.f32.mrf.mxu0
        %v2587 = vadd.f32 0.0, %v2586
        %2588 = vmatprep.mubr.f32.mxu0 0.0
        %2589 = vmatmul.mubr.f32.gmra.mxu0 %v2516
        %v2590 = vpop.f32.mrf.mxu0
        %v2591 = vadd.f32 0.0, %v2590
        %v2592 = vpop.f32.mrf.mxu0
        %v2593 = vadd.f32 0.0, %v2592
        %2594 = vdwg.mxu0
        %v2595 = vadd.f32 %v2467, %v2585
        %v2596 = vadd.f32 %v2469, %v2587
        %v2597 = vadd.f32 %v2473, %v2591
        %v2598 = vadd.f32 %v2475, %v2593
        %2599 = vrot.lane.b32.xlu0 %v2234, 1
        %v2600 = vpop.permute.xlu0 %2599
        %2601 = vrot.lane.b32.xlu0 %v2236, 1
        %v2602 = vpop.permute.xlu0 %2601
        %2603 = vrot.lane.b32.xlu0 %v2238, 1
        %v2604 = vpop.permute.xlu0 %2603
        %2605 = vrot.lane.b32.xlu0 %v2240, 1
        %v2606 = vpop.permute.xlu0 %2605
        %2607 = vrot.lane.b32.xlu0 %v2235, 1
        %v2608 = vpop.permute.xlu0 %2607
        %2609 = vrot.lane.b32.xlu0 %v2237, 1
        %v2610 = vpop.permute.xlu0 %2609
        %2611 = vrot.lane.b32.xlu0 %v2239, 1
        %v2612 = vpop.permute.xlu0 %2611
        %2613 = vrot.lane.b32.xlu0 %v2241, 1
        %v2614 = vpop.permute.xlu0 %2613
        %v2615 = vsel %vm997, %v2600, %v2608
        %v2616 = vsel %vm997, %v2602, %v2610
        %v2617 = vsel %vm997, %v2604, %v2612
        %v2618 = vsel %vm997, %v2606, %v2614
        %v2619 = vsel %vm997, %v2608, %v2600
        %v2620 = vsel %vm997, %v2610, %v2602
        %v2621 = vsel %vm997, %v2612, %v2604
        %v2622 = vsel %vm997, %v2614, %v2606
        %v2623 = vsel %vm1008, %v2619, 0.0
        %v2624 = vsel %vm1009, %v2615, 0.0
        %v2625 = vsel %vm1008, %v2620, 0.0
        %v2626 = vsel %vm1009, %v2616, 0.0
        %v2627 = vsel %vm1008, %v2621, 0.0
        %v2628 = vsel %vm1009, %v2617, 0.0
        %v2629 = vsel %vm1008, %v2622, 0.0
        %v2630 = vsel %vm1009, %v2618, 0.0
        %s2631 = scalar_lea.vmem %s8, 48
        %v2632 = vld [vmem:[%s2631] sm:$0xff]
        %v2633 = vld [vmem:[%s2631 + $0x8] sm:$0xff]
        %v2635 = vsel %vm1967, %v2632, 0
        %v2638 = vsel %vm1967, %v2633, 0
        %2640 = vmatprep.subr.mxu0 0.0
        %2641 = vmatpush1.msra.mxu0 0.0
        %2642 = vmatprep.subr.mxu0 0.0
        %2643 = vmatpush1.msra.mxu0 0.0
        %2644 = vmatprep.subr.mxu0 0.0
        %2645 = vmatpush1.msra.mxu0 0.0
        %2646 = vmatprep.subr.mxu0 0.0
        %2647 = vmatpush1.msra.mxu0 0.0
        %2648 = vmatprep.subr.mxu0 0.0
        %2649 = vmatpush1.msra.mxu0 0.0
        %2650 = vmatprep.subr.mxu0 0.0
        %2651 = vmatpush1.msra.mxu0 0.0
        %2652 = vmatprep.subr.mxu0 0.0
        %2653 = vmatpush1.msra.mxu0 0.0
        %2654 = vmatprep.subr.mxu0 0.0
        %2655 = vmatpush1.msra.mxu0 0.0
        %2656 = vmatprep.subr.mxu0 0.0
        %2657 = vmatpush1.msra.mxu0 0.0
        %2658 = vmatprep.subr.mxu0 0.0
        %2659 = vmatpush1.msra.mxu0 0.0
        %2660 = vmatprep.subr.mxu0 0.0
        %2661 = vmatpush1.msra.mxu0 0.0
        %2662 = vmatprep.subr.mxu0 0.0
        %2663 = vmatpush1.msra.mxu0 0.0
        %2664 = vmatprep.subr.mxu0 %v2630
        %2665 = vmatpush1.msra.mxu0 %v2629
        %2666 = vmatprep.subr.mxu0 %v2628
        %2667 = vmatpush1.msra.mxu0 %v2627
        %2668 = vmatprep.subr.mxu0 %v2626
        %2669 = vmatpush1.msra.mxu0 %v2625
        %2670 = vmatprep.subr.mxu0 %v2624
        %2671 = vmatpush1.msra.mxu0 %v2623
        %2672 = vmatprep.subr.mxu0 0.0
        %2673 = vmatpush2.msra.mxu0 0.0
        %2674 = vmatprep.subr.mxu0 0.0
        %2675 = vmatpush2.msra.mxu0 0.0
        %2676 = vmatprep.subr.mxu0 0.0
        %2677 = vmatpush2.msra.mxu0 0.0
        %2678 = vmatprep.subr.mxu0 0.0
        %2679 = vmatpush2.msra.mxu0 0.0
        %2680 = vmatprep.subr.mxu0 0.0
        %2681 = vmatpush2.msra.mxu0 0.0
        %2682 = vmatprep.subr.mxu0 0.0
        %2683 = vmatpush2.msra.mxu0 0.0
        %2684 = vmatprep.subr.mxu0 0.0
        %2685 = vmatpush2.msra.mxu0 0.0
        %2686 = vmatprep.subr.mxu0 0.0
        %2687 = vmatpush2.msra.mxu0 0.0
        %2688 = vmatprep.subr.mxu0 0.0
        %2689 = vmatpush2.msra.mxu0 0.0
        %2690 = vmatprep.subr.mxu0 0.0
        %2691 = vmatpush2.msra.mxu0 0.0
        %2692 = vmatprep.subr.mxu0 0.0
        %2693 = vmatpush2.msra.mxu0 0.0
        %2694 = vmatprep.subr.mxu0 0.0
        %2695 = vmatpush2.msra.mxu0 0.0
        %2696 = vmatprep.subr.mxu0 0.0
        %2697 = vmatpush2.msra.mxu0 0.0
        %2698 = vmatprep.subr.mxu0 0.0
        %2699 = vmatpush2.msra.mxu0 0.0
        %2700 = vmatprep.subr.mxu0 0.0
        %2701 = vmatpush2.msra.mxu0 0.0
        %2702 = vmatprep.subr.mxu0 0.0
        %2703 = vmatpush2.msra.mxu0 0.0
        %2704 = vmatprep.mubr.f32.mxu0 0.0
        %2705 = vmatmul.mubr.f32.gmra.mxu0 %v2635
        %v2706 = vpop.f32.mrf.mxu0
        %v2707 = vadd.f32 0.0, %v2706
        %v2708 = vpop.f32.mrf.mxu0
        %v2709 = vadd.f32 0.0, %v2708
        %2710 = vmatprep.mubr.f32.mxu0 0.0
        %2711 = vmatmul.mubr.f32.gmra.mxu0 %v2638
        %v2712 = vpop.f32.mrf.mxu0
        %v2713 = vadd.f32 0.0, %v2712
        %v2714 = vpop.f32.mrf.mxu0
        %v2715 = vadd.f32 0.0, %v2714
        %2716 = vdwg.mxu0
        %v2717 = vadd.f32 %v2595, %v2707
        %v2718 = vadd.f32 %v2596, %v2709
        %v2719 = vadd.f32 %v2597, %v2713
        %v2720 = vadd.f32 %v2598, %v2715
        %s2721 = scalar_lea.vmem %s8, 64
        %v2722 = vld [vmem:[%s2721] sm:$0xff]
        %v2723 = vld [vmem:[%s2721 + $0x8] sm:$0xff]
        %v2725 = vsel %vm1967, %v2722, 0
        %v2728 = vsel %vm1967, %v2723, 0
        %2730 = vmatprep.subr.mxu0 0.0
        %2731 = vmatpush1.msra.mxu0 0.0
        %2732 = vmatprep.subr.mxu0 0.0
        %2733 = vmatpush1.msra.mxu0 0.0
        %2734 = vmatprep.subr.mxu0 0.0
        %2735 = vmatpush1.msra.mxu0 0.0
        %2736 = vmatprep.subr.mxu0 0.0
        %2737 = vmatpush1.msra.mxu0 0.0
        %2738 = vmatprep.subr.mxu0 0.0
        %2739 = vmatpush1.msra.mxu0 0.0
        %2740 = vmatprep.subr.mxu0 0.0
        %2741 = vmatpush1.msra.mxu0 0.0
        %2742 = vmatprep.subr.mxu0 0.0
        %2743 = vmatpush1.msra.mxu0 0.0
        %2744 = vmatprep.subr.mxu0 0.0
        %2745 = vmatpush1.msra.mxu0 0.0
        %2746 = vmatprep.subr.mxu0 0.0
        %2747 = vmatpush1.msra.mxu0 0.0
        %2748 = vmatprep.subr.mxu0 0.0
        %2749 = vmatpush1.msra.mxu0 0.0
        %2750 = vmatprep.subr.mxu0 0.0
        %2751 = vmatpush1.msra.mxu0 0.0
        %2752 = vmatprep.subr.mxu0 0.0
        %2753 = vmatpush1.msra.mxu0 0.0
        %2754 = vmatprep.subr.mxu0 %v2241
        %2755 = vmatpush1.msra.mxu0 %v2240
        %2756 = vmatprep.subr.mxu0 %v2239
        %2757 = vmatpush1.msra.mxu0 %v2238
        %2758 = vmatprep.subr.mxu0 %v2237
        %2759 = vmatpush1.msra.mxu0 %v2236
        %2760 = vmatprep.subr.mxu0 %v2235
        %2761 = vmatpush1.msra.mxu0 %v2234
        %2762 = vmatprep.subr.mxu0 0.0
        %2763 = vmatpush2.msra.mxu0 0.0
        %2764 = vmatprep.subr.mxu0 0.0
        %2765 = vmatpush2.msra.mxu0 0.0
        %2766 = vmatprep.subr.mxu0 0.0
        %2767 = vmatpush2.msra.mxu0 0.0
        %2768 = vmatprep.subr.mxu0 0.0
        %2769 = vmatpush2.msra.mxu0 0.0
        %2770 = vmatprep.subr.mxu0 0.0
        %2771 = vmatpush2.msra.mxu0 0.0
        %2772 = vmatprep.subr.mxu0 0.0
        %2773 = vmatpush2.msra.mxu0 0.0
        %2774 = vmatprep.subr.mxu0 0.0
        %2775 = vmatpush2.msra.mxu0 0.0
        %2776 = vmatprep.subr.mxu0 0.0
        %2777 = vmatpush2.msra.mxu0 0.0
        %2778 = vmatprep.subr.mxu0 0.0
        %2779 = vmatpush2.msra.mxu0 0.0
        %2780 = vmatprep.subr.mxu0 0.0
        %2781 = vmatpush2.msra.mxu0 0.0
        %2782 = vmatprep.subr.mxu0 0.0
        %2783 = vmatpush2.msra.mxu0 0.0
        %2784 = vmatprep.subr.mxu0 0.0
        %2785 = vmatpush2.msra.mxu0 0.0
        %2786 = vmatprep.subr.mxu0 0.0
        %2787 = vmatpush2.msra.mxu0 0.0
        %2788 = vmatprep.subr.mxu0 0.0
        %2789 = vmatpush2.msra.mxu0 0.0
        %2790 = vmatprep.subr.mxu0 0.0
        %2791 = vmatpush2.msra.mxu0 0.0
        %2792 = vmatprep.subr.mxu0 0.0
        %2793 = vmatpush2.msra.mxu0 0.0
        %2794 = vmatprep.mubr.f32.mxu0 0.0
        %2795 = vmatmul.mubr.f32.gmra.mxu0 %v2725
        %v2796 = vpop.f32.mrf.mxu0
        %v2797 = vadd.f32 0.0, %v2796
        %v2798 = vpop.f32.mrf.mxu0
        %v2799 = vadd.f32 0.0, %v2798
        %2800 = vmatprep.mubr.f32.mxu0 0.0
        %2801 = vmatmul.mubr.f32.gmra.mxu0 %v2728
        %v2802 = vpop.f32.mrf.mxu0
        %v2803 = vadd.f32 0.0, %v2802
        %v2804 = vpop.f32.mrf.mxu0
        %v2805 = vadd.f32 0.0, %v2804
        %2806 = vdwg.mxu0
        %v2807 = vadd.f32 %v2717, %v2797
        %v2808 = vadd.f32 %v2718, %v2799
        %v2809 = vadd.f32 %v2719, %v2803
        %v2810 = vadd.f32 %v2720, %v2805
        %2811 = vrot.lane.b32.xlu0 %v2234, 127
        %v2812 = vpop.permute.xlu0 %2811
        %2813 = vrot.lane.b32.xlu0 %v2236, 127
        %v2814 = vpop.permute.xlu0 %2813
        %2815 = vrot.lane.b32.xlu0 %v2238, 127
        %v2816 = vpop.permute.xlu0 %2815
        %2817 = vrot.lane.b32.xlu0 %v2240, 127
        %v2818 = vpop.permute.xlu0 %2817
        %2819 = vrot.lane.b32.xlu0 %v2235, 127
        %v2820 = vpop.permute.xlu0 %2819
        %2821 = vrot.lane.b32.xlu0 %v2237, 127
        %v2822 = vpop.permute.xlu0 %2821
        %2823 = vrot.lane.b32.xlu0 %v2239, 127
        %v2824 = vpop.permute.xlu0 %2823
        %2825 = vrot.lane.b32.xlu0 %v2241, 127
        %v2826 = vpop.permute.xlu0 %2825
        %v2827 = vsel %vm1254, %v2812, %v2820
        %v2828 = vsel %vm1254, %v2814, %v2822
        %v2829 = vsel %vm1254, %v2816, %v2824
        %v2830 = vsel %vm1254, %v2818, %v2826
        %v2831 = vsel %vm1254, %v2820, %v2812
        %v2832 = vsel %vm1254, %v2822, %v2814
        %v2833 = vsel %vm1254, %v2824, %v2816
        %v2834 = vsel %vm1254, %v2826, %v2818
        %v2835 = vsel %vm1265, %v2827, 0.0
        %v2836 = vsel %vm1266, %v2831, 0.0
        %v2837 = vsel %vm1265, %v2828, 0.0
        %v2838 = vsel %vm1266, %v2832, 0.0
        %v2839 = vsel %vm1265, %v2829, 0.0
        %v2840 = vsel %vm1266, %v2833, 0.0
        %v2841 = vsel %vm1265, %v2830, 0.0
        %v2842 = vsel %vm1266, %v2834, 0.0
        %s2843 = scalar_lea.vmem %s8, 80
        %v2844 = vld [vmem:[%s2843] sm:$0xff]
        %v2845 = vld [vmem:[%s2843 + $0x8] sm:$0xff]
        %v2847 = vsel %vm1967, %v2844, 0
        %v2850 = vsel %vm1967, %v2845, 0
        %2852 = vmatprep.subr.mxu0 0.0
        %2853 = vmatpush1.msra.mxu0 0.0
        %2854 = vmatprep.subr.mxu0 0.0
        %2855 = vmatpush1.msra.mxu0 0.0
        %2856 = vmatprep.subr.mxu0 0.0
        %2857 = vmatpush1.msra.mxu0 0.0
        %2858 = vmatprep.subr.mxu0 0.0
        %2859 = vmatpush1.msra.mxu0 0.0
        %2860 = vmatprep.subr.mxu0 0.0
        %2861 = vmatpush1.msra.mxu0 0.0
        %2862 = vmatprep.subr.mxu0 0.0
        %2863 = vmatpush1.msra.mxu0 0.0
        %2864 = vmatprep.subr.mxu0 0.0
        %2865 = vmatpush1.msra.mxu0 0.0
        %2866 = vmatprep.subr.mxu0 0.0
        %2867 = vmatpush1.msra.mxu0 0.0
        %2868 = vmatprep.subr.mxu0 0.0
        %2869 = vmatpush1.msra.mxu0 0.0
        %2870 = vmatprep.subr.mxu0 0.0
        %2871 = vmatpush1.msra.mxu0 0.0
        %2872 = vmatprep.subr.mxu0 0.0
        %2873 = vmatpush1.msra.mxu0 0.0
        %2874 = vmatprep.subr.mxu0 0.0
        %2875 = vmatpush1.msra.mxu0 0.0
        %2876 = vmatprep.subr.mxu0 %v2842
        %2877 = vmatpush1.msra.mxu0 %v2841
        %2878 = vmatprep.subr.mxu0 %v2840
        %2879 = vmatpush1.msra.mxu0 %v2839
        %2880 = vmatprep.subr.mxu0 %v2838
        %2881 = vmatpush1.msra.mxu0 %v2837
        %2882 = vmatprep.subr.mxu0 %v2836
        %2883 = vmatpush1.msra.mxu0 %v2835
        %2884 = vmatprep.subr.mxu0 0.0
        %2885 = vmatpush2.msra.mxu0 0.0
        %2886 = vmatprep.subr.mxu0 0.0
        %2887 = vmatpush2.msra.mxu0 0.0
        %2888 = vmatprep.subr.mxu0 0.0
        %2889 = vmatpush2.msra.mxu0 0.0
        %2890 = vmatprep.subr.mxu0 0.0
        %2891 = vmatpush2.msra.mxu0 0.0
        %2892 = vmatprep.subr.mxu0 0.0
        %2893 = vmatpush2.msra.mxu0 0.0
        %2894 = vmatprep.subr.mxu0 0.0
        %2895 = vmatpush2.msra.mxu0 0.0
        %2896 = vmatprep.subr.mxu0 0.0
        %2897 = vmatpush2.msra.mxu0 0.0
        %2898 = vmatprep.subr.mxu0 0.0
        %2899 = vmatpush2.msra.mxu0 0.0
        %2900 = vmatprep.subr.mxu0 0.0
        %2901 = vmatpush2.msra.mxu0 0.0
        %2902 = vmatprep.subr.mxu0 0.0
        %2903 = vmatpush2.msra.mxu0 0.0
        %2904 = vmatprep.subr.mxu0 0.0
        %2905 = vmatpush2.msra.mxu0 0.0
        %2906 = vmatprep.subr.mxu0 0.0
        %2907 = vmatpush2.msra.mxu0 0.0
        %2908 = vmatprep.subr.mxu0 0.0
        %2909 = vmatpush2.msra.mxu0 0.0
        %2910 = vmatprep.subr.mxu0 0.0
        %2911 = vmatpush2.msra.mxu0 0.0
        %2912 = vmatprep.subr.mxu0 0.0
        %2913 = vmatpush2.msra.mxu0 0.0
        %2914 = vmatprep.subr.mxu0 0.0
        %2915 = vmatpush2.msra.mxu0 0.0
        %2916 = vmatprep.mubr.f32.mxu0 0.0
        %2917 = vmatmul.mubr.f32.gmra.mxu0 %v2847
        %v2918 = vpop.f32.mrf.mxu0
        %v2919 = vadd.f32 0.0, %v2918
        %v2920 = vpop.f32.mrf.mxu0
        %v2921 = vadd.f32 0.0, %v2920
        %2922 = vmatprep.mubr.f32.mxu0 0.0
        %2923 = vmatmul.mubr.f32.gmra.mxu0 %v2850
        %v2924 = vpop.f32.mrf.mxu0
        %v2925 = vadd.f32 0.0, %v2924
        %v2926 = vpop.f32.mrf.mxu0
        %v2927 = vadd.f32 0.0, %v2926
        %2928 = vdwg.mxu0
        %v2929 = vadd.f32 %v2807, %v2919
        %v2930 = vadd.f32 %v2808, %v2921
        %v2931 = vadd.f32 %v2809, %v2925
        %v2932 = vadd.f32 %v2810, %v2927
        %2933 = vrot.lane.b32.xlu0 %v2234, 113
        %v2934 = vpop.permute.xlu0 %2933
        %2935 = vrot.lane.b32.xlu0 %v2236, 113
        %v2936 = vpop.permute.xlu0 %2935
        %2937 = vrot.lane.b32.xlu0 %v2238, 113
        %v2938 = vpop.permute.xlu0 %2937
        %2939 = vrot.lane.b32.xlu0 %v2240, 113
        %v2940 = vpop.permute.xlu0 %2939
        %2941 = vrot.lane.b32.xlu0 %v2235, 113
        %v2942 = vpop.permute.xlu0 %2941
        %2943 = vrot.lane.b32.xlu0 %v2237, 113
        %v2944 = vpop.permute.xlu0 %2943
        %2945 = vrot.lane.b32.xlu0 %v2239, 113
        %v2946 = vpop.permute.xlu0 %2945
        %2947 = vrot.lane.b32.xlu0 %v2241, 113
        %v2948 = vpop.permute.xlu0 %2947
        %v2949 = vsel %vm1393, %v2934, %v2942
        %v2950 = vsel %vm1393, %v2936, %v2944
        %v2951 = vsel %vm1393, %v2938, %v2946
        %v2952 = vsel %vm1393, %v2940, %v2948
        %v2953 = vsel %vm1393, %v2942, %v2934
        %v2954 = vsel %vm1393, %v2944, %v2936
        %v2955 = vsel %vm1393, %v2946, %v2938
        %v2956 = vsel %vm1393, %v2948, %v2940
        %v2957 = vsel %vm1404, %v2949, 0.0
        %v2958 = vsel %vm1405, %v2953, 0.0
        %v2959 = vsel %vm1404, %v2950, 0.0
        %v2960 = vsel %vm1405, %v2954, 0.0
        %v2961 = vsel %vm1404, %v2951, 0.0
        %v2962 = vsel %vm1405, %v2955, 0.0
        %v2963 = vsel %vm1404, %v2952, 0.0
        %v2964 = vsel %vm1405, %v2956, 0.0
        %s2965 = scalar_lea.vmem %s8, 96
        %v2966 = vld [vmem:[%s2965] sm:$0xff]
        %v2967 = vld [vmem:[%s2965 + $0x8] sm:$0xff]
        %v2969 = vsel %vm1967, %v2966, 0
        %v2972 = vsel %vm1967, %v2967, 0
        %2974 = vmatprep.subr.mxu0 0.0
        %2975 = vmatpush1.msra.mxu0 0.0
        %2976 = vmatprep.subr.mxu0 0.0
        %2977 = vmatpush1.msra.mxu0 0.0
        %2978 = vmatprep.subr.mxu0 0.0
        %2979 = vmatpush1.msra.mxu0 0.0
        %2980 = vmatprep.subr.mxu0 0.0
        %2981 = vmatpush1.msra.mxu0 0.0
        %2982 = vmatprep.subr.mxu0 0.0
        %2983 = vmatpush1.msra.mxu0 0.0
        %2984 = vmatprep.subr.mxu0 0.0
        %2985 = vmatpush1.msra.mxu0 0.0
        %2986 = vmatprep.subr.mxu0 0.0
        %2987 = vmatpush1.msra.mxu0 0.0
        %2988 = vmatprep.subr.mxu0 0.0
        %2989 = vmatpush1.msra.mxu0 0.0
        %2990 = vmatprep.subr.mxu0 0.0
        %2991 = vmatpush1.msra.mxu0 0.0
        %2992 = vmatprep.subr.mxu0 0.0
        %2993 = vmatpush1.msra.mxu0 0.0
        %2994 = vmatprep.subr.mxu0 0.0
        %2995 = vmatpush1.msra.mxu0 0.0
        %2996 = vmatprep.subr.mxu0 0.0
        %2997 = vmatpush1.msra.mxu0 0.0
        %2998 = vmatprep.subr.mxu0 %v2964
        %2999 = vmatpush1.msra.mxu0 %v2963
        %3000 = vmatprep.subr.mxu0 %v2962
        %3001 = vmatpush1.msra.mxu0 %v2961
        %3002 = vmatprep.subr.mxu0 %v2960
        %3003 = vmatpush1.msra.mxu0 %v2959
        %3004 = vmatprep.subr.mxu0 %v2958
        %3005 = vmatpush1.msra.mxu0 %v2957
        %3006 = vmatprep.subr.mxu0 0.0
        %3007 = vmatpush2.msra.mxu0 0.0
        %3008 = vmatprep.subr.mxu0 0.0
        %3009 = vmatpush2.msra.mxu0 0.0
        %3010 = vmatprep.subr.mxu0 0.0
        %3011 = vmatpush2.msra.mxu0 0.0
        %3012 = vmatprep.subr.mxu0 0.0
        %3013 = vmatpush2.msra.mxu0 0.0
        %3014 = vmatprep.subr.mxu0 0.0
        %3015 = vmatpush2.msra.mxu0 0.0
        %3016 = vmatprep.subr.mxu0 0.0
        %3017 = vmatpush2.msra.mxu0 0.0
        %3018 = vmatprep.subr.mxu0 0.0
        %3019 = vmatpush2.msra.mxu0 0.0
        %3020 = vmatprep.subr.mxu0 0.0
        %3021 = vmatpush2.msra.mxu0 0.0
        %3022 = vmatprep.subr.mxu0 0.0
        %3023 = vmatpush2.msra.mxu0 0.0
        %3024 = vmatprep.subr.mxu0 0.0
        %3025 = vmatpush2.msra.mxu0 0.0
        %3026 = vmatprep.subr.mxu0 0.0
        %3027 = vmatpush2.msra.mxu0 0.0
        %3028 = vmatprep.subr.mxu0 0.0
        %3029 = vmatpush2.msra.mxu0 0.0
        %3030 = vmatprep.subr.mxu0 0.0
        %3031 = vmatpush2.msra.mxu0 0.0
        %3032 = vmatprep.subr.mxu0 0.0
        %3033 = vmatpush2.msra.mxu0 0.0
        %3034 = vmatprep.subr.mxu0 0.0
        %3035 = vmatpush2.msra.mxu0 0.0
        %3036 = vmatprep.subr.mxu0 0.0
        %3037 = vmatpush2.msra.mxu0 0.0
        %3038 = vmatprep.mubr.f32.mxu0 0.0
        %3039 = vmatmul.mubr.f32.gmra.mxu0 %v2969
        %v3040 = vpop.f32.mrf.mxu0
        %v3041 = vadd.f32 0.0, %v3040
        %v3042 = vpop.f32.mrf.mxu0
        %v3043 = vadd.f32 0.0, %v3042
        %3044 = vmatprep.mubr.f32.mxu0 0.0
        %3045 = vmatmul.mubr.f32.gmra.mxu0 %v2972
        %v3046 = vpop.f32.mrf.mxu0
        %v3047 = vadd.f32 0.0, %v3046
        %v3048 = vpop.f32.mrf.mxu0
        %v3049 = vadd.f32 0.0, %v3048
        %3050 = vdwg.mxu0
        %v3051 = vadd.f32 %v2929, %v3041
        %v3052 = vadd.f32 %v2930, %v3043
        %v3053 = vadd.f32 %v2931, %v3047
        %v3054 = vadd.f32 %v2932, %v3049
        %3055 = vrot.lane.b32.xlu0 %v2234, 112
        %v3056 = vpop.permute.xlu0 %3055
        %3057 = vrot.lane.b32.xlu0 %v2236, 112
        %v3058 = vpop.permute.xlu0 %3057
        %3059 = vrot.lane.b32.xlu0 %v2238, 112
        %v3060 = vpop.permute.xlu0 %3059
        %3061 = vrot.lane.b32.xlu0 %v2240, 112
        %v3062 = vpop.permute.xlu0 %3061
        %3063 = vrot.lane.b32.xlu0 %v2235, 112
        %v3064 = vpop.permute.xlu0 %3063
        %3065 = vrot.lane.b32.xlu0 %v2237, 112
        %v3066 = vpop.permute.xlu0 %3065
        %3067 = vrot.lane.b32.xlu0 %v2239, 112
        %v3068 = vpop.permute.xlu0 %3067
        %3069 = vrot.lane.b32.xlu0 %v2241, 112
        %v3070 = vpop.permute.xlu0 %3069
        %v3071 = vsel %vm1532, %v3056, %v3064
        %v3072 = vsel %vm1532, %v3058, %v3066
        %v3073 = vsel %vm1532, %v3060, %v3068
        %v3074 = vsel %vm1532, %v3062, %v3070
        %v3075 = vsel %vm1532, %v3064, %v3056
        %v3076 = vsel %vm1532, %v3066, %v3058
        %v3077 = vsel %vm1532, %v3068, %v3060
        %v3078 = vsel %vm1532, %v3070, %v3062
        %v3079 = vsel %vm1543, %v3071, 0.0
        %v3080 = vsel %vm1544, %v3075, 0.0
        %v3081 = vsel %vm1543, %v3072, 0.0
        %v3082 = vsel %vm1544, %v3076, 0.0
        %v3083 = vsel %vm1543, %v3073, 0.0
        %v3084 = vsel %vm1544, %v3077, 0.0
        %v3085 = vsel %vm1543, %v3074, 0.0
        %v3086 = vsel %vm1544, %v3078, 0.0
        %s3087 = scalar_lea.vmem %s8, 112
        %v3088 = vld [vmem:[%s3087] sm:$0xff]
        %v3089 = vld [vmem:[%s3087 + $0x8] sm:$0xff]
        %v3091 = vsel %vm1967, %v3088, 0
        %v3094 = vsel %vm1967, %v3089, 0
        %3096 = vmatprep.subr.mxu0 0.0
        %3097 = vmatpush1.msra.mxu0 0.0
        %3098 = vmatprep.subr.mxu0 0.0
        %3099 = vmatpush1.msra.mxu0 0.0
        %3100 = vmatprep.subr.mxu0 0.0
        %3101 = vmatpush1.msra.mxu0 0.0
        %3102 = vmatprep.subr.mxu0 0.0
        %3103 = vmatpush1.msra.mxu0 0.0
        %3104 = vmatprep.subr.mxu0 0.0
        %3105 = vmatpush1.msra.mxu0 0.0
        %3106 = vmatprep.subr.mxu0 0.0
        %3107 = vmatpush1.msra.mxu0 0.0
        %3108 = vmatprep.subr.mxu0 0.0
        %3109 = vmatpush1.msra.mxu0 0.0
        %3110 = vmatprep.subr.mxu0 0.0
        %3111 = vmatpush1.msra.mxu0 0.0
        %3112 = vmatprep.subr.mxu0 0.0
        %3113 = vmatpush1.msra.mxu0 0.0
        %3114 = vmatprep.subr.mxu0 0.0
        %3115 = vmatpush1.msra.mxu0 0.0
        %3116 = vmatprep.subr.mxu0 0.0
        %3117 = vmatpush1.msra.mxu0 0.0
        %3118 = vmatprep.subr.mxu0 0.0
        %3119 = vmatpush1.msra.mxu0 0.0
        %3120 = vmatprep.subr.mxu0 %v3086
        %3121 = vmatpush1.msra.mxu0 %v3085
        %3122 = vmatprep.subr.mxu0 %v3084
        %3123 = vmatpush1.msra.mxu0 %v3083
        %3124 = vmatprep.subr.mxu0 %v3082
        %3125 = vmatpush1.msra.mxu0 %v3081
        %3126 = vmatprep.subr.mxu0 %v3080
        %3127 = vmatpush1.msra.mxu0 %v3079
        %3128 = vmatprep.subr.mxu0 0.0
        %3129 = vmatpush2.msra.mxu0 0.0
        %3130 = vmatprep.subr.mxu0 0.0
        %3131 = vmatpush2.msra.mxu0 0.0
        %3132 = vmatprep.subr.mxu0 0.0
        %3133 = vmatpush2.msra.mxu0 0.0
        %3134 = vmatprep.subr.mxu0 0.0
        %3135 = vmatpush2.msra.mxu0 0.0
        %3136 = vmatprep.subr.mxu0 0.0
        %3137 = vmatpush2.msra.mxu0 0.0
        %3138 = vmatprep.subr.mxu0 0.0
        %3139 = vmatpush2.msra.mxu0 0.0
        %3140 = vmatprep.subr.mxu0 0.0
        %3141 = vmatpush2.msra.mxu0 0.0
        %3142 = vmatprep.subr.mxu0 0.0
        %3143 = vmatpush2.msra.mxu0 0.0
        %3144 = vmatprep.subr.mxu0 0.0
        %3145 = vmatpush2.msra.mxu0 0.0
        %3146 = vmatprep.subr.mxu0 0.0
        %3147 = vmatpush2.msra.mxu0 0.0
        %3148 = vmatprep.subr.mxu0 0.0
        %3149 = vmatpush2.msra.mxu0 0.0
        %3150 = vmatprep.subr.mxu0 0.0
        %3151 = vmatpush2.msra.mxu0 0.0
        %3152 = vmatprep.subr.mxu0 0.0
        %3153 = vmatpush2.msra.mxu0 0.0
        %3154 = vmatprep.subr.mxu0 0.0
        %3155 = vmatpush2.msra.mxu0 0.0
        %3156 = vmatprep.subr.mxu0 0.0
        %3157 = vmatpush2.msra.mxu0 0.0
        %3158 = vmatprep.subr.mxu0 0.0
        %3159 = vmatpush2.msra.mxu0 0.0
        %3160 = vmatprep.mubr.f32.mxu0 0.0
        %3161 = vmatmul.mubr.f32.gmra.mxu0 %v3091
        %v3162 = vpop.f32.mrf.mxu0
        %v3163 = vadd.f32 0.0, %v3162
        %v3164 = vpop.f32.mrf.mxu0
        %v3165 = vadd.f32 0.0, %v3164
        %3166 = vmatprep.mubr.f32.mxu0 0.0
        %3167 = vmatmul.mubr.f32.gmra.mxu0 %v3094
        %v3168 = vpop.f32.mrf.mxu0
        %v3169 = vadd.f32 0.0, %v3168
        %v3170 = vpop.f32.mrf.mxu0
        %v3171 = vadd.f32 0.0, %v3170
        %3172 = vdwg.mxu0
        %v3173 = vadd.f32 %v3051, %v3163
        %v3174 = vadd.f32 %v3052, %v3165
        %v3175 = vadd.f32 %v3053, %v3169
        %v3176 = vadd.f32 %v3054, %v3171
        %3177 = vrot.lane.b32.xlu0 %v2234, 111
        %v3178 = vpop.permute.xlu0 %3177
        %3179 = vrot.lane.b32.xlu0 %v2236, 111
        %v3180 = vpop.permute.xlu0 %3179
        %3181 = vrot.lane.b32.xlu0 %v2238, 111
        %v3182 = vpop.permute.xlu0 %3181
        %3183 = vrot.lane.b32.xlu0 %v2240, 111
        %v3184 = vpop.permute.xlu0 %3183
        %3185 = vrot.lane.b32.xlu0 %v2235, 111
        %v3186 = vpop.permute.xlu0 %3185
        %3187 = vrot.lane.b32.xlu0 %v2237, 111
        %v3188 = vpop.permute.xlu0 %3187
        %3189 = vrot.lane.b32.xlu0 %v2239, 111
        %v3190 = vpop.permute.xlu0 %3189
        %3191 = vrot.lane.b32.xlu0 %v2241, 111
        %v3192 = vpop.permute.xlu0 %3191
        %v3193 = vsel %vm1671, %v3178, %v3186
        %v3194 = vsel %vm1671, %v3180, %v3188
        %v3195 = vsel %vm1671, %v3182, %v3190
        %v3196 = vsel %vm1671, %v3184, %v3192
        %v3197 = vsel %vm1671, %v3186, %v3178
        %v3198 = vsel %vm1671, %v3188, %v3180
        %v3199 = vsel %vm1671, %v3190, %v3182
        %v3200 = vsel %vm1671, %v3192, %v3184
        %v3201 = vsel %vm1686, %v3193, 0.0
        %v3202 = vsel %vm1687, %v3197, 0.0
        %v3203 = vsel %vm1686, %v3194, 0.0
        %v3204 = vsel %vm1687, %v3198, 0.0
        %v3205 = vsel %vm1686, %v3195, 0.0
        %v3206 = vsel %vm1687, %v3199, 0.0
        %v3207 = vsel %vm1686, %v3196, 0.0
        %v3208 = vsel %vm1687, %v3200, 0.0
        %s3209 = scalar_lea.vmem %s8, 128
        %v3210 = vld [vmem:[%s3209] sm:$0xff]
        %v3211 = vld [vmem:[%s3209 + $0x8] sm:$0xff]
        %v3213 = vsel %vm1967, %v3210, 0
        %v3216 = vsel %vm1967, %v3211, 0
        %3218 = vmatprep.subr.mxu0 0.0
        %3219 = vmatpush1.msra.mxu0 0.0
        %3220 = vmatprep.subr.mxu0 0.0
        %3221 = vmatpush1.msra.mxu0 0.0
        %3222 = vmatprep.subr.mxu0 0.0
        %3223 = vmatpush1.msra.mxu0 0.0
        %3224 = vmatprep.subr.mxu0 0.0
        %3225 = vmatpush1.msra.mxu0 0.0
        %3226 = vmatprep.subr.mxu0 0.0
        %3227 = vmatpush1.msra.mxu0 0.0
        %3228 = vmatprep.subr.mxu0 0.0
        %3229 = vmatpush1.msra.mxu0 0.0
        %3230 = vmatprep.subr.mxu0 0.0
        %3231 = vmatpush1.msra.mxu0 0.0
        %3232 = vmatprep.subr.mxu0 0.0
        %3233 = vmatpush1.msra.mxu0 0.0
        %3234 = vmatprep.subr.mxu0 0.0
        %3235 = vmatpush1.msra.mxu0 0.0
        %3236 = vmatprep.subr.mxu0 0.0
        %3237 = vmatpush1.msra.mxu0 0.0
        %3238 = vmatprep.subr.mxu0 0.0
        %3239 = vmatpush1.msra.mxu0 0.0
        %3240 = vmatprep.subr.mxu0 0.0
        %3241 = vmatpush1.msra.mxu0 0.0
        %3242 = vmatprep.subr.mxu0 %v3208
        %3243 = vmatpush1.msra.mxu0 %v3207
        %3244 = vmatprep.subr.mxu0 %v3206
        %3245 = vmatpush1.msra.mxu0 %v3205
        %3246 = vmatprep.subr.mxu0 %v3204
        %3247 = vmatpush1.msra.mxu0 %v3203
        %3248 = vmatprep.subr.mxu0 %v3202
        %3249 = vmatpush1.msra.mxu0 %v3201
        %3250 = vmatprep.subr.mxu0 0.0
        %3251 = vmatpush2.msra.mxu0 0.0
        %3252 = vmatprep.subr.mxu0 0.0
        %3253 = vmatpush2.msra.mxu0 0.0
        %3254 = vmatprep.subr.mxu0 0.0
        %3255 = vmatpush2.msra.mxu0 0.0
        %3256 = vmatprep.subr.mxu0 0.0
        %3257 = vmatpush2.msra.mxu0 0.0
        %3258 = vmatprep.subr.mxu0 0.0
        %3259 = vmatpush2.msra.mxu0 0.0
        %3260 = vmatprep.subr.mxu0 0.0
        %3261 = vmatpush2.msra.mxu0 0.0
        %3262 = vmatprep.subr.mxu0 0.0
        %3263 = vmatpush2.msra.mxu0 0.0
        %3264 = vmatprep.subr.mxu0 0.0
        %3265 = vmatpush2.msra.mxu0 0.0
        %3266 = vmatprep.subr.mxu0 0.0
        %3267 = vmatpush2.msra.mxu0 0.0
        %3268 = vmatprep.subr.mxu0 0.0
        %3269 = vmatpush2.msra.mxu0 0.0
        %3270 = vmatprep.subr.mxu0 0.0
        %3271 = vmatpush2.msra.mxu0 0.0
        %3272 = vmatprep.subr.mxu0 0.0
        %3273 = vmatpush2.msra.mxu0 0.0
        %3274 = vmatprep.subr.mxu0 0.0
        %3275 = vmatpush2.msra.mxu0 0.0
        %3276 = vmatprep.subr.mxu0 0.0
        %3277 = vmatpush2.msra.mxu0 0.0
        %3278 = vmatprep.subr.mxu0 0.0
        %3279 = vmatpush2.msra.mxu0 0.0
        %3280 = vmatprep.subr.mxu0 0.0
        %3281 = vmatpush2.msra.mxu0 0.0
        %3282 = vmatprep.mubr.f32.mxu0 0.0
        %3283 = vmatmul.mubr.f32.gmra.mxu0 %v3213
        %v3284 = vpop.f32.mrf.mxu0
        %v3285 = vadd.f32 0.0, %v3284
        %v3286 = vpop.f32.mrf.mxu0
        %v3287 = vadd.f32 0.0, %v3286
        %3288 = vmatprep.mubr.f32.mxu0 0.0
        %3289 = vmatmul.mubr.f32.gmra.mxu0 %v3216
        %v3290 = vpop.f32.mrf.mxu0
        %v3291 = vadd.f32 0.0, %v3290
        %v3292 = vpop.f32.mrf.mxu0
        %v3293 = vadd.f32 0.0, %v3292
        %3294 = vdwg.mxu0
        %v3295 = vadd.f32 %v3173, %v3285
        %v3296 = vadd.f32 %v3174, %v3287
        %v3297 = vadd.f32 %v3175, %v3291
        %v3298 = vadd.f32 %v3176, %v3293
        %v3299 = vld [vmem:[%s9] sm:$0xff]
        %v3300 = vld [vmem:[%s9 + $0x8] sm:$0xff]
        %3302 = vset.pattern.permute.xlu0 0
        %3303 = vperm.xlu0 %3302, %v3299
        %v3304 = vpop.permute.xlu0 %3303
        %3307 = vset.pattern.permute.xlu0 0
        %3308 = vperm.xlu0 %3307, %v3300
        %v3309 = vpop.permute.xlu0 %3308
        %v3311 = vadd.f32 %v3295, %v3304
        %v3312 = vadd.f32 %v3296, %v3304
        %v3313 = vadd.f32 %v3297, %v3309
        %v3314 = vadd.f32 %v3298, %v3309
        %v3315 = vld [vmem:[%s10] sm:$0xff]
        %v3316 = vld [vmem:[%s10 + $0x8] sm:$0xff]
        %3318 = vset.pattern.permute.xlu0 0
        %3319 = vperm.xlu0 %3318, %v3315
        %v3320 = vpop.permute.xlu0 %3319
        %3323 = vset.pattern.permute.xlu0 0
        %3324 = vperm.xlu0 %3323, %v3316
        %v3325 = vpop.permute.xlu0 %3324
        %v3327 = vmul.f32 %v3311, %v3320
        %v3328 = vmul.f32 %v3312, %v3320
        %v3329 = vmul.f32 %v3313, %v3325
        %v3330 = vmul.f32 %v3314, %v3325
        %v3331 = vld [vmem:[%s11] sm:$0xff]
        %v3332 = vld [vmem:[%s11 + $0x8] sm:$0xff]
        %3334 = vset.pattern.permute.xlu0 0
        %3335 = vperm.xlu0 %3334, %v3331
        %v3336 = vpop.permute.xlu0 %3335
        %3339 = vset.pattern.permute.xlu0 0
        %3340 = vperm.xlu0 %3339, %v3332
        %v3341 = vpop.permute.xlu0 %3340
        %v3343 = vadd.f32 %v3327, %v3336
        %v3344 = vadd.f32 %v3328, %v3336
        %v3345 = vadd.f32 %v3329, %v3341
        %v3346 = vadd.f32 %v3330, %v3341
        %vm3347 = vcmp.ge.f32.partialorder %v3343, 0.0
        %vm3348 = vcmp.ge.f32.partialorder %v3344, 0.0
        %vm3349 = vcmp.ge.f32.partialorder %v3345, 0.0
        %vm3350 = vcmp.ge.f32.partialorder %v3346, 0.0
        %v3351 = vmul.f32 %v3343, 0.3
        %v3352 = vmul.f32 %v3344, 0.3
        %v3353 = vmul.f32 %v3345, 0.3
        %v3354 = vmul.f32 %v3346, 0.3
        %v3355 = vsel %vm3347, %v3343, %v3351
        %v3356 = vsel %vm3348, %v3344, %v3352
        %v3357 = vsel %vm3349, %v3345, %v3353
        %v3358 = vsel %vm3350, %v3346, %v3354
        %v3359 = vadd.f32 %v3355, %v3356
        %3360 = vadd.xlane.f32.xlu0 %v3359
        %v3361 = vpop.xlane.xlu0 %3360
        %v3362 = vadd.f32 %v3357, %v3358
        %3363 = vadd.xlane.f32.xlu0 %v3362
        %v3364 = vpop.xlane.xlu0 %3363
        %v3365 = vmul.f32 %v3361, 0.00390625
        %v3366 = vmul.f32 %v3364, 0.00390625
        %v3367 = vmax.f32 %v3355, %v3356
        %3368 = vmax.xlane.f32.xlu0 %v3367
        %v3369 = vpop.xlane.xlu0 %3368
        %v3370 = vmax.f32 %v3357, %v3358
        %3371 = vmax.xlane.f32.xlu0 %v3370
        %v3372 = vpop.xlane.xlu0 %3371
        %v3373 = vsel %vm1958, %v3365, %v3369
        %v3374 = vsel %vm1958, %v3366, %v3372
        %v3375 = vld [vmem:[%s12] sm:$0xff]
        %v3376 = vld [vmem:[%s12 + $0x8] sm:$0xff]
        %vm3377 = vcmask 130048
        %v3379 = vsel %vm3377, %v3375, 0
        %v3382 = vsel %vm3377, %v3376, 0
        %3384 = vmatprep.subr.mxu0 0.0
        %3385 = vmatpush1.msra.mxu0 0.0
        %3386 = vmatprep.subr.mxu0 0.0
        %3387 = vmatpush1.msra.mxu0 0.0
        %3388 = vmatprep.subr.mxu0 0.0
        %3389 = vmatpush1.msra.mxu0 0.0
        %3390 = vmatprep.subr.mxu0 0.0
        %3391 = vmatpush1.msra.mxu0 0.0
        %3392 = vmatprep.subr.mxu0 0.0
        %3393 = vmatpush1.msra.mxu0 0.0
        %3394 = vmatprep.subr.mxu0 0.0
        %3395 = vmatpush1.msra.mxu0 0.0
        %3396 = vmatprep.subr.mxu0 0.0
        %3397 = vmatpush1.msra.mxu0 0.0
        %3398 = vmatprep.subr.mxu0 0.0
        %3399 = vmatpush1.msra.mxu0 0.0
        %3400 = vmatprep.subr.mxu0 0.0
        %3401 = vmatpush1.msra.mxu0 0.0
        %3402 = vmatprep.subr.mxu0 0.0
        %3403 = vmatpush1.msra.mxu0 0.0
        %3404 = vmatprep.subr.mxu0 0.0
        %3405 = vmatpush1.msra.mxu0 0.0
        %3406 = vmatprep.subr.mxu0 0.0
        %3407 = vmatpush1.msra.mxu0 0.0
        %3408 = vmatprep.subr.mxu0 0.0
        %3409 = vmatpush1.msra.mxu0 0.0
        %3410 = vmatprep.subr.mxu0 0.0
        %3411 = vmatpush1.msra.mxu0 0.0
        %3412 = vmatprep.subr.mxu0 0.0
        %3413 = vmatpush1.msra.mxu0 %v3374
        %3414 = vmatprep.subr.mxu0 0.0
        %3415 = vmatpush1.msra.mxu0 %v3373
        %3416 = vmatprep.subr.mxu0 0.0
        %3417 = vmatpush2.msra.mxu0 0.0
        %3418 = vmatprep.subr.mxu0 0.0
        %3419 = vmatpush2.msra.mxu0 0.0
        %3420 = vmatprep.subr.mxu0 0.0
        %3421 = vmatpush2.msra.mxu0 0.0
        %3422 = vmatprep.subr.mxu0 0.0
        %3423 = vmatpush2.msra.mxu0 0.0
        %3424 = vmatprep.subr.mxu0 0.0
        %3425 = vmatpush2.msra.mxu0 0.0
        %3426 = vmatprep.subr.mxu0 0.0
        %3427 = vmatpush2.msra.mxu0 0.0
        %3428 = vmatprep.subr.mxu0 0.0
        %3429 = vmatpush2.msra.mxu0 0.0
        %3430 = vmatprep.subr.mxu0 0.0
        %3431 = vmatpush2.msra.mxu0 0.0
        %3432 = vmatprep.subr.mxu0 0.0
        %3433 = vmatpush2.msra.mxu0 0.0
        %3434 = vmatprep.subr.mxu0 0.0
        %3435 = vmatpush2.msra.mxu0 0.0
        %3436 = vmatprep.subr.mxu0 0.0
        %3437 = vmatpush2.msra.mxu0 0.0
        %3438 = vmatprep.subr.mxu0 0.0
        %3439 = vmatpush2.msra.mxu0 0.0
        %3440 = vmatprep.subr.mxu0 0.0
        %3441 = vmatpush2.msra.mxu0 0.0
        %3442 = vmatprep.subr.mxu0 0.0
        %3443 = vmatpush2.msra.mxu0 0.0
        %3444 = vmatprep.subr.mxu0 0.0
        %3445 = vmatpush2.msra.mxu0 0.0
        %3446 = vmatprep.subr.mxu0 0.0
        %3447 = vmatpush2.msra.mxu0 0.0
        %3448 = vmatprep.mubr.f32.mxu0 0.0
        %3449 = vmatmul.mubr.f32.gmra.mxu0 %v3379
        %v3450 = vpop.f32.mrf.mxu0
        %v3451 = vadd.f32 0.0, %v3450
        %v3452 = vpop.f32.mrf.mxu0
        %3453 = vmatprep.mubr.f32.mxu0 0.0
        %3454 = vmatmul.mubr.f32.gmra.mxu0 %v3382
        %v3455 = vpop.f32.mrf.mxu0
        %v3456 = vadd.f32 0.0, %v3455
        %v3457 = vpop.f32.mrf.mxu0
        %3458 = vdwg.mxu0
        %v3459 = vmax.f32 %v3451, 0.0
        %v3460 = vmax.f32 %v3456, 0.0
        %v3461 = vld [vmem:[%s13] sm:$0xff]
        %v3462 = vld [vmem:[%s13 + $0x8] sm:$0xff]
        %v3464 = vsel %vm3377, %v3461, 0
        %v3467 = vsel %vm3377, %v3462, 0
        %3469 = vmatprep.subr.mxu0 0.0
        %3470 = vmatpush1.msra.mxu0 0.0
        %3471 = vmatprep.subr.mxu0 0.0
        %3472 = vmatpush1.msra.mxu0 0.0
        %3473 = vmatprep.subr.mxu0 0.0
        %3474 = vmatpush1.msra.mxu0 0.0
        %3475 = vmatprep.subr.mxu0 0.0
        %3476 = vmatpush1.msra.mxu0 0.0
        %3477 = vmatprep.subr.mxu0 0.0
        %3478 = vmatpush1.msra.mxu0 0.0
        %3479 = vmatprep.subr.mxu0 0.0
        %3480 = vmatpush1.msra.mxu0 0.0
        %3481 = vmatprep.subr.mxu0 0.0
        %3482 = vmatpush1.msra.mxu0 0.0
        %3483 = vmatprep.subr.mxu0 0.0
        %3484 = vmatpush1.msra.mxu0 0.0
        %3485 = vmatprep.subr.mxu0 0.0
        %3486 = vmatpush1.msra.mxu0 0.0
        %3487 = vmatprep.subr.mxu0 0.0
        %3488 = vmatpush1.msra.mxu0 0.0
        %3489 = vmatprep.subr.mxu0 0.0
        %3490 = vmatpush1.msra.mxu0 0.0
        %3491 = vmatprep.subr.mxu0 0.0
        %3492 = vmatpush1.msra.mxu0 0.0
        %3493 = vmatprep.subr.mxu0 0.0
        %3494 = vmatpush1.msra.mxu0 0.0
        %3495 = vmatprep.subr.mxu0 0.0
        %3496 = vmatpush1.msra.mxu0 0.0
        %3497 = vmatprep.subr.mxu0 0.0
        %3498 = vmatpush1.msra.mxu0 %v3460
        %3499 = vmatprep.subr.mxu0 0.0
        %3500 = vmatpush1.msra.mxu0 %v3459
        %3501 = vmatprep.subr.mxu0 0.0
        %3502 = vmatpush2.msra.mxu0 0.0
        %3503 = vmatprep.subr.mxu0 0.0
        %3504 = vmatpush2.msra.mxu0 0.0
        %3505 = vmatprep.subr.mxu0 0.0
        %3506 = vmatpush2.msra.mxu0 0.0
        %3507 = vmatprep.subr.mxu0 0.0
        %3508 = vmatpush2.msra.mxu0 0.0
        %3509 = vmatprep.subr.mxu0 0.0
        %3510 = vmatpush2.msra.mxu0 0.0
        %3511 = vmatprep.subr.mxu0 0.0
        %3512 = vmatpush2.msra.mxu0 0.0
        %3513 = vmatprep.subr.mxu0 0.0
        %3514 = vmatpush2.msra.mxu0 0.0
        %3515 = vmatprep.subr.mxu0 0.0
        %3516 = vmatpush2.msra.mxu0 0.0
        %3517 = vmatprep.subr.mxu0 0.0
        %3518 = vmatpush2.msra.mxu0 0.0
        %3519 = vmatprep.subr.mxu0 0.0
        %3520 = vmatpush2.msra.mxu0 0.0
        %3521 = vmatprep.subr.mxu0 0.0
        %3522 = vmatpush2.msra.mxu0 0.0
        %3523 = vmatprep.subr.mxu0 0.0
        %3524 = vmatpush2.msra.mxu0 0.0
        %3525 = vmatprep.subr.mxu0 0.0
        %3526 = vmatpush2.msra.mxu0 0.0
        %3527 = vmatprep.subr.mxu0 0.0
        %3528 = vmatpush2.msra.mxu0 0.0
        %3529 = vmatprep.subr.mxu0 0.0
        %3530 = vmatpush2.msra.mxu0 0.0
        %3531 = vmatprep.subr.mxu0 0.0
        %3532 = vmatpush2.msra.mxu0 0.0
        %3533 = vmatprep.mubr.f32.mxu0 0.0
        %3534 = vmatmul.mubr.f32.gmra.mxu0 %v3464
        %v3535 = vpop.f32.mrf.mxu0
        %v3536 = vadd.f32 0.0, %v3535
        %v3537 = vpop.f32.mrf.mxu0
        %3538 = vmatprep.mubr.f32.mxu0 0.0
        %3539 = vmatmul.mubr.f32.gmra.mxu0 %v3467
        %v3540 = vpop.f32.mrf.mxu0
        %v3541 = vadd.f32 0.0, %v3540
        %v3542 = vpop.f32.mrf.mxu0
        %3543 = vdwg.mxu0
        %3546 = vrot.lane.b32.xlu0 %v3536, 127
        %v3547 = vpop.permute.xlu0 %3546
        %3548 = vrot.lane.b32.xlu0 %v3541, 127
        %v3549 = vpop.permute.xlu0 %3548
        %v3552 = vadd.f32 %v3536, %v3547
        %v3553 = vadd.f32 %v3541, %v3549
        %v3554 = vxor.u32 %v3552, 2147483648
        %v3555 = vxor.u32 %v3553, 2147483648
        %v3556 = vmul.f32 %v3554, 1.442695
        %v3557 = vpow.pop %v3556
        %v3558 = vmul.f32 %v3555, 1.442695
        %v3559 = vpow.pop %v3558
        %v3560 = vadd.f32 %v3557, 1.0
        %v3561 = vadd.f32 %v3559, 1.0
        %v3562 = vrcp.pop %v3560
        %v3563 = vmul.f32 1.0, %v3562
        %v3564 = vrcp.pop %v3561
        %v3565 = vmul.f32 1.0, %v3564
        %3567 = vset.pattern.permute.xlu0 0
        %3568 = vperm.xlu0 %3567, %v3563
        %v3569 = vpop.permute.xlu0 %3568
        %3572 = vset.pattern.permute.xlu0 0
        %3573 = vperm.xlu0 %3572, %v3565
        %v3574 = vpop.permute.xlu0 %3573
        %v3576 = vmul.f32 %v3355, %v3569
        %v3577 = vmul.f32 %v3356, %v3569
        %v3578 = vmul.f32 %v3357, %v3574
        %v3579 = vmul.f32 %v3358, %v3574
        %3580 = vrot.lane.b32.xlu0 %v3576, 17
        %v3581 = vpop.permute.xlu0 %3580
        %3582 = vrot.lane.b32.xlu0 %v3578, 17
        %v3583 = vpop.permute.xlu0 %3582
        %3584 = vrot.lane.b32.xlu0 %v3577, 17
        %v3585 = vpop.permute.xlu0 %3584
        %3586 = vrot.lane.b32.xlu0 %v3579, 17
        %v3587 = vpop.permute.xlu0 %3586
        %v3588 = vsel %vm591, %v3581, %v3585
        %v3589 = vsel %vm591, %v3583, %v3587
        %v3590 = vsel %vm591, %v3585, %v3581
        %v3591 = vsel %vm591, %v3587, %v3583
        %v3592 = vsel %vm606, %v3590, 0.0
        %v3593 = vsel %vm607, %v3588, 0.0
        %v3594 = vsel %vm606, %v3591, 0.0
        %v3595 = vsel %vm607, %v3589, 0.0
        %v3596 = vld [vmem:[%s14] sm:$0xf]
        %3597 = vrot.lane.b32.xlu0 %v3576, 16
        %v3598 = vpop.permute.xlu0 %3597
        %3599 = vrot.lane.b32.xlu0 %v3578, 16
        %v3600 = vpop.permute.xlu0 %3599
        %3601 = vrot.lane.b32.xlu0 %v3577, 16
        %v3602 = vpop.permute.xlu0 %3601
        %3603 = vrot.lane.b32.xlu0 %v3579, 16
        %v3604 = vpop.permute.xlu0 %3603
        %v3605 = vsel %vm618, %v3598, %v3602
        %v3606 = vsel %vm618, %v3600, %v3604
        %v3607 = vsel %vm618, %v3602, %v3598
        %v3608 = vsel %vm618, %v3604, %v3600
        %v3609 = vsel %vm629, %v3607, 0.0
        %v3610 = vsel %vm630, %v3605, 0.0
        %v3611 = vsel %vm629, %v3608, 0.0
        %v3612 = vsel %vm630, %v3606, 0.0
        %s3613 = scalar_lea.vmem %s14, 4
        %v3614 = vld [vmem:[%s3613] sm:$0xf]
        %v3616 = vsel %vm3377, %v3614, 0
        %3618 = vmatprep.subr.mxu0 0.0
        %3619 = vmatpush1.msra.mxu0 0.0
        %3620 = vmatprep.subr.mxu0 0.0
        %3621 = vmatpush1.msra.mxu0 0.0
        %3622 = vmatprep.subr.mxu0 0.0
        %3623 = vmatpush1.msra.mxu0 0.0
        %3624 = vmatprep.subr.mxu0 0.0
        %3625 = vmatpush1.msra.mxu0 0.0
        %3626 = vmatprep.subr.mxu0 0.0
        %3627 = vmatpush1.msra.mxu0 0.0
        %3628 = vmatprep.subr.mxu0 0.0
        %3629 = vmatpush1.msra.mxu0 0.0
        %3630 = vmatprep.subr.mxu0 0.0
        %3631 = vmatpush1.msra.mxu0 0.0
        %3632 = vmatprep.subr.mxu0 0.0
        %3633 = vmatpush1.msra.mxu0 0.0
        %3634 = vmatprep.subr.mxu0 0.0
        %3635 = vmatpush1.msra.mxu0 0.0
        %3636 = vmatprep.subr.mxu0 0.0
        %3637 = vmatpush1.msra.mxu0 0.0
        %3638 = vmatprep.subr.mxu0 0.0
        %3639 = vmatpush1.msra.mxu0 0.0
        %3640 = vmatprep.subr.mxu0 0.0
        %3641 = vmatpush1.msra.mxu0 0.0
        %3642 = vmatprep.subr.mxu0 0.0
        %3643 = vmatpush1.msra.mxu0 0.0
        %3644 = vmatprep.subr.mxu0 0.0
        %3645 = vmatpush1.msra.mxu0 0.0
        %3646 = vmatprep.subr.mxu0 %v3612
        %3647 = vmatpush1.msra.mxu0 %v3611
        %3648 = vmatprep.subr.mxu0 %v3610
        %3649 = vmatpush1.msra.mxu0 %v3609
        %3650 = vmatprep.subr.mxu0 0.0
        %3651 = vmatpush2.msra.mxu0 0.0
        %3652 = vmatprep.subr.mxu0 0.0
        %3653 = vmatpush2.msra.mxu0 0.0
        %3654 = vmatprep.subr.mxu0 0.0
        %3655 = vmatpush2.msra.mxu0 0.0
        %3656 = vmatprep.subr.mxu0 0.0
        %3657 = vmatpush2.msra.mxu0 0.0
        %3658 = vmatprep.subr.mxu0 0.0
        %3659 = vmatpush2.msra.mxu0 0.0
        %3660 = vmatprep.subr.mxu0 0.0
        %3661 = vmatpush2.msra.mxu0 0.0
        %3662 = vmatprep.subr.mxu0 0.0
        %3663 = vmatpush2.msra.mxu0 0.0
        %3664 = vmatprep.subr.mxu0 0.0
        %3665 = vmatpush2.msra.mxu0 0.0
        %3666 = vmatprep.subr.mxu0 0.0
        %3667 = vmatpush2.msra.mxu0 0.0
        %3668 = vmatprep.subr.mxu0 0.0
        %3669 = vmatpush2.msra.mxu0 0.0
        %3670 = vmatprep.subr.mxu0 0.0
        %3671 = vmatpush2.msra.mxu0 0.0
        %3672 = vmatprep.subr.mxu0 0.0
        %3673 = vmatpush2.msra.mxu0 0.0
        %3674 = vmatprep.subr.mxu0 0.0
        %3675 = vmatpush2.msra.mxu0 0.0
        %3676 = vmatprep.subr.mxu0 0.0
        %3677 = vmatpush2.msra.mxu0 0.0
        %3678 = vmatprep.subr.mxu0 0.0
        %3679 = vmatpush2.msra.mxu0 0.0
        %3680 = vmatprep.subr.mxu0 0.0
        %3681 = vmatpush2.msra.mxu0 0.0
        %3682 = vmatprep.mubr.f32.mxu0 0.0
        %3683 = vmatmul.mubr.f32.gmra.mxu0 %v3616
        %v3684 = vpop.f32.mrf.mxu0
        %v3685 = vadd.f32 0.0, %v3684
        %v3686 = vpop.f32.mrf.mxu0
        %v3687 = vadd.f32 0.0, %v3686
        %3688 = vdwg.mxu0
        %v3690 = vsel %vm3377, %v3596, 0
        %3692 = vmatprep.subr.mxu0 0.0
        %3693 = vmatpush1.msra.mxu0 0.0
        %3694 = vmatprep.subr.mxu0 0.0
        %3695 = vmatpush1.msra.mxu0 0.0
        %3696 = vmatprep.subr.mxu0 0.0
        %3697 = vmatpush1.msra.mxu0 0.0
        %3698 = vmatprep.subr.mxu0 0.0
        %3699 = vmatpush1.msra.mxu0 0.0
        %3700 = vmatprep.subr.mxu0 0.0
        %3701 = vmatpush1.msra.mxu0 0.0
        %3702 = vmatprep.subr.mxu0 0.0
        %3703 = vmatpush1.msra.mxu0 0.0
        %3704 = vmatprep.subr.mxu0 0.0
        %3705 = vmatpush1.msra.mxu0 0.0
        %3706 = vmatprep.subr.mxu0 0.0
        %3707 = vmatpush1.msra.mxu0 0.0
        %3708 = vmatprep.subr.mxu0 0.0
        %3709 = vmatpush1.msra.mxu0 0.0
        %3710 = vmatprep.subr.mxu0 0.0
        %3711 = vmatpush1.msra.mxu0 0.0
        %3712 = vmatprep.subr.mxu0 0.0
        %3713 = vmatpush1.msra.mxu0 0.0
        %3714 = vmatprep.subr.mxu0 0.0
        %3715 = vmatpush1.msra.mxu0 0.0
        %3716 = vmatprep.subr.mxu0 0.0
        %3717 = vmatpush1.msra.mxu0 0.0
        %3718 = vmatprep.subr.mxu0 0.0
        %3719 = vmatpush1.msra.mxu0 0.0
        %3720 = vmatprep.subr.mxu0 %v3595
        %3721 = vmatpush1.msra.mxu0 %v3594
        %3722 = vmatprep.subr.mxu0 %v3593
        %3723 = vmatpush1.msra.mxu0 %v3592
        %3724 = vmatprep.subr.mxu0 0.0
        %3725 = vmatpush2.msra.mxu0 0.0
        %3726 = vmatprep.subr.mxu0 0.0
        %3727 = vmatpush2.msra.mxu0 0.0
        %3728 = vmatprep.subr.mxu0 0.0
        %3729 = vmatpush2.msra.mxu0 0.0
        %3730 = vmatprep.subr.mxu0 0.0
        %3731 = vmatpush2.msra.mxu0 0.0
        %3732 = vmatprep.subr.mxu0 0.0
        %3733 = vmatpush2.msra.mxu0 0.0
        %3734 = vmatprep.subr.mxu0 0.0
        %3735 = vmatpush2.msra.mxu0 0.0
        %3736 = vmatprep.subr.mxu0 0.0
        %3737 = vmatpush2.msra.mxu0 0.0
        %3738 = vmatprep.subr.mxu0 0.0
        %3739 = vmatpush2.msra.mxu0 0.0
        %3740 = vmatprep.subr.mxu0 0.0
        %3741 = vmatpush2.msra.mxu0 0.0
        %3742 = vmatprep.subr.mxu0 0.0
        %3743 = vmatpush2.msra.mxu0 0.0
        %3744 = vmatprep.subr.mxu0 0.0
        %3745 = vmatpush2.msra.mxu0 0.0
        %3746 = vmatprep.subr.mxu0 0.0
        %3747 = vmatpush2.msra.mxu0 0.0
        %3748 = vmatprep.subr.mxu0 0.0
        %3749 = vmatpush2.msra.mxu0 0.0
        %3750 = vmatprep.subr.mxu0 0.0
        %3751 = vmatpush2.msra.mxu0 0.0
        %3752 = vmatprep.subr.mxu0 0.0
        %3753 = vmatpush2.msra.mxu0 0.0
        %3754 = vmatprep.subr.mxu0 0.0
        %3755 = vmatpush2.msra.mxu0 0.0
        %3756 = vmatprep.mubr.f32.mxu0 0.0
        %3757 = vmatmul.mubr.f32.gmra.mxu0 %v3690
        %v3758 = vpop.f32.mrf.mxu0
        %v3759 = vadd.f32 %v3685, %v3758
        %v3760 = vpop.f32.mrf.mxu0
        %v3761 = vadd.f32 %v3687, %v3760
        %3762 = vdwg.mxu0
        %3763 = vrot.lane.b32.xlu0 %v3576, 15
        %v3764 = vpop.permute.xlu0 %3763
        %3765 = vrot.lane.b32.xlu0 %v3578, 15
        %v3766 = vpop.permute.xlu0 %3765
        %3767 = vrot.lane.b32.xlu0 %v3577, 15
        %v3768 = vpop.permute.xlu0 %3767
        %3769 = vrot.lane.b32.xlu0 %v3579, 15
        %v3770 = vpop.permute.xlu0 %3769
        %v3771 = vsel %vm858, %v3764, %v3768
        %v3772 = vsel %vm858, %v3766, %v3770
        %v3773 = vsel %vm858, %v3768, %v3764
        %v3774 = vsel %vm858, %v3770, %v3766
        %v3775 = vsel %vm869, %v3773, 0.0
        %v3776 = vsel %vm870, %v3771, 0.0
        %v3777 = vsel %vm869, %v3774, 0.0
        %v3778 = vsel %vm870, %v3772, 0.0
        %s3779 = scalar_lea.vmem %s14, 8
        %v3780 = vld [vmem:[%s3779] sm:$0xf]
        %v3782 = vsel %vm3377, %v3780, 0
        %3784 = vmatprep.subr.mxu0 0.0
        %3785 = vmatpush1.msra.mxu0 0.0
        %3786 = vmatprep.subr.mxu0 0.0
        %3787 = vmatpush1.msra.mxu0 0.0
        %3788 = vmatprep.subr.mxu0 0.0
        %3789 = vmatpush1.msra.mxu0 0.0
        %3790 = vmatprep.subr.mxu0 0.0
        %3791 = vmatpush1.msra.mxu0 0.0
        %3792 = vmatprep.subr.mxu0 0.0
        %3793 = vmatpush1.msra.mxu0 0.0
        %3794 = vmatprep.subr.mxu0 0.0
        %3795 = vmatpush1.msra.mxu0 0.0
        %3796 = vmatprep.subr.mxu0 0.0
        %3797 = vmatpush1.msra.mxu0 0.0
        %3798 = vmatprep.subr.mxu0 0.0
        %3799 = vmatpush1.msra.mxu0 0.0
        %3800 = vmatprep.subr.mxu0 0.0
        %3801 = vmatpush1.msra.mxu0 0.0
        %3802 = vmatprep.subr.mxu0 0.0
        %3803 = vmatpush1.msra.mxu0 0.0
        %3804 = vmatprep.subr.mxu0 0.0
        %3805 = vmatpush1.msra.mxu0 0.0
        %3806 = vmatprep.subr.mxu0 0.0
        %3807 = vmatpush1.msra.mxu0 0.0
        %3808 = vmatprep.subr.mxu0 0.0
        %3809 = vmatpush1.msra.mxu0 0.0
        %3810 = vmatprep.subr.mxu0 0.0
        %3811 = vmatpush1.msra.mxu0 0.0
        %3812 = vmatprep.subr.mxu0 %v3778
        %3813 = vmatpush1.msra.mxu0 %v3777
        %3814 = vmatprep.subr.mxu0 %v3776
        %3815 = vmatpush1.msra.mxu0 %v3775
        %3816 = vmatprep.subr.mxu0 0.0
        %3817 = vmatpush2.msra.mxu0 0.0
        %3818 = vmatprep.subr.mxu0 0.0
        %3819 = vmatpush2.msra.mxu0 0.0
        %3820 = vmatprep.subr.mxu0 0.0
        %3821 = vmatpush2.msra.mxu0 0.0
        %3822 = vmatprep.subr.mxu0 0.0
        %3823 = vmatpush2.msra.mxu0 0.0
        %3824 = vmatprep.subr.mxu0 0.0
        %3825 = vmatpush2.msra.mxu0 0.0
        %3826 = vmatprep.subr.mxu0 0.0
        %3827 = vmatpush2.msra.mxu0 0.0
        %3828 = vmatprep.subr.mxu0 0.0
        %3829 = vmatpush2.msra.mxu0 0.0
        %3830 = vmatprep.subr.mxu0 0.0
        %3831 = vmatpush2.msra.mxu0 0.0
        %3832 = vmatprep.subr.mxu0 0.0
        %3833 = vmatpush2.msra.mxu0 0.0
        %3834 = vmatprep.subr.mxu0 0.0
        %3835 = vmatpush2.msra.mxu0 0.0
        %3836 = vmatprep.subr.mxu0 0.0
        %3837 = vmatpush2.msra.mxu0 0.0
        %3838 = vmatprep.subr.mxu0 0.0
        %3839 = vmatpush2.msra.mxu0 0.0
        %3840 = vmatprep.subr.mxu0 0.0
        %3841 = vmatpush2.msra.mxu0 0.0
        %3842 = vmatprep.subr.mxu0 0.0
        %3843 = vmatpush2.msra.mxu0 0.0
        %3844 = vmatprep.subr.mxu0 0.0
        %3845 = vmatpush2.msra.mxu0 0.0
        %3846 = vmatprep.subr.mxu0 0.0
        %3847 = vmatpush2.msra.mxu0 0.0
        %3848 = vmatprep.mubr.f32.mxu0 0.0
        %3849 = vmatmul.mubr.f32.gmra.mxu0 %v3782
        %v3850 = vpop.f32.mrf.mxu0
        %v3851 = vadd.f32 0.0, %v3850
        %v3852 = vpop.f32.mrf.mxu0
        %v3853 = vadd.f32 0.0, %v3852
        %3854 = vdwg.mxu0
        %v3855 = vadd.f32 %v3759, %v3851
        %v3856 = vadd.f32 %v3761, %v3853
        %3857 = vrot.lane.b32.xlu0 %v3576, 1
        %v3858 = vpop.permute.xlu0 %3857
        %3859 = vrot.lane.b32.xlu0 %v3578, 1
        %v3860 = vpop.permute.xlu0 %3859
        %3861 = vrot.lane.b32.xlu0 %v3577, 1
        %v3862 = vpop.permute.xlu0 %3861
        %3863 = vrot.lane.b32.xlu0 %v3579, 1
        %v3864 = vpop.permute.xlu0 %3863
        %v3865 = vsel %vm997, %v3858, %v3862
        %v3866 = vsel %vm997, %v3860, %v3864
        %v3867 = vsel %vm997, %v3862, %v3858
        %v3868 = vsel %vm997, %v3864, %v3860
        %v3869 = vsel %vm1008, %v3867, 0.0
        %v3870 = vsel %vm1009, %v3865, 0.0
        %v3871 = vsel %vm1008, %v3868, 0.0
        %v3872 = vsel %vm1009, %v3866, 0.0
        %s3873 = scalar_lea.vmem %s14, 12
        %v3874 = vld [vmem:[%s3873] sm:$0xf]
        %v3876 = vsel %vm3377, %v3874, 0
        %3878 = vmatprep.subr.mxu0 0.0
        %3879 = vmatpush1.msra.mxu0 0.0
        %3880 = vmatprep.subr.mxu0 0.0
        %3881 = vmatpush1.msra.mxu0 0.0
        %3882 = vmatprep.subr.mxu0 0.0
        %3883 = vmatpush1.msra.mxu0 0.0
        %3884 = vmatprep.subr.mxu0 0.0
        %3885 = vmatpush1.msra.mxu0 0.0
        %3886 = vmatprep.subr.mxu0 0.0
        %3887 = vmatpush1.msra.mxu0 0.0
        %3888 = vmatprep.subr.mxu0 0.0
        %3889 = vmatpush1.msra.mxu0 0.0
        %3890 = vmatprep.subr.mxu0 0.0
        %3891 = vmatpush1.msra.mxu0 0.0
        %3892 = vmatprep.subr.mxu0 0.0
        %3893 = vmatpush1.msra.mxu0 0.0
        %3894 = vmatprep.subr.mxu0 0.0
        %3895 = vmatpush1.msra.mxu0 0.0
        %3896 = vmatprep.subr.mxu0 0.0
        %3897 = vmatpush1.msra.mxu0 0.0
        %3898 = vmatprep.subr.mxu0 0.0
        %3899 = vmatpush1.msra.mxu0 0.0
        %3900 = vmatprep.subr.mxu0 0.0
        %3901 = vmatpush1.msra.mxu0 0.0
        %3902 = vmatprep.subr.mxu0 0.0
        %3903 = vmatpush1.msra.mxu0 0.0
        %3904 = vmatprep.subr.mxu0 0.0
        %3905 = vmatpush1.msra.mxu0 0.0
        %3906 = vmatprep.subr.mxu0 %v3872
        %3907 = vmatpush1.msra.mxu0 %v3871
        %3908 = vmatprep.subr.mxu0 %v3870
        %3909 = vmatpush1.msra.mxu0 %v3869
        %3910 = vmatprep.subr.mxu0 0.0
        %3911 = vmatpush2.msra.mxu0 0.0
        %3912 = vmatprep.subr.mxu0 0.0
        %3913 = vmatpush2.msra.mxu0 0.0
        %3914 = vmatprep.subr.mxu0 0.0
        %3915 = vmatpush2.msra.mxu0 0.0
        %3916 = vmatprep.subr.mxu0 0.0
        %3917 = vmatpush2.msra.mxu0 0.0
        %3918 = vmatprep.subr.mxu0 0.0
        %3919 = vmatpush2.msra.mxu0 0.0
        %3920 = vmatprep.subr.mxu0 0.0
        %3921 = vmatpush2.msra.mxu0 0.0
        %3922 = vmatprep.subr.mxu0 0.0
        %3923 = vmatpush2.msra.mxu0 0.0
        %3924 = vmatprep.subr.mxu0 0.0
        %3925 = vmatpush2.msra.mxu0 0.0
        %3926 = vmatprep.subr.mxu0 0.0
        %3927 = vmatpush2.msra.mxu0 0.0
        %3928 = vmatprep.subr.mxu0 0.0
        %3929 = vmatpush2.msra.mxu0 0.0
        %3930 = vmatprep.subr.mxu0 0.0
        %3931 = vmatpush2.msra.mxu0 0.0
        %3932 = vmatprep.subr.mxu0 0.0
        %3933 = vmatpush2.msra.mxu0 0.0
        %3934 = vmatprep.subr.mxu0 0.0
        %3935 = vmatpush2.msra.mxu0 0.0
        %3936 = vmatprep.subr.mxu0 0.0
        %3937 = vmatpush2.msra.mxu0 0.0
        %3938 = vmatprep.subr.mxu0 0.0
        %3939 = vmatpush2.msra.mxu0 0.0
        %3940 = vmatprep.subr.mxu0 0.0
        %3941 = vmatpush2.msra.mxu0 0.0
        %3942 = vmatprep.mubr.f32.mxu0 0.0
        %3943 = vmatmul.mubr.f32.gmra.mxu0 %v3876
        %v3944 = vpop.f32.mrf.mxu0
        %v3945 = vadd.f32 0.0, %v3944
        %v3946 = vpop.f32.mrf.mxu0
        %v3947 = vadd.f32 0.0, %v3946
        %3948 = vdwg.mxu0
        %v3949 = vadd.f32 %v3855, %v3945
        %v3950 = vadd.f32 %v3856, %v3947
        %s3951 = scalar_lea.vmem %s14, 16
        %v3952 = vld [vmem:[%s3951] sm:$0xf]
        %v3954 = vsel %vm3377, %v3952, 0
        %3956 = vmatprep.subr.mxu0 0.0
        %3957 = vmatpush1.msra.mxu0 0.0
        %3958 = vmatprep.subr.mxu0 0.0
        %3959 = vmatpush1.msra.mxu0 0.0
        %3960 = vmatprep.subr.mxu0 0.0
        %3961 = vmatpush1.msra.mxu0 0.0
        %3962 = vmatprep.subr.mxu0 0.0
        %3963 = vmatpush1.msra.mxu0 0.0
        %3964 = vmatprep.subr.mxu0 0.0
        %3965 = vmatpush1.msra.mxu0 0.0
        %3966 = vmatprep.subr.mxu0 0.0
        %3967 = vmatpush1.msra.mxu0 0.0
        %3968 = vmatprep.subr.mxu0 0.0
        %3969 = vmatpush1.msra.mxu0 0.0
        %3970 = vmatprep.subr.mxu0 0.0
        %3971 = vmatpush1.msra.mxu0 0.0
        %3972 = vmatprep.subr.mxu0 0.0
        %3973 = vmatpush1.msra.mxu0 0.0
        %3974 = vmatprep.subr.mxu0 0.0
        %3975 = vmatpush1.msra.mxu0 0.0
        %3976 = vmatprep.subr.mxu0 0.0
        %3977 = vmatpush1.msra.mxu0 0.0
        %3978 = vmatprep.subr.mxu0 0.0
        %3979 = vmatpush1.msra.mxu0 0.0
        %3980 = vmatprep.subr.mxu0 0.0
        %3981 = vmatpush1.msra.mxu0 0.0
        %3982 = vmatprep.subr.mxu0 0.0
        %3983 = vmatpush1.msra.mxu0 0.0
        %3984 = vmatprep.subr.mxu0 %v3579
        %3985 = vmatpush1.msra.mxu0 %v3578
        %3986 = vmatprep.subr.mxu0 %v3577
        %3987 = vmatpush1.msra.mxu0 %v3576
        %3988 = vmatprep.subr.mxu0 0.0
        %3989 = vmatpush2.msra.mxu0 0.0
        %3990 = vmatprep.subr.mxu0 0.0
        %3991 = vmatpush2.msra.mxu0 0.0
        %3992 = vmatprep.subr.mxu0 0.0
        %3993 = vmatpush2.msra.mxu0 0.0
        %3994 = vmatprep.subr.mxu0 0.0
        %3995 = vmatpush2.msra.mxu0 0.0
        %3996 = vmatprep.subr.mxu0 0.0
        %3997 = vmatpush2.msra.mxu0 0.0
        %3998 = vmatprep.subr.mxu0 0.0
        %3999 = vmatpush2.msra.mxu0 0.0
        %4000 = vmatprep.subr.mxu0 0.0
        %4001 = vmatpush2.msra.mxu0 0.0
        %4002 = vmatprep.subr.mxu0 0.0
        %4003 = vmatpush2.msra.mxu0 0.0
        %4004 = vmatprep.subr.mxu0 0.0
        %4005 = vmatpush2.msra.mxu0 0.0
        %4006 = vmatprep.subr.mxu0 0.0
        %4007 = vmatpush2.msra.mxu0 0.0
        %4008 = vmatprep.subr.mxu0 0.0
        %4009 = vmatpush2.msra.mxu0 0.0
        %4010 = vmatprep.subr.mxu0 0.0
        %4011 = vmatpush2.msra.mxu0 0.0
        %4012 = vmatprep.subr.mxu0 0.0
        %4013 = vmatpush2.msra.mxu0 0.0
        %4014 = vmatprep.subr.mxu0 0.0
        %4015 = vmatpush2.msra.mxu0 0.0
        %4016 = vmatprep.subr.mxu0 0.0
        %4017 = vmatpush2.msra.mxu0 0.0
        %4018 = vmatprep.subr.mxu0 0.0
        %4019 = vmatpush2.msra.mxu0 0.0
        %4020 = vmatprep.mubr.f32.mxu0 0.0
        %4021 = vmatmul.mubr.f32.gmra.mxu0 %v3954
        %v4022 = vpop.f32.mrf.mxu0
        %v4023 = vadd.f32 0.0, %v4022
        %v4024 = vpop.f32.mrf.mxu0
        %v4025 = vadd.f32 0.0, %v4024
        %4026 = vdwg.mxu0
        %v4027 = vadd.f32 %v3949, %v4023
        %v4028 = vadd.f32 %v3950, %v4025
        %4029 = vrot.lane.b32.xlu0 %v3576, 127
        %v4030 = vpop.permute.xlu0 %4029
        %4031 = vrot.lane.b32.xlu0 %v3578, 127
        %v4032 = vpop.permute.xlu0 %4031
        %4033 = vrot.lane.b32.xlu0 %v3577, 127
        %v4034 = vpop.permute.xlu0 %4033
        %4035 = vrot.lane.b32.xlu0 %v3579, 127
        %v4036 = vpop.permute.xlu0 %4035
        %v4037 = vsel %vm1254, %v4030, %v4034
        %v4038 = vsel %vm1254, %v4032, %v4036
        %v4039 = vsel %vm1254, %v4034, %v4030
        %v4040 = vsel %vm1254, %v4036, %v4032
        %v4041 = vsel %vm1265, %v4037, 0.0
        %v4042 = vsel %vm1266, %v4039, 0.0
        %v4043 = vsel %vm1265, %v4038, 0.0
        %v4044 = vsel %vm1266, %v4040, 0.0
        %s4045 = scalar_lea.vmem %s14, 20
        %v4046 = vld [vmem:[%s4045] sm:$0xf]
        %v4048 = vsel %vm3377, %v4046, 0
        %4050 = vmatprep.subr.mxu0 0.0
        %4051 = vmatpush1.msra.mxu0 0.0
        %4052 = vmatprep.subr.mxu0 0.0
        %4053 = vmatpush1.msra.mxu0 0.0
        %4054 = vmatprep.subr.mxu0 0.0
        %4055 = vmatpush1.msra.mxu0 0.0
        %4056 = vmatprep.subr.mxu0 0.0
        %4057 = vmatpush1.msra.mxu0 0.0
        %4058 = vmatprep.subr.mxu0 0.0
        %4059 = vmatpush1.msra.mxu0 0.0
        %4060 = vmatprep.subr.mxu0 0.0
        %4061 = vmatpush1.msra.mxu0 0.0
        %4062 = vmatprep.subr.mxu0 0.0
        %4063 = vmatpush1.msra.mxu0 0.0
        %4064 = vmatprep.subr.mxu0 0.0
        %4065 = vmatpush1.msra.mxu0 0.0
        %4066 = vmatprep.subr.mxu0 0.0
        %4067 = vmatpush1.msra.mxu0 0.0
        %4068 = vmatprep.subr.mxu0 0.0
        %4069 = vmatpush1.msra.mxu0 0.0
        %4070 = vmatprep.subr.mxu0 0.0
        %4071 = vmatpush1.msra.mxu0 0.0
        %4072 = vmatprep.subr.mxu0 0.0
        %4073 = vmatpush1.msra.mxu0 0.0
        %4074 = vmatprep.subr.mxu0 0.0
        %4075 = vmatpush1.msra.mxu0 0.0
        %4076 = vmatprep.subr.mxu0 0.0
        %4077 = vmatpush1.msra.mxu0 0.0
        %4078 = vmatprep.subr.mxu0 %v4044
        %4079 = vmatpush1.msra.mxu0 %v4043
        %4080 = vmatprep.subr.mxu0 %v4042
        %4081 = vmatpush1.msra.mxu0 %v4041
        %4082 = vmatprep.subr.mxu0 0.0
        %4083 = vmatpush2.msra.mxu0 0.0
        %4084 = vmatprep.subr.mxu0 0.0
        %4085 = vmatpush2.msra.mxu0 0.0
        %4086 = vmatprep.subr.mxu0 0.0
        %4087 = vmatpush2.msra.mxu0 0.0
        %4088 = vmatprep.subr.mxu0 0.0
        %4089 = vmatpush2.msra.mxu0 0.0
        %4090 = vmatprep.subr.mxu0 0.0
        %4091 = vmatpush2.msra.mxu0 0.0
        %4092 = vmatprep.subr.mxu0 0.0
        %4093 = vmatpush2.msra.mxu0 0.0
        %4094 = vmatprep.subr.mxu0 0.0
        %4095 = vmatpush2.msra.mxu0 0.0
        %4096 = vmatprep.subr.mxu0 0.0
        %4097 = vmatpush2.msra.mxu0 0.0
        %4098 = vmatprep.subr.mxu0 0.0
        %4099 = vmatpush2.msra.mxu0 0.0
        %4100 = vmatprep.subr.mxu0 0.0
        %4101 = vmatpush2.msra.mxu0 0.0
        %4102 = vmatprep.subr.mxu0 0.0
        %4103 = vmatpush2.msra.mxu0 0.0
        %4104 = vmatprep.subr.mxu0 0.0
        %4105 = vmatpush2.msra.mxu0 0.0
        %4106 = vmatprep.subr.mxu0 0.0
        %4107 = vmatpush2.msra.mxu0 0.0
        %4108 = vmatprep.subr.mxu0 0.0
        %4109 = vmatpush2.msra.mxu0 0.0
        %4110 = vmatprep.subr.mxu0 0.0
        %4111 = vmatpush2.msra.mxu0 0.0
        %4112 = vmatprep.subr.mxu0 0.0
        %4113 = vmatpush2.msra.mxu0 0.0
        %4114 = vmatprep.mubr.f32.mxu0 0.0
        %4115 = vmatmul.mubr.f32.gmra.mxu0 %v4048
        %v4116 = vpop.f32.mrf.mxu0
        %v4117 = vadd.f32 0.0, %v4116
        %v4118 = vpop.f32.mrf.mxu0
        %v4119 = vadd.f32 0.0, %v4118
        %4120 = vdwg.mxu0
        %v4121 = vadd.f32 %v4027, %v4117
        %v4122 = vadd.f32 %v4028, %v4119
        %4123 = vrot.lane.b32.xlu0 %v3576, 113
        %v4124 = vpop.permute.xlu0 %4123
        %4125 = vrot.lane.b32.xlu0 %v3578, 113
        %v4126 = vpop.permute.xlu0 %4125
        %4127 = vrot.lane.b32.xlu0 %v3577, 113
        %v4128 = vpop.permute.xlu0 %4127
        %4129 = vrot.lane.b32.xlu0 %v3579, 113
        %v4130 = vpop.permute.xlu0 %4129
        %v4131 = vsel %vm1393, %v4124, %v4128
        %v4132 = vsel %vm1393, %v4126, %v4130
        %v4133 = vsel %vm1393, %v4128, %v4124
        %v4134 = vsel %vm1393, %v4130, %v4126
        %v4135 = vsel %vm1404, %v4131, 0.0
        %v4136 = vsel %vm1405, %v4133, 0.0
        %v4137 = vsel %vm1404, %v4132, 0.0
        %v4138 = vsel %vm1405, %v4134, 0.0
        %s4139 = scalar_lea.vmem %s14, 24
        %v4140 = vld [vmem:[%s4139] sm:$0xf]
        %v4142 = vsel %vm3377, %v4140, 0
        %4144 = vmatprep.subr.mxu0 0.0
        %4145 = vmatpush1.msra.mxu0 0.0
        %4146 = vmatprep.subr.mxu0 0.0
        %4147 = vmatpush1.msra.mxu0 0.0
        %4148 = vmatprep.subr.mxu0 0.0
        %4149 = vmatpush1.msra.mxu0 0.0
        %4150 = vmatprep.subr.mxu0 0.0
        %4151 = vmatpush1.msra.mxu0 0.0
        %4152 = vmatprep.subr.mxu0 0.0
        %4153 = vmatpush1.msra.mxu0 0.0
        %4154 = vmatprep.subr.mxu0 0.0
        %4155 = vmatpush1.msra.mxu0 0.0
        %4156 = vmatprep.subr.mxu0 0.0
        %4157 = vmatpush1.msra.mxu0 0.0
        %4158 = vmatprep.subr.mxu0 0.0
        %4159 = vmatpush1.msra.mxu0 0.0
        %4160 = vmatprep.subr.mxu0 0.0
        %4161 = vmatpush1.msra.mxu0 0.0
        %4162 = vmatprep.subr.mxu0 0.0
        %4163 = vmatpush1.msra.mxu0 0.0
        %4164 = vmatprep.subr.mxu0 0.0
        %4165 = vmatpush1.msra.mxu0 0.0
        %4166 = vmatprep.subr.mxu0 0.0
        %4167 = vmatpush1.msra.mxu0 0.0
        %4168 = vmatprep.subr.mxu0 0.0
        %4169 = vmatpush1.msra.mxu0 0.0
        %4170 = vmatprep.subr.mxu0 0.0
        %4171 = vmatpush1.msra.mxu0 0.0
        %4172 = vmatprep.subr.mxu0 %v4138
        %4173 = vmatpush1.msra.mxu0 %v4137
        %4174 = vmatprep.subr.mxu0 %v4136
        %4175 = vmatpush1.msra.mxu0 %v4135
        %4176 = vmatprep.subr.mxu0 0.0
        %4177 = vmatpush2.msra.mxu0 0.0
        %4178 = vmatprep.subr.mxu0 0.0
        %4179 = vmatpush2.msra.mxu0 0.0
        %4180 = vmatprep.subr.mxu0 0.0
        %4181 = vmatpush2.msra.mxu0 0.0
        %4182 = vmatprep.subr.mxu0 0.0
        %4183 = vmatpush2.msra.mxu0 0.0
        %4184 = vmatprep.subr.mxu0 0.0
        %4185 = vmatpush2.msra.mxu0 0.0
        %4186 = vmatprep.subr.mxu0 0.0
        %4187 = vmatpush2.msra.mxu0 0.0
        %4188 = vmatprep.subr.mxu0 0.0
        %4189 = vmatpush2.msra.mxu0 0.0
        %4190 = vmatprep.subr.mxu0 0.0
        %4191 = vmatpush2.msra.mxu0 0.0
        %4192 = vmatprep.subr.mxu0 0.0
        %4193 = vmatpush2.msra.mxu0 0.0
        %4194 = vmatprep.subr.mxu0 0.0
        %4195 = vmatpush2.msra.mxu0 0.0
        %4196 = vmatprep.subr.mxu0 0.0
        %4197 = vmatpush2.msra.mxu0 0.0
        %4198 = vmatprep.subr.mxu0 0.0
        %4199 = vmatpush2.msra.mxu0 0.0
        %4200 = vmatprep.subr.mxu0 0.0
        %4201 = vmatpush2.msra.mxu0 0.0
        %4202 = vmatprep.subr.mxu0 0.0
        %4203 = vmatpush2.msra.mxu0 0.0
        %4204 = vmatprep.subr.mxu0 0.0
        %4205 = vmatpush2.msra.mxu0 0.0
        %4206 = vmatprep.subr.mxu0 0.0
        %4207 = vmatpush2.msra.mxu0 0.0
        %4208 = vmatprep.mubr.f32.mxu0 0.0
        %4209 = vmatmul.mubr.f32.gmra.mxu0 %v4142
        %v4210 = vpop.f32.mrf.mxu0
        %v4211 = vadd.f32 0.0, %v4210
        %v4212 = vpop.f32.mrf.mxu0
        %v4213 = vadd.f32 0.0, %v4212
        %4214 = vdwg.mxu0
        %v4215 = vadd.f32 %v4121, %v4211
        %v4216 = vadd.f32 %v4122, %v4213
        %4217 = vrot.lane.b32.xlu0 %v3576, 112
        %v4218 = vpop.permute.xlu0 %4217
        %4219 = vrot.lane.b32.xlu0 %v3578, 112
        %v4220 = vpop.permute.xlu0 %4219
        %4221 = vrot.lane.b32.xlu0 %v3577, 112
        %v4222 = vpop.permute.xlu0 %4221
        %4223 = vrot.lane.b32.xlu0 %v3579, 112
        %v4224 = vpop.permute.xlu0 %4223
        %v4225 = vsel %vm1532, %v4218, %v4222
        %v4226 = vsel %vm1532, %v4220, %v4224
        %v4227 = vsel %vm1532, %v4222, %v4218
        %v4228 = vsel %vm1532, %v4224, %v4220
        %v4229 = vsel %vm1543, %v4225, 0.0
        %v4230 = vsel %vm1544, %v4227, 0.0
        %v4231 = vsel %vm1543, %v4226, 0.0
        %v4232 = vsel %vm1544, %v4228, 0.0
        %s4233 = scalar_lea.vmem %s14, 28
        %v4234 = vld [vmem:[%s4233] sm:$0xf]
        %v4236 = vsel %vm3377, %v4234, 0
        %4238 = vmatprep.subr.mxu0 0.0
        %4239 = vmatpush1.msra.mxu0 0.0
        %4240 = vmatprep.subr.mxu0 0.0
        %4241 = vmatpush1.msra.mxu0 0.0
        %4242 = vmatprep.subr.mxu0 0.0
        %4243 = vmatpush1.msra.mxu0 0.0
        %4244 = vmatprep.subr.mxu0 0.0
        %4245 = vmatpush1.msra.mxu0 0.0
        %4246 = vmatprep.subr.mxu0 0.0
        %4247 = vmatpush1.msra.mxu0 0.0
        %4248 = vmatprep.subr.mxu0 0.0
        %4249 = vmatpush1.msra.mxu0 0.0
        %4250 = vmatprep.subr.mxu0 0.0
        %4251 = vmatpush1.msra.mxu0 0.0
        %4252 = vmatprep.subr.mxu0 0.0
        %4253 = vmatpush1.msra.mxu0 0.0
        %4254 = vmatprep.subr.mxu0 0.0
        %4255 = vmatpush1.msra.mxu0 0.0
        %4256 = vmatprep.subr.mxu0 0.0
        %4257 = vmatpush1.msra.mxu0 0.0
        %4258 = vmatprep.subr.mxu0 0.0
        %4259 = vmatpush1.msra.mxu0 0.0
        %4260 = vmatprep.subr.mxu0 0.0
        %4261 = vmatpush1.msra.mxu0 0.0
        %4262 = vmatprep.subr.mxu0 0.0
        %4263 = vmatpush1.msra.mxu0 0.0
        %4264 = vmatprep.subr.mxu0 0.0
        %4265 = vmatpush1.msra.mxu0 0.0
        %4266 = vmatprep.subr.mxu0 %v4232
        %4267 = vmatpush1.msra.mxu0 %v4231
        %4268 = vmatprep.subr.mxu0 %v4230
        %4269 = vmatpush1.msra.mxu0 %v4229
        %4270 = vmatprep.subr.mxu0 0.0
        %4271 = vmatpush2.msra.mxu0 0.0
        %4272 = vmatprep.subr.mxu0 0.0
        %4273 = vmatpush2.msra.mxu0 0.0
        %4274 = vmatprep.subr.mxu0 0.0
        %4275 = vmatpush2.msra.mxu0 0.0
        %4276 = vmatprep.subr.mxu0 0.0
        %4277 = vmatpush2.msra.mxu0 0.0
        %4278 = vmatprep.subr.mxu0 0.0
        %4279 = vmatpush2.msra.mxu0 0.0
        %4280 = vmatprep.subr.mxu0 0.0
        %4281 = vmatpush2.msra.mxu0 0.0
        %4282 = vmatprep.subr.mxu0 0.0
        %4283 = vmatpush2.msra.mxu0 0.0
        %4284 = vmatprep.subr.mxu0 0.0
        %4285 = vmatpush2.msra.mxu0 0.0
        %4286 = vmatprep.subr.mxu0 0.0
        %4287 = vmatpush2.msra.mxu0 0.0
        %4288 = vmatprep.subr.mxu0 0.0
        %4289 = vmatpush2.msra.mxu0 0.0
        %4290 = vmatprep.subr.mxu0 0.0
        %4291 = vmatpush2.msra.mxu0 0.0
        %4292 = vmatprep.subr.mxu0 0.0
        %4293 = vmatpush2.msra.mxu0 0.0
        %4294 = vmatprep.subr.mxu0 0.0
        %4295 = vmatpush2.msra.mxu0 0.0
        %4296 = vmatprep.subr.mxu0 0.0
        %4297 = vmatpush2.msra.mxu0 0.0
        %4298 = vmatprep.subr.mxu0 0.0
        %4299 = vmatpush2.msra.mxu0 0.0
        %4300 = vmatprep.subr.mxu0 0.0
        %4301 = vmatpush2.msra.mxu0 0.0
        %4302 = vmatprep.mubr.f32.mxu0 0.0
        %4303 = vmatmul.mubr.f32.gmra.mxu0 %v4236
        %v4304 = vpop.f32.mrf.mxu0
        %v4305 = vadd.f32 0.0, %v4304
        %v4306 = vpop.f32.mrf.mxu0
        %v4307 = vadd.f32 0.0, %v4306
        %4308 = vdwg.mxu0
        %v4309 = vadd.f32 %v4215, %v4305
        %v4310 = vadd.f32 %v4216, %v4307
        %4311 = vrot.lane.b32.xlu0 %v3576, 111
        %v4312 = vpop.permute.xlu0 %4311
        %4313 = vrot.lane.b32.xlu0 %v3578, 111
        %v4314 = vpop.permute.xlu0 %4313
        %4315 = vrot.lane.b32.xlu0 %v3577, 111
        %v4316 = vpop.permute.xlu0 %4315
        %4317 = vrot.lane.b32.xlu0 %v3579, 111
        %v4318 = vpop.permute.xlu0 %4317
        %v4319 = vsel %vm1671, %v4312, %v4316
        %v4320 = vsel %vm1671, %v4314, %v4318
        %v4321 = vsel %vm1671, %v4316, %v4312
        %v4322 = vsel %vm1671, %v4318, %v4314
        %v4323 = vsel %vm1686, %v4319, 0.0
        %v4324 = vsel %vm1687, %v4321, 0.0
        %v4325 = vsel %vm1686, %v4320, 0.0
        %v4326 = vsel %vm1687, %v4322, 0.0
        %s4327 = scalar_lea.vmem %s14, 32
        %v4328 = vld [vmem:[%s4327] sm:$0xf]
        %v4330 = vsel %vm3377, %v4328, 0
        %4332 = vmatprep.subr.mxu0 0.0
        %4333 = vmatpush1.msra.mxu0 0.0
        %4334 = vmatprep.subr.mxu0 0.0
        %4335 = vmatpush1.msra.mxu0 0.0
        %4336 = vmatprep.subr.mxu0 0.0
        %4337 = vmatpush1.msra.mxu0 0.0
        %4338 = vmatprep.subr.mxu0 0.0
        %4339 = vmatpush1.msra.mxu0 0.0
        %4340 = vmatprep.subr.mxu0 0.0
        %4341 = vmatpush1.msra.mxu0 0.0
        %4342 = vmatprep.subr.mxu0 0.0
        %4343 = vmatpush1.msra.mxu0 0.0
        %4344 = vmatprep.subr.mxu0 0.0
        %4345 = vmatpush1.msra.mxu0 0.0
        %4346 = vmatprep.subr.mxu0 0.0
        %4347 = vmatpush1.msra.mxu0 0.0
        %4348 = vmatprep.subr.mxu0 0.0
        %4349 = vmatpush1.msra.mxu0 0.0
        %4350 = vmatprep.subr.mxu0 0.0
        %4351 = vmatpush1.msra.mxu0 0.0
        %4352 = vmatprep.subr.mxu0 0.0
        %4353 = vmatpush1.msra.mxu0 0.0
        %4354 = vmatprep.subr.mxu0 0.0
        %4355 = vmatpush1.msra.mxu0 0.0
        %4356 = vmatprep.subr.mxu0 0.0
        %4357 = vmatpush1.msra.mxu0 0.0
        %4358 = vmatprep.subr.mxu0 0.0
        %4359 = vmatpush1.msra.mxu0 0.0
        %4360 = vmatprep.subr.mxu0 %v4326
        %4361 = vmatpush1.msra.mxu0 %v4325
        %4362 = vmatprep.subr.mxu0 %v4324
        %4363 = vmatpush1.msra.mxu0 %v4323
        %4364 = vmatprep.subr.mxu0 0.0
        %4365 = vmatpush2.msra.mxu0 0.0
        %4366 = vmatprep.subr.mxu0 0.0
        %4367 = vmatpush2.msra.mxu0 0.0
        %4368 = vmatprep.subr.mxu0 0.0
        %4369 = vmatpush2.msra.mxu0 0.0
        %4370 = vmatprep.subr.mxu0 0.0
        %4371 = vmatpush2.msra.mxu0 0.0
        %4372 = vmatprep.subr.mxu0 0.0
        %4373 = vmatpush2.msra.mxu0 0.0
        %4374 = vmatprep.subr.mxu0 0.0
        %4375 = vmatpush2.msra.mxu0 0.0
        %4376 = vmatprep.subr.mxu0 0.0
        %4377 = vmatpush2.msra.mxu0 0.0
        %4378 = vmatprep.subr.mxu0 0.0
        %4379 = vmatpush2.msra.mxu0 0.0
        %4380 = vmatprep.subr.mxu0 0.0
        %4381 = vmatpush2.msra.mxu0 0.0
        %4382 = vmatprep.subr.mxu0 0.0
        %4383 = vmatpush2.msra.mxu0 0.0
        %4384 = vmatprep.subr.mxu0 0.0
        %4385 = vmatpush2.msra.mxu0 0.0
        %4386 = vmatprep.subr.mxu0 0.0
        %4387 = vmatpush2.msra.mxu0 0.0
        %4388 = vmatprep.subr.mxu0 0.0
        %4389 = vmatpush2.msra.mxu0 0.0
        %4390 = vmatprep.subr.mxu0 0.0
        %4391 = vmatpush2.msra.mxu0 0.0
        %4392 = vmatprep.subr.mxu0 0.0
        %4393 = vmatpush2.msra.mxu0 0.0
        %4394 = vmatprep.subr.mxu0 0.0
        %4395 = vmatpush2.msra.mxu0 0.0
        %4396 = vmatprep.mubr.f32.mxu0 0.0
        %4397 = vmatmul.mubr.f32.gmra.mxu0 %v4330
        %v4398 = vpop.f32.mrf.mxu0
        %v4399 = vadd.f32 0.0, %v4398
        %v4400 = vpop.f32.mrf.mxu0
        %v4401 = vadd.f32 0.0, %v4400
        %4402 = vdwg.mxu0
        %v4403 = vadd.f32 %v4309, %v4399
        %v4404 = vadd.f32 %v4310, %v4401
        %v4405 = vld [vmem:[%s15] sm:$0xf]
        %4407 = vset.pattern.permute.xlu0 0
        %4408 = vperm.xlu0 %4407, %v4405
        %v4409 = vpop.permute.xlu0 %4408
        %v4411 = vadd.f32 %v4403, %v4409
        %v4412 = vadd.f32 %v4404, %v4409
        %v4413 = vld [vmem:[%s16] sm:$0xf]
        %4415 = vset.pattern.permute.xlu0 0
        %4416 = vperm.xlu0 %4415, %v4413
        %v4417 = vpop.permute.xlu0 %4416
        %v4419 = vmul.f32 %v4411, %v4417
        %v4420 = vmul.f32 %v4412, %v4417
        %v4421 = vld [vmem:[%s17] sm:$0xf]
        %4423 = vset.pattern.permute.xlu0 0
        %4424 = vperm.xlu0 %4423, %v4421
        %v4425 = vpop.permute.xlu0 %4424
        %v4427 = vadd.f32 %v4419, %v4425
        %v4428 = vadd.f32 %v4420, %v4425
        %v4431 = vcombine.low %v4427, %v4428
        %v4433 = vadd.f32 %v581, %v4431
        %4434 = vst [vmem:[%s569] sm:$0xff] %v4433
        %s4435 = sand.u32 %s423, 1
        %s4436 = scalar_lea.sflag [#allocation3], %s4435
        %s4437 = sand.u32 %s423, 1
        %s4438 = smul.addr %s4437, 8
        %s4439 = scalar_lea.vmem [#allocation2], %s4438
        // Predicated region
        $region93: #{tpu_custom_call.1} parent=91 // pred_check
          %p4440 = pneg %p433
        $region94: #{tpu_custom_call.1} parent=91 // pred_check_branch
          %4442 = sbr.rel (%p4440) target = $region96
        $region95: #{tpu_custom_call.1} parent=91 // pred_region
          %s4443 = smul.u32 2, %s32
          %s4445 = ssub.s32 128, 128
          %4446 = vsyncadd %s4436, %s4445
          %s4447 = smul.addr %s4443, 64
          %s4448 = scalar_lea.hbm %s18, %s4447
          %s4450 = sshll.u32 %s4439, 4
          %s4451 = int_to_ptr.vmem [resolvable:$true] %s4450
          %4453 = dma.vmem_to_hbm [thread:$0]  %s4451, 128, %s4448, %s4436
        $region96: #{tpu_custom_call.1} parent=91 // pred_fallthru
          _
      $region92: #{tpu_custom_call.1} parent=5 // pred_fallthru
        _
      %p4454 = scmp.le.s32.totalorder 2, %s27
      // Predicated region
      $region97: #{tpu_custom_call.1} parent=5 // pred_check
        %p4455 = pneg %p4454
      $region98: #{tpu_custom_call.1} parent=5 // pred_check_branch
        %4457 = sbr.rel (%p4455) target = $region100
      $region99: #{tpu_custom_call.1} parent=5 // pred_region
        %s4458 = ssub.s32 %s27, 2
        // Predicated region
        $region101: #{tpu_custom_call.1} parent=99 // pred_check
          %p4459 = pneg %p439
        $region102: #{tpu_custom_call.1} parent=99 // pred_check_branch
          %4461 = sbr.rel (%p4459) target = $region104
        $region103: #{tpu_custom_call.1} parent=99 // pred_region
          %s4462 = sand.u32 %s424, 1
          %s4463 = scalar_lea.sflag [#allocation3], %s4462
          %s4464 = sand.u32 %s424, 1
          %s4465 = smul.addr %s4464, 8
          %s4466 = scalar_lea.vmem [#allocation2], %s4465
          %4467 = dma.done %s4463, 128
        $region104: #{tpu_custom_call.1} parent=99 // pred_fallthru
          _
      $region100: #{tpu_custom_call.1} parent=5 // pred_fallthru
        _
    $region6: #{tpu_custom_call.1} parent=1 // loop_footer
      %s31 = sadd.s32 1, %s27
    $region7: #{tpu_custom_call.1} parent=1 // loop_footer_branch
      %26 = sbr.rel target = $region3
    $region8: #{tpu_custom_call.1} parent=1 // loop_exit
      _
    %4468 = vsyncpa [#allocation3], 1
    %s4469 = scalar_lea.sflag [#allocation3], 1
    %4470 = vsyncpa %s4469, 1

</llo_original>
